<compile_context>
chip_gen: v5e
topology: v5e:2x2
jax: 0.10.0
libtpu: 0.0.40
codegen_flags: <defaults>
</compile_context>

<pallas_src>
import math
import functools

import jax
import jax.numpy as jnp
from jax.experimental import pallas as pl
from jax.experimental.pallas import tpu as pltpu


def _round_up(v, m):
    return (v + m - 1) // m * m


# ----------------------------------------------------------------------------
# Pallas kernels
# ----------------------------------------------------------------------------
def _linear_kernel(x_ref, w_ref, b_ref, o_ref, *, activation):
    """y = act(x @ w + b); accumulate directly into the resident output block."""
    k = pl.program_id(2)

    @pl.when(k == 0)
    def _():
        o_ref[...] = jnp.zeros_like(o_ref)

    # f32 activations cast to bf16 in-register; weights arrive pre-cast bf16;
    # f32 accumulation on the MXU.
    o_ref[...] += jnp.dot(x_ref[...].astype(jnp.bfloat16), w_ref[...],
                          preferred_element_type=jnp.float32)

    @pl.when(k == pl.num_programs(2) - 1)
    def _():
        y = o_ref[...] + b_ref[...]
        if activation == "relu":
            y = jnp.maximum(y, 0.0)
        o_ref[...] = y


def _pick_tile_k(K, tm, tn, budget=8 << 20):
    """Prefer one full-K block (no accumulator RMW / k-step overhead); otherwise
    the largest 128-multiple divisor of K whose double-buffered bf16 inputs plus
    the f32 output tile fit a conservative VMEM budget (safe on v7x's 64 MiB)."""
    cost = lambda tk: 2 * 2 * (tm * tk + tk * tn) + 4 * tm * tn
    if K % 128 != 0 or cost(K) <= budget:
        return K
    tk = K
    while tk > 128:
        tk -= 128
        if K % tk == 0 and cost(tk) <= budget:
            return tk
    return 128


def pallas_linear(x, lin, activation="none"):
    """x:(M,K) f32.  lin = {"w": (K,Np) bf16, "b": (1,Np) f32, "n": true N}.
    Np is a multiple of 128 (lane-dense, unmasked stores).  Returns (M, Np);
    callers slice the true columns (they already slice fused projections)."""
    w, b = lin["w"], lin["b"]
    M, K = x.shape
    K2, Np = w.shape
    assert K == K2 and Np % 128 == 0

    tm = M if M <= 256 else 256          # full-dim block for small M: no row padding
    tn = 256 if Np % 256 == 0 else 128
    tk = _pick_tile_k(K, tm, tn)

    grid = (pl.cdiv(M, tm), Np // tn, pl.cdiv(K, tk))
    return pl.pallas_call(
        functools.partial(_linear_kernel, activation=activation),
        out_shape=jax.ShapeDtypeStruct((M, Np), jnp.float32),
        grid_spec=pltpu.PrefetchScalarGridSpec(
            num_scalar_prefetch=0,
            grid=grid,
            in_specs=[
                pl.BlockSpec((tm, tk), lambda i, j, k: (i, k)),
                pl.BlockSpec((tk, tn), lambda i, j, k: (k, j)),
                pl.BlockSpec((1, tn), lambda i, j, k: (0, j)),
            ],
            out_specs=pl.BlockSpec((tm, tn), lambda i, j, k: (i, j)),
        ),
        compiler_params=pltpu.CompilerParams(
            dimension_semantics=("parallel", "parallel", "arbitrary")),
    )(x, w, b)


def _literature_kernel(w_ref, p_ref, r_ref, src_ref, seg_ref, o_ref):
    """Node-major blocks (tile_m, F) with F = seq*emb dense on lanes.
    Column f of the flat buffer is torch's .view(-1, emb, seq) element
    (e, t) = (f // seq, f % seq).  Per-(node, t) L2 norms over e are computed
    with a constant 0/1 matrix P[f,f'] = [f%seq == f'%seq]; the final sum over t
    uses R[f,e] = [f//seq == e].  No reshapes / strided loads / host transpose."""
    eps2 = 1e-24                                   # (F.normalize eps=1e-12)^2
    hi = jax.lax.Precision.HIGHEST
    s = src_ref[...] * w_ref[...]                  # w[t] * viewed src
    g = seg_ref[...]
    ns = jnp.dot(s * s, p_ref[...], precision=hi, preferred_element_type=jnp.float32)
    ng = jnp.dot(g * g, p_ref[...], precision=hi, preferred_element_type=jnp.float32)
    s = s * jax.lax.rsqrt(jnp.maximum(ns, eps2))   # F.normalize(..., dim=1)
    g = g * jax.lax.rsqrt(jnp.maximum(ng, eps2))
    o_ref[...] = jnp.dot(s + g, r_ref[...], precision=hi,
                         preferred_element_type=jnp.float32)   # .sum(-1)


def pallas_literature(lit, src, seg, seq, emb):
    src_e = lit["src_emb"][src]                    # (N, seq, emb) gather - plain JAX
    seg_e = lit["seg_emb"][seg]
    N = src_e.shape[0]
    F = seq * emb
    # Row-major flatten is free and reproduces torch's .view(-1, emb, seq) indexing.
    src_flat = src_e.reshape(N, F)
    seg_flat = seg_e.reshape(N, F)

    tm = N if N <= 256 else 256
    grid = (pl.cdiv(N, tm),)
    return pl.pallas_call(
        _literature_kernel,
        out_shape=jax.ShapeDtypeStruct((N, emb), jnp.float32),
        grid_spec=pltpu.PrefetchScalarGridSpec(
            num_scalar_prefetch=0,
            grid=grid,
            in_specs=[
                pl.BlockSpec((1, F), lambda i: (0, 0)),
                pl.BlockSpec((F, F), lambda i: (0, 0)),
                pl.BlockSpec((F, emb), lambda i: (0, 0)),
                pl.BlockSpec((tm, F), lambda i: (i, 0)),
                pl.BlockSpec((tm, F), lambda i: (i, 0)),
            ],
            out_specs=pl.BlockSpec((tm, emb), lambda i: (i, 0)),
        ),
        compiler_params=pltpu.CompilerParams(dimension_semantics=("parallel",)),
    )(lit["w_full"], lit["P"], lit["Rm"], src_flat, seg_flat)


# ----------------------------------------------------------------------------
# Plain-JAX glue (gather / scatter / normalization pieces)
# ----------------------------------------------------------------------------
def segment_softmax(logits, segment_ids, num_segments):
    maxs = jax.ops.segment_max(logits, segment_ids, num_segments=num_segments)
    maxs = jnp.where(jnp.isfinite(maxs), maxs, 0.0)
    e = jnp.exp(logits - maxs[segment_ids])
    denom = jax.ops.segment_sum(e, segment_ids, num_segments=num_segments)
    return e / denom[segment_ids]


def graph_norm(p, x, batch, num_graphs, eps=1e-5):
    ones = jnp.ones((x.shape[0], 1), x.dtype)
    counts = jnp.maximum(
        jax.ops.segment_sum(ones, batch, num_segments=num_graphs), 1.0)
    mean = jax.ops.segment_sum(x, batch, num_segments=num_graphs) / counts
    out = x - mean[batch] * p["mean_scale"]
    var = jax.ops.segment_sum(out * out, batch, num_segments=num_graphs) / counts
    std = jnp.sqrt(var + eps)
    return p["weight"] * out / std[batch] + p["bias"]


def rgcn_conv(plan_lin, x, edge_index, edge_type, num_relations, activation="none"):
    """RGCNConv (aggr='mean', root weight + bias) as ONE fused matmul."""
    N, Cin = x.shape
    E = edge_index.shape[1]
    R = num_relations
    src, tgt = edge_index[0], edge_index[1]

    msgs = x[src]                                                     # gather
    onehot = (edge_type[:, None] == jnp.arange(R)[None, :]).astype(x.dtype)
    wm = (msgs[:, None, :] * onehot[:, :, None]).reshape(E, R * Cin)
    s = jax.ops.segment_sum(wm, tgt, num_segments=N)
    c = jax.ops.segment_sum(onehot, tgt, num_segments=N)
    agg = (s.reshape(N, R, Cin) /
           jnp.maximum(c, 1.0)[:, :, None]).reshape(N, R * Cin)       # scatter-mean

    k_in = jnp.concatenate([agg, x], axis=1)                          # (N, (R+1)*Cin)
    out = pallas_linear(k_in, plan_lin, activation=activation)
    return out[:, :plan_lin["n"]]


def hhg_conv(plan, x, edge_attr, edge_index, batch, num_graphs,
             num_edge_heads=8, num_node_heads=8):
    N, d = x.shape
    E = edge_index.shape[1]
    src, tgt = edge_index[0], edge_index[1]

    # fused projections of x: [Q2 | u1 | K1∘head_tail | V1∘head_tail]  (N, 4d)
    xproj = pallas_linear(x, plan["xproj"])
    q2, u1x = xproj[:, :d], xproj[:, d:2 * d]
    k1, v1 = xproj[:, 2 * d:3 * d], xproj[:, 3 * d:4 * d]

    # fused projections of edge_attr: [Q1 | edge_linear]
    eproj = pallas_linear(edge_attr, plan["eproj"])
    q1, edge_out = eproj[:, :d], eproj[:, d:2 * d]

    # edge_updater with edge_index.flip([0]):  j <- edge_index[1], i <- edge_index[0]
    he, hd = num_edge_heads, d // num_edge_heads
    q = q1[src].reshape(E, he, hd)              # edge_attr_i = edge_attr[edge_index[0]]
    k = k1[tgt].reshape(E, he, hd)              # x_j         = x[edge_index[1]]
    v = v1[tgt].reshape(E, he, hd)
    attn = jnp.sum(q * k, axis=-1) / math.sqrt(hd)
    score = segment_softmax(attn, src, num_segments=N)   # grouped by flipped index[1]
    hyperedges = (v * score[..., None]).reshape(E, d) + edge_out

    # propagate (source_to_target): j <- edge_index[0], i <- edge_index[1]
    kv2 = pallas_linear(hyperedges, plan["kv2"])         # [K2∘to_head_tail | V2∘...]
    k2, v2 = kv2[:, :d], kv2[:, d:2 * d]

    hn, hdn = num_node_heads, d // num_node_heads
    qn = q2[tgt].reshape(E, hn, hdn)            # x_i
    kn = k2[src].reshape(E, hn, hdn)            # hyperedges_j (literal torch indexing)
    vn = v2[src].reshape(E, hn, hdn)
    attn2 = jnp.sum(qn * kn, axis=-1) / math.sqrt(hdn)
    score2 = segment_softmax(attn2, tgt, num_segments=N)
    msg = vn * score2[..., None]
    agg = jax.ops.segment_sum(msg, tgt, num_segments=N)  # aggr='add'
    inputs = agg.reshape(N, d)

    out = pallas_linear(inputs, plan["u2"])[:, :d] + u1x
    out = graph_norm(plan["norm"], out, batch, num_graphs)
    return jax.nn.elu(out)


def hcitengl_forward(plan, src, seg, edge_index, edge_type, batch, cfg):
    f = pallas_literature(plan["lit"], src, seg, cfg["seq_length"], cfg["emb_size"])
    edge_attr = plan["edge_embedding"][edge_type]

    # query_mlp: Linear -> ReLU -> Linear (ReLU fused into the first kernel)
    h = pallas_linear(f, plan["query_mlp0"],
                      activation="relu")[:, :plan["query_mlp0"]["n"]]
    x = pallas_linear(h, plan["query_mlp1"])[:, :plan["query_mlp1"]["n"]]

    # RGCN layers (trailing relu fused into the single RGCN matmul)
    nrel = cfg["class_num"]
    r_x = rgcn_conv(plan["r_conv1"], x, edge_index, edge_type, nrel, activation="relu")
    r_x = rgcn_conv(plan["r_conv2"], r_x, edge_index, edge_type, nrel, activation="relu")

    ng = cfg["num_graphs"]
    x = jax.nn.relu(hhg_conv(plan["conv1"], x, edge_attr, edge_index, batch, ng))
    x = jax.nn.relu(hhg_conv(plan["conv2"], x, edge_attr, edge_index, batch, ng))

    out = pallas_linear(x + r_x, plan["linear"])[:, :plan["linear"]["n"]]
    # torch.nn.Dropout(0.5) -> identity in eval mode.
    return out


# ----------------------------------------------------------------------------
# One-time parameter preparation (concat / precompose / pad / bf16-cast weights)
# ----------------------------------------------------------------------------
def prepare_params(params, cfg):
    d = cfg["emb_size"]
    seq = cfg["seq_length"]
    nrel = cfg["class_num"]
    F = seq * d

    def lin(w, b=None):
        K, N = w.shape
        if b is None:
            b = jnp.zeros((N,), jnp.float32)
        Np = _round_up(N, 128)
        if Np != N:
            w = jnp.concatenate([w, jnp.zeros((K, Np - N), w.dtype)], axis=1)
            b = jnp.concatenate([b, jnp.zeros((Np - N,), b.dtype)])
        return {"w": w.astype(jnp.bfloat16),
                "b": b.reshape(1, Np).astype(jnp.float32),
                "n": N}

    def hhg_plan(p):
        kv1_cat = jnp.concatenate([p["K1"]["w"], p["V1"]["w"]], axis=1)
        kv2_cat = jnp.concatenate([p["K2"]["w"], p["V2"]["w"]], axis=1)
        kv1_w = p["head_tail_linear"]["w"] @ kv1_cat          # precomposed chains
        kv1_b = p["head_tail_linear"]["b"] @ kv1_cat
        kv2_w = p["to_head_tail_linear"]["w"] @ kv2_cat
        kv2_b = p["to_head_tail_linear"]["b"] @ kv2_cat
        zd = jnp.zeros((d,), jnp.float32)
        return {
            "xproj": lin(jnp.concatenate([p["Q2"]["w"], p["u1"]["w"], kv1_w], axis=1),
                         jnp.concatenate([zd, p["u1"]["b"], kv1_b])),
            "eproj": lin(jnp.concatenate([p["Q1"]["w"], p["edge_linear"]["w"]], axis=1),
                         jnp.concatenate([zd, p["edge_linear"]["b"]])),
            "kv2": lin(kv2_w, kv2_b),
            "u2": lin(p["u2"]["w"], p["u2"]["b"]),
            "norm": p["norm"],
        }

    def rgcn_plan(p):
        cin, cout = p["root"].shape
        w_full = jnp.concatenate([p["weight"].reshape(nrel * cin, cout), p["root"]],
                                 axis=0)
        return lin(w_full, p["bias"])

    le = params["literature_encoder"]
    f_idx = jnp.arange(F)
    lit = {
        "src_emb": le["src_embedding"],
        "seg_emb": le["seg_embedding"],
        "w_full": jnp.tile(le["w"].astype(jnp.float32), d).reshape(1, F),
        "P": (f_idx[:, None] % seq == f_idx[None, :] % seq).astype(jnp.float32),
        "Rm": (f_idx[:, None] // seq == jnp.arange(d)[None, :]).astype(jnp.float32),
    }

    return {
        "lit": lit,
        "edge_embedding": params["edge_embedding"],
        "conv1": hhg_plan(params["conv1"]),
        "conv2": hhg_plan(params["conv2"]),
        "r_conv1": rgcn_plan(params["r_conv1"]),
        "r_conv2": rgcn_plan(params["r_conv2"]),
        "query_mlp0": lin(params["query_mlp0"]["w"], params["query_mlp0"]["b"]),
        "query_mlp1": lin(params["query_mlp1"]["w"], params["query_mlp1"]["b"]),
        "linear": lin(params["linear"]["w"], params["linear"]["b"]),
    }


# ----------------------------------------------------------------------------
# Deterministic parameter initialization (shapes from the module's __init__)
# ----------------------------------------------------------------------------
def init_params(key, cfg):
    d = cfg["emb_size"]
    th = cfg["text_hidden_size"]
    gh = cfg["gnn_hidden_size"]
    R = cfg["class_num"]
    keys = iter(jax.random.split(key, 64))

    def dense(fan_in, fan_out, bias=True):
        w = jax.random.normal(next(keys), (fan_in, fan_out),
                              jnp.float32) / math.sqrt(fan_in)
        b = (jax.random.normal(next(keys), (fan_out,), jnp.float32) * 0.02
             if bias else None)
        return {"w": w, "b": b}

    def hhg():
        return {
            "Q1": dense(d, d, bias=False), "K1": dense(d, d, bias=False),
            "V1": dense(d, d, bias=False),
            "edge_linear": dense(d, d),
            "head_tail_linear": dense(d, d),
            "to_head_tail_linear": dense(d, d),
            "Q2": dense(d, d, bias=False), "K2": dense(d, d, bias=False),
            "V2": dense(d, d, bias=False),
            "u1": dense(d, d), "u2": dense(d, d),
            "norm": {"weight": jnp.ones((d,), jnp.float32),
                     "bias": jnp.zeros((d,), jnp.float32),
                     "mean_scale": jnp.ones((d,), jnp.float32)},
        }

    def rgcn(cin, cout):
        return {
            "weight": jax.random.normal(next(keys), (R, cin, cout),
                                        jnp.float32) / math.sqrt(cin),
            "root": jax.random.normal(next(keys), (cin, cout),
                                      jnp.float32) / math.sqrt(cin),
            "bias": jnp.zeros((cout,), jnp.float32),
        }

    edge_emb = jax.random.normal(next(keys), (R + 1, d), jnp.float32) * 0.1
    edge_emb = edge_emb.at[R].set(0.0)          # padding_idx = class_num

    return {
        "literature_encoder": {
            "src_embedding": jax.random.normal(
                next(keys), (cfg["vocab_size"], d), jnp.float32) * 0.1,
            "seg_embedding": jax.random.normal(next(keys), (3, d),
                                               jnp.float32) * 0.1,
            "w": jnp.ones((cfg["seq_length"],), jnp.float32),
        },
        "edge_embedding": edge_emb,
        "conv1": hhg(),
        "conv2": hhg(),
        "r_conv1": rgcn(d, gh),
        "r_conv2": rgcn(gh, d),
        "query_mlp0": dense(d, th),
        "query_mlp1": dense(th, d),
        "linear": dense(d, d),
    }


# ----------------------------------------------------------------------------
if __name__ == "__main__":
    cfg = dict(seq_length=8, emb_size=32, vocab_size=50, class_num=4,
               gnn_hidden_size=32, text_hidden_size=64, num_graphs=2)

    key = jax.random.PRNGKey(0)
    pkey, dkey = jax.random.split(key)
    params = init_params(pkey, cfg)
    plan = prepare_params(params, cfg)          # one-time weight prep (static)

    N, E = 8, 12
    ks = jax.random.split(dkey, 6)
    src = jax.random.randint(ks[0], (N, cfg["seq_length"]), 0, cfg["vocab_size"])
    seg = jax.random.randint(ks[1], (N, cfg["seq_length"]), 0, 3)
    # NOTE: HHGConv (as written in PyTorch) indexes edge_attr / hyperedges
    # (length E) with node ids from edge_index, so node ids must be < min(N, E).
    edge_index = jax.random.randint(ks[2], (2, E), 0, N)
    edge_type = jax.random.randint(ks[3], (E,), 0, cfg["class_num"])
    batch = jnp.sort(jax.random.randint(ks[4], (N,), 0, cfg["num_graphs"]))

    out = hcitengl_forward(plan, src, seg, edge_index, edge_type, batch, cfg)
    out = jax.block_until_ready(out)
    assert out.shape == (N, cfg["emb_size"])
    assert bool(jnp.all(jnp.isfinite(out)))
    print("KERNEL_OK")
</pallas_src>

<mosaic_0001>
module attributes {stable_mosaic.version = 11 : i64} {
  func.func @_literature_kernel(%arg0: i32, %arg1: memref<1x256xf32, #tpu.memory_space<vmem>>, %arg2: memref<256x256xf32, #tpu.memory_space<vmem>>, %arg3: memref<256x32xf32, #tpu.memory_space<vmem>>, %arg4: memref<8x256xf32, #tpu.memory_space<vmem>>, %arg5: memref<8x256xf32, #tpu.memory_space<vmem>>, %arg6: memref<8x32xf32, #tpu.memory_space<vmem>>) attributes {dimension_semantics = [#tpu.dimension_semantics<parallel>], iteration_bounds = array<i64: 1>, scalar_prefetch = 0 : i64, scratch_operands = 0 : i64, tpu.core_type = #tpu.core_type<tc>, window_params = [{pipeline_mode = #tpu.pipeline_mode<synchronous>, transform_indices = @transform_0, window_bounds = array<i64: 1, 256>}, {pipeline_mode = #tpu.pipeline_mode<synchronous>, transform_indices = @transform_1, window_bounds = array<i64: 256, 256>}, {pipeline_mode = #tpu.pipeline_mode<synchronous>, transform_indices = @transform_2, window_bounds = array<i64: 256, 32>}, {transform_indices = @transform_3, window_bounds = array<i64: 8, 256>}, {transform_indices = @transform_4, window_bounds = array<i64: 8, 256>}, {transform_indices = @transform_5, window_bounds = array<i64: 8, 32>}]} {
    %c0 = arith.constant 0 : index
    %c0_0 = arith.constant 0 : index
    %0 = vector.load %arg4[%c0, %c0_0] : memref<8x256xf32, #tpu.memory_space<vmem>>, vector<8x256xf32>
    %c0_1 = arith.constant 0 : index
    %c0_2 = arith.constant 0 : index
    %1 = vector.load %arg1[%c0_1, %c0_2] : memref<1x256xf32, #tpu.memory_space<vmem>>, vector<1x256xf32>
    %2 = vector.broadcast %1 : vector<1x256xf32> to vector<8x256xf32>
    %3 = arith.mulf %0, %2 : vector<8x256xf32>
    %c0_3 = arith.constant 0 : index
    %c0_4 = arith.constant 0 : index
    %4 = vector.load %arg5[%c0_3, %c0_4] : memref<8x256xf32, #tpu.memory_space<vmem>>, vector<8x256xf32>
    %5 = arith.mulf %3, %3 : vector<8x256xf32>
    %c0_5 = arith.constant 0 : index
    %c0_6 = arith.constant 0 : index
    %6 = vector.load %arg2[%c0_5, %c0_6] : memref<256x256xf32, #tpu.memory_space<vmem>>, vector<256x256xf32>
    %cst = arith.constant dense<0.000000e+00> : vector<8x256xf32>
    %7 = tpu.matmul %5, %6, %cst {dimension_numbers = #tpu.dot_dimension_numbers<[1], [0], [0], [1], [0, 0, 1, 1], [], []>, precision = #tpu.contract_precision<fp32>} : vector<8x256xf32>, vector<256x256xf32>, vector<8x256xf32> -> vector<8x256xf32>
    %8 = arith.mulf %4, %4 : vector<8x256xf32>
    %c0_7 = arith.constant 0 : index
    %c0_8 = arith.constant 0 : index
    %9 = vector.load %arg2[%c0_7, %c0_8] : memref<256x256xf32, #tpu.memory_space<vmem>>, vector<256x256xf32>
    %cst_9 = arith.constant dense<0.000000e+00> : vector<8x256xf32>
    %10 = tpu.matmul %8, %9, %cst_9 {dimension_numbers = #tpu.dot_dimension_numbers<[1], [0], [0], [1], [0, 0, 1, 1], [], []>, precision = #tpu.contract_precision<fp32>} : vector<8x256xf32>, vector<256x256xf32>, vector<8x256xf32> -> vector<8x256xf32>
    %cst_10 = arith.constant 1.000000e-24 : f32
    %11 = vector.broadcast %cst_10 : f32 to vector<8x256xf32>
    %12 = arith.maximumf %7, %11 : vector<8x256xf32>
    %13 = math.rsqrt %12 : vector<8x256xf32>
    %14 = arith.mulf %3, %13 : vector<8x256xf32>
    %cst_11 = arith.constant 1.000000e-24 : f32
    %15 = vector.broadcast %cst_11 : f32 to vector<8x256xf32>
    %16 = arith.maximumf %10, %15 : vector<8x256xf32>
    %17 = math.rsqrt %16 : vector<8x256xf32>
    %18 = arith.mulf %4, %17 : vector<8x256xf32>
    %19 = arith.addf %14, %18 : vector<8x256xf32>
    %c0_12 = arith.constant 0 : index
    %c0_13 = arith.constant 0 : index
    %20 = vector.load %arg3[%c0_12, %c0_13] : memref<256x32xf32, #tpu.memory_space<vmem>>, vector<256x32xf32>
    %cst_14 = arith.constant dense<0.000000e+00> : vector<8x32xf32>
    %21 = tpu.matmul %19, %20, %cst_14 {dimension_numbers = #tpu.dot_dimension_numbers<[1], [0], [0], [1], [0, 0, 1, 1], [], []>, precision = #tpu.contract_precision<fp32>} : vector<8x256xf32>, vector<256x32xf32>, vector<8x32xf32> -> vector<8x32xf32>
    %c0_15 = arith.constant 0 : index
    %c0_16 = arith.constant 0 : index
    %22 = vector.load %arg6[%c0_15, %c0_16] : memref<8x32xf32, #tpu.memory_space<vmem>>, vector<8x32xf32>
    tpu.vector_store %arg6[%c0_15, %c0_16], %21 {strides = array<i32>} : memref<8x32xf32, #tpu.memory_space<vmem>>, vector<8x32xf32>,
    return
  }
  func.func @transform_0(%arg0: i32) -> (i32, i32) {
    %c0_i32 = arith.constant 0 : i32
    %c0_i32_0 = arith.constant 0 : i32
    %c0_i32_1 = arith.constant 0 : i32
    return %c0_i32, %c0_i32_0 : i32, i32
  }
  func.func @transform_1(%arg0: i32) -> (i32, i32) {
    %c0_i32 = arith.constant 0 : i32
    %c0_i32_0 = arith.constant 0 : i32
    %c0_i32_1 = arith.constant 0 : i32
    return %c0_i32, %c0_i32_0 : i32, i32
  }
  func.func @transform_2(%arg0: i32) -> (i32, i32) {
    %c0_i32 = arith.constant 0 : i32
    %c0_i32_0 = arith.constant 0 : i32
    %c0_i32_1 = arith.constant 0 : i32
    return %c0_i32, %c0_i32_0 : i32, i32
  }
  func.func @transform_3(%arg0: i32) -> (i32, i32) {
    %c0_i32 = arith.constant 0 : i32
    %c0_i32_0 = arith.constant 0 : i32
    return %arg0, %c0_i32 : i32, i32
  }
  func.func @transform_4(%arg0: i32) -> (i32, i32) {
    %c0_i32 = arith.constant 0 : i32
    %c0_i32_0 = arith.constant 0 : i32
    return %arg0, %c0_i32 : i32, i32
  }
  func.func @transform_5(%arg0: i32) -> (i32, i32) {
    %c0_i32 = arith.constant 0 : i32
    %c0_i32_0 = arith.constant 0 : i32
    return %arg0, %c0_i32 : i32, i32
  }
}

</mosaic_0001>

<llo_original>
// kernel: tpu_custom_call.1
$region0: #{tpu_custom_call.1}
  #allocation0 [shape = 'u32[]', space=smem, size = 0x4, offset = 0x4, fixed_abs, tag = 'smem constant byte address 0x4 - core index']
  #allocation1 [shape = 'u32[72,128]{1,0:T(1,128)}', space=vmem, size = 0x9000, scoped, tag = 'internal scratch']
  %s0 = inlined_call_operand.vmem [shape: f32[1,256], index: 0, kind: input, shape index: {}]
  %s1 = inlined_call_operand.hbm [shape: f32[256,256], index: 1, kind: input, shape index: {}]
  %s2 = inlined_call_operand.vmem [shape: f32[256,32], index: 2, kind: input, shape index: {}]
  %s3 = inlined_call_operand.vmem [shape: f32[8,256], index: 3, kind: input, shape index: {}]
  %s4 = inlined_call_operand.vmem [shape: f32[8,256], index: 4, kind: input, shape index: {}]
  %s5 = inlined_call_operand.hbm [shape: f32[8,32], index: 5, kind: output, shape index: {}]
  %s6 = sld [smem:[#allocation0]]
  $region34: #{tpu_custom_call.1} parent=0
    _
  %s8 = ssub.s32 1, %s6
  %s9 = scalar_select 0, %s8, %s6
  $region1: #{tpu_custom_call.1} parent=0
    #allocation2 [shape = 'u8[262144]{0}', space=vmem, size = 0x40000, scoped, tag = 'input window, operand 1, single buffered']
    #allocation3 [shape = 's32[1]{0}', space=sflag, size = 0x4, scoped, tag = 'scoped memory for tpu_custom_call.1']
    #allocation4 [shape = 's32[1]{0}', space=sflag, size = 0x4, scoped, tag = 'scoped memory for tpu_custom_call.1']
    #allocation5 [shape = 'u8[4096]{0}', space=vmem, size = 0x1000, scoped, tag = 'output window, operand 0, single buffered']
    %10 = vsyncpa [#allocation3], 0
    %11 = vsyncpa [#allocation4], 0
    // Predicated region
    $region2: #{tpu_custom_call.1} parent=1 // pred_check
      _
    $region3: #{tpu_custom_call.1} parent=1 // pred_check_branch
      %13 = sbr.rel (0) target = $region5
    $region4: #{tpu_custom_call.1} parent=1 // pred_region
      _
    $region5: #{tpu_custom_call.1} parent=1 // pred_fallthru
      _
    // Predicated region
    $region6: #{tpu_custom_call.1} parent=1 // pred_check
      _
    $region7: #{tpu_custom_call.1} parent=1 // pred_check_branch
      %15 = sbr.rel (0) target = $region9
    $region8: #{tpu_custom_call.1} parent=1 // pred_region
      %17 = vsyncadd [#allocation3], 0
      %s18 = sshll.u32 %s1, 4
      %s19 = int_to_ptr.hbm [resolvable:$true] %s18
      %s20 = sshll.u32 [#allocation2], 4
      %s21 = int_to_ptr.vmem [resolvable:$true] %s20
      %26 = dma.hbm_to_vmem [thread:$0]  %s19, 8192, %s21, [#allocation3], 256, 256, 16
    $region9: #{tpu_custom_call.1} parent=1 // pred_fallthru
      _
    // Predicated region
    $region10: #{tpu_custom_call.1} parent=1 // pred_check
      _
    $region11: #{tpu_custom_call.1} parent=1 // pred_check_branch
      %28 = sbr.rel (0) target = $region13
    $region12: #{tpu_custom_call.1} parent=1 // pred_region
      _
    $region13: #{tpu_custom_call.1} parent=1 // pred_fallthru
      _
    // Predicated region
    $region14: #{tpu_custom_call.1} parent=1 // pred_check
      _
    $region15: #{tpu_custom_call.1} parent=1 // pred_check_branch
      %30 = sbr.rel (0) target = $region17
    $region16: #{tpu_custom_call.1} parent=1 // pred_region
      _
    $region17: #{tpu_custom_call.1} parent=1 // pred_fallthru
      _
    // Predicated region
    $region18: #{tpu_custom_call.1} parent=1 // pred_check
      _
    $region19: #{tpu_custom_call.1} parent=1 // pred_check_branch
      %32 = sbr.rel (0) target = $region21
    $region20: #{tpu_custom_call.1} parent=1 // pred_region
      _
    $region21: #{tpu_custom_call.1} parent=1 // pred_fallthru
      _
    // Predicated region
    $region22: #{tpu_custom_call.1} parent=1 // pred_check
      _
    $region23: #{tpu_custom_call.1} parent=1 // pred_check_branch
      %34 = sbr.rel (0) target = $region25
    $region24: #{tpu_custom_call.1} parent=1 // pred_region
      %36 = dma.done [#allocation3], 8192
    $region25: #{tpu_custom_call.1} parent=1 // pred_fallthru
      _
    %v37 = vld [vmem:[%s3] sm:$0xff]
    %v38 = vld [vmem:[%s3 + $0x8] sm:$0xff]
    %v39 = vld [vmem:[%s0] sm:$0x3]
    %v41 = vperm.slane %v39, 0
    %v42 = vperm.slane %v39, 1
    %v45 = vmul.f32 %v37, %v41
    %v46 = vmul.f32 %v38, %v42
    %v47 = vld [vmem:[%s4] sm:$0xff]
    %v48 = vld [vmem:[%s4 + $0x8] sm:$0xff]
    %v49 = vmul.f32 %v45, %v45
    %v50 = vmul.f32 %v46, %v46
    %v51 = vld [vmem:[#allocation2] sm:$0xff]
    %v52 = vld [vmem:[#allocation2 + $0x8] sm:$0xff]
    %v53 = vld [vmem:[#allocation2 + $0x10] sm:$0xff]
    %v54 = vld [vmem:[#allocation2 + $0x18] sm:$0xff]
    %v55 = vld [vmem:[#allocation2 + $0x20] sm:$0xff]
    %v56 = vld [vmem:[#allocation2 + $0x28] sm:$0xff]
    %v57 = vld [vmem:[#allocation2 + $0x30] sm:$0xff]
    %v58 = vld [vmem:[#allocation2 + $0x38] sm:$0xff]
    %v59 = vld [vmem:[#allocation2 + $0x40] sm:$0xff]
    %v60 = vld [vmem:[#allocation2 + $0x48] sm:$0xff]
    %v61 = vld [vmem:[#allocation2 + $0x50] sm:$0xff]
    %v62 = vld [vmem:[#allocation2 + $0x58] sm:$0xff]
    %v63 = vld [vmem:[#allocation2 + $0x60] sm:$0xff]
    %v64 = vld [vmem:[#allocation2 + $0x68] sm:$0xff]
    %v65 = vld [vmem:[#allocation2 + $0x70] sm:$0xff]
    %v66 = vld [vmem:[#allocation2 + $0x78] sm:$0xff]
    %v67 = vld [vmem:[#allocation2 + $0x80] sm:$0xff]
    %v68 = vld [vmem:[#allocation2 + $0x88] sm:$0xff]
    %v69 = vld [vmem:[#allocation2 + $0x90] sm:$0xff]
    %v70 = vld [vmem:[#allocation2 + $0x98] sm:$0xff]
    %v71 = vld [vmem:[#allocation2 + $0xa0] sm:$0xff]
    %v72 = vld [vmem:[#allocation2 + $0xa8] sm:$0xff]
    %v73 = vld [vmem:[#allocation2 + $0xb0] sm:$0xff]
    %v74 = vld [vmem:[#allocation2 + $0xb8] sm:$0xff]
    %v75 = vld [vmem:[#allocation2 + $0xc0] sm:$0xff]
    %v76 = vld [vmem:[#allocation2 + $0xc8] sm:$0xff]
    %v77 = vld [vmem:[#allocation2 + $0xd0] sm:$0xff]
    %v78 = vld [vmem:[#allocation2 + $0xd8] sm:$0xff]
    %v79 = vld [vmem:[#allocation2 + $0xe0] sm:$0xff]
    %v80 = vld [vmem:[#allocation2 + $0xe8] sm:$0xff]
    %v81 = vld [vmem:[#allocation2 + $0xf0] sm:$0xff]
    %v82 = vld [vmem:[#allocation2 + $0xf8] sm:$0xff]
    %v83 = vld [vmem:[#allocation2 + $0x100] sm:$0xff]
    %v84 = vld [vmem:[#allocation2 + $0x108] sm:$0xff]
    %v85 = vld [vmem:[#allocation2 + $0x110] sm:$0xff]
    %v86 = vld [vmem:[#allocation2 + $0x118] sm:$0xff]
    %v87 = vld [vmem:[#allocation2 + $0x120] sm:$0xff]
    %v88 = vld [vmem:[#allocation2 + $0x128] sm:$0xff]
    %v89 = vld [vmem:[#allocation2 + $0x130] sm:$0xff]
    %v90 = vld [vmem:[#allocation2 + $0x138] sm:$0xff]
    %v91 = vld [vmem:[#allocation2 + $0x140] sm:$0xff]
    %v92 = vld [vmem:[#allocation2 + $0x148] sm:$0xff]
    %v93 = vld [vmem:[#allocation2 + $0x150] sm:$0xff]
    %v94 = vld [vmem:[#allocation2 + $0x158] sm:$0xff]
    %v95 = vld [vmem:[#allocation2 + $0x160] sm:$0xff]
    %v96 = vld [vmem:[#allocation2 + $0x168] sm:$0xff]
    %v97 = vld [vmem:[#allocation2 + $0x170] sm:$0xff]
    %v98 = vld [vmem:[#allocation2 + $0x178] sm:$0xff]
    %v99 = vld [vmem:[#allocation2 + $0x180] sm:$0xff]
    %v100 = vld [vmem:[#allocation2 + $0x188] sm:$0xff]
    %v101 = vld [vmem:[#allocation2 + $0x190] sm:$0xff]
    %v102 = vld [vmem:[#allocation2 + $0x198] sm:$0xff]
    %v103 = vld [vmem:[#allocation2 + $0x1a0] sm:$0xff]
    %v104 = vld [vmem:[#allocation2 + $0x1a8] sm:$0xff]
    %v105 = vld [vmem:[#allocation2 + $0x1b0] sm:$0xff]
    %v106 = vld [vmem:[#allocation2 + $0x1b8] sm:$0xff]
    %v107 = vld [vmem:[#allocation2 + $0x1c0] sm:$0xff]
    %v108 = vld [vmem:[#allocation2 + $0x1c8] sm:$0xff]
    %v109 = vld [vmem:[#allocation2 + $0x1d0] sm:$0xff]
    %v110 = vld [vmem:[#allocation2 + $0x1d8] sm:$0xff]
    %v111 = vld [vmem:[#allocation2 + $0x1e0] sm:$0xff]
    %v112 = vld [vmem:[#allocation2 + $0x1e8] sm:$0xff]
    %v113 = vld [vmem:[#allocation2 + $0x1f0] sm:$0xff]
    %v114 = vld [vmem:[#allocation2 + $0x1f8] sm:$0xff]
    %v115 = vand.u32 %v81, 4294901760
    %116 = vmatpush.msra.mxu0 %v115
    %v117 = vand.u32 %v79, 4294901760
    %118 = vmatpush.msra.mxu0 %v117
    %v119 = vand.u32 %v77, 4294901760
    %120 = vmatpush.msra.mxu0 %v119
    %v121 = vand.u32 %v75, 4294901760
    %122 = vmatpush.msra.mxu0 %v121
    %v123 = vand.u32 %v73, 4294901760
    %124 = vmatpush.msra.mxu0 %v123
    %v125 = vand.u32 %v71, 4294901760
    %126 = vmatpush.msra.mxu0 %v125
    %v127 = vand.u32 %v69, 4294901760
    %128 = vmatpush.msra.mxu0 %v127
    %v129 = vand.u32 %v67, 4294901760
    %130 = vmatpush.msra.mxu0 %v129
    %v131 = vand.u32 %v65, 4294901760
    %132 = vmatpush.msra.mxu0 %v131
    %v133 = vand.u32 %v63, 4294901760
    %134 = vmatpush.msra.mxu0 %v133
    %v135 = vand.u32 %v61, 4294901760
    %136 = vmatpush.msra.mxu0 %v135
    %v137 = vand.u32 %v59, 4294901760
    %138 = vmatpush.msra.mxu0 %v137
    %v139 = vand.u32 %v57, 4294901760
    %140 = vmatpush.msra.mxu0 %v139
    %v141 = vand.u32 %v55, 4294901760
    %142 = vmatpush.msra.mxu0 %v141
    %v143 = vand.u32 %v53, 4294901760
    %144 = vmatpush.msra.mxu0 %v143
    %v145 = vand.u32 %v51, 4294901760
    %146 = vmatpush.msra.mxu0 %v145
    %v147 = vand.u32 %v49, 4294901760
    %v148 = vsub.f32 %v49, %v147
    %v149 = vand.u32 %v148, 4294901760
    %v150 = vsub.f32 %v148, %v149
    %v151 = vand.u32 %v150, 4294901760
    %152 = vmatmul.f32.gmra.mxu0 %v151
    %v153 = vpop.f32.mrf.mxu0
    %v154 = vadd.f32 0.0, %v153
    %155 = vdwg.mxu0
    %v156 = vand.u32 %v81, 4294901760
    %v157 = vsub.f32 %v81, %v156
    %v158 = vand.u32 %v157, 4294901760
    %v159 = vsub.f32 %v157, %v158
    %v160 = vand.u32 %v159, 4294901760
    %161 = vmatpush.msra.mxu0 %v160
    %v162 = vand.u32 %v79, 4294901760
    %v163 = vsub.f32 %v79, %v162
    %v164 = vand.u32 %v163, 4294901760
    %v165 = vsub.f32 %v163, %v164
    %v166 = vand.u32 %v165, 4294901760
    %167 = vmatpush.msra.mxu0 %v166
    %v168 = vand.u32 %v77, 4294901760
    %v169 = vsub.f32 %v77, %v168
    %v170 = vand.u32 %v169, 4294901760
    %v171 = vsub.f32 %v169, %v170
    %v172 = vand.u32 %v171, 4294901760
    %173 = vmatpush.msra.mxu0 %v172
    %v174 = vand.u32 %v75, 4294901760
    %v175 = vsub.f32 %v75, %v174
    %v176 = vand.u32 %v175, 4294901760
    %v177 = vsub.f32 %v175, %v176
    %v178 = vand.u32 %v177, 4294901760
    %179 = vmatpush.msra.mxu0 %v178
    %v180 = vand.u32 %v73, 4294901760
    %v181 = vsub.f32 %v73, %v180
    %v182 = vand.u32 %v181, 4294901760
    %v183 = vsub.f32 %v181, %v182
    %v184 = vand.u32 %v183, 4294901760
    %185 = vmatpush.msra.mxu0 %v184
    %v186 = vand.u32 %v71, 4294901760
    %v187 = vsub.f32 %v71, %v186
    %v188 = vand.u32 %v187, 4294901760
    %v189 = vsub.f32 %v187, %v188
    %v190 = vand.u32 %v189, 4294901760
    %191 = vmatpush.msra.mxu0 %v190
    %v192 = vand.u32 %v69, 4294901760
    %v193 = vsub.f32 %v69, %v192
    %v194 = vand.u32 %v193, 4294901760
    %v195 = vsub.f32 %v193, %v194
    %v196 = vand.u32 %v195, 4294901760
    %197 = vmatpush.msra.mxu0 %v196
    %v198 = vand.u32 %v67, 4294901760
    %v199 = vsub.f32 %v67, %v198
    %v200 = vand.u32 %v199, 4294901760
    %v201 = vsub.f32 %v199, %v200
    %v202 = vand.u32 %v201, 4294901760
    %203 = vmatpush.msra.mxu0 %v202
    %v204 = vand.u32 %v65, 4294901760
    %v205 = vsub.f32 %v65, %v204
    %v206 = vand.u32 %v205, 4294901760
    %v207 = vsub.f32 %v205, %v206
    %v208 = vand.u32 %v207, 4294901760
    %209 = vmatpush.msra.mxu0 %v208
    %v210 = vand.u32 %v63, 4294901760
    %v211 = vsub.f32 %v63, %v210
    %v212 = vand.u32 %v211, 4294901760
    %v213 = vsub.f32 %v211, %v212
    %v214 = vand.u32 %v213, 4294901760
    %215 = vmatpush.msra.mxu0 %v214
    %v216 = vand.u32 %v61, 4294901760
    %v217 = vsub.f32 %v61, %v216
    %v218 = vand.u32 %v217, 4294901760
    %v219 = vsub.f32 %v217, %v218
    %v220 = vand.u32 %v219, 4294901760
    %221 = vmatpush.msra.mxu0 %v220
    %v222 = vand.u32 %v59, 4294901760
    %v223 = vsub.f32 %v59, %v222
    %v224 = vand.u32 %v223, 4294901760
    %v225 = vsub.f32 %v223, %v224
    %v226 = vand.u32 %v225, 4294901760
    %227 = vmatpush.msra.mxu0 %v226
    %v228 = vand.u32 %v57, 4294901760
    %v229 = vsub.f32 %v57, %v228
    %v230 = vand.u32 %v229, 4294901760
    %v231 = vsub.f32 %v229, %v230
    %v232 = vand.u32 %v231, 4294901760
    %233 = vmatpush.msra.mxu0 %v232
    %v234 = vand.u32 %v55, 4294901760
    %v235 = vsub.f32 %v55, %v234
    %v236 = vand.u32 %v235, 4294901760
    %v237 = vsub.f32 %v235, %v236
    %v238 = vand.u32 %v237, 4294901760
    %239 = vmatpush.msra.mxu0 %v238
    %v240 = vand.u32 %v53, 4294901760
    %v241 = vsub.f32 %v53, %v240
    %v242 = vand.u32 %v241, 4294901760
    %v243 = vsub.f32 %v241, %v242
    %v244 = vand.u32 %v243, 4294901760
    %245 = vmatpush.msra.mxu0 %v244
    %v246 = vand.u32 %v51, 4294901760
    %v247 = vsub.f32 %v51, %v246
    %v248 = vand.u32 %v247, 4294901760
    %v249 = vsub.f32 %v247, %v248
    %v250 = vand.u32 %v249, 4294901760
    %251 = vmatpush.msra.mxu0 %v250
    %v252 = vand.u32 %v49, 4294901760
    %253 = vmatmul.f32.gmra.mxu0 %v252
    %v254 = vpop.f32.mrf.mxu0
    %v255 = vadd.f32 %v154, %v254
    %256 = vdwg.mxu0
    %v257 = vand.u32 %v81, 4294901760
    %v258 = vsub.f32 %v81, %v257
    %259 = vmatpush.msra.mxu0 %v258
    %v260 = vand.u32 %v79, 4294901760
    %v261 = vsub.f32 %v79, %v260
    %262 = vmatpush.msra.mxu0 %v261
    %v263 = vand.u32 %v77, 4294901760
    %v264 = vsub.f32 %v77, %v263
    %265 = vmatpush.msra.mxu0 %v264
    %v266 = vand.u32 %v75, 4294901760
    %v267 = vsub.f32 %v75, %v266
    %268 = vmatpush.msra.mxu0 %v267
    %v269 = vand.u32 %v73, 4294901760
    %v270 = vsub.f32 %v73, %v269
    %271 = vmatpush.msra.mxu0 %v270
    %v272 = vand.u32 %v71, 4294901760
    %v273 = vsub.f32 %v71, %v272
    %274 = vmatpush.msra.mxu0 %v273
    %v275 = vand.u32 %v69, 4294901760
    %v276 = vsub.f32 %v69, %v275
    %277 = vmatpush.msra.mxu0 %v276
    %v278 = vand.u32 %v67, 4294901760
    %v279 = vsub.f32 %v67, %v278
    %280 = vmatpush.msra.mxu0 %v279
    %v281 = vand.u32 %v65, 4294901760
    %v282 = vsub.f32 %v65, %v281
    %283 = vmatpush.msra.mxu0 %v282
    %v284 = vand.u32 %v63, 4294901760
    %v285 = vsub.f32 %v63, %v284
    %286 = vmatpush.msra.mxu0 %v285
    %v287 = vand.u32 %v61, 4294901760
    %v288 = vsub.f32 %v61, %v287
    %289 = vmatpush.msra.mxu0 %v288
    %v290 = vand.u32 %v59, 4294901760
    %v291 = vsub.f32 %v59, %v290
    %292 = vmatpush.msra.mxu0 %v291
    %v293 = vand.u32 %v57, 4294901760
    %v294 = vsub.f32 %v57, %v293
    %295 = vmatpush.msra.mxu0 %v294
    %v296 = vand.u32 %v55, 4294901760
    %v297 = vsub.f32 %v55, %v296
    %298 = vmatpush.msra.mxu0 %v297
    %v299 = vand.u32 %v53, 4294901760
    %v300 = vsub.f32 %v53, %v299
    %301 = vmatpush.msra.mxu0 %v300
    %v302 = vand.u32 %v51, 4294901760
    %v303 = vsub.f32 %v51, %v302
    %304 = vmatpush.msra.mxu0 %v303
    %v305 = vand.u32 %v49, 4294901760
    %v306 = vsub.f32 %v49, %v305
    %307 = vmatmul.f32.gmra.mxu0 %v306
    %v308 = vpop.f32.mrf.mxu0
    %v309 = vadd.f32 %v255, %v308
    %310 = vdwg.mxu0
    %v311 = vand.u32 %v81, 4294901760
    %312 = vmatpush.msra.mxu0 %v311
    %v313 = vand.u32 %v79, 4294901760
    %314 = vmatpush.msra.mxu0 %v313
    %v315 = vand.u32 %v77, 4294901760
    %316 = vmatpush.msra.mxu0 %v315
    %v317 = vand.u32 %v75, 4294901760
    %318 = vmatpush.msra.mxu0 %v317
    %v319 = vand.u32 %v73, 4294901760
    %320 = vmatpush.msra.mxu0 %v319
    %v321 = vand.u32 %v71, 4294901760
    %322 = vmatpush.msra.mxu0 %v321
    %v323 = vand.u32 %v69, 4294901760
    %324 = vmatpush.msra.mxu0 %v323
    %v325 = vand.u32 %v67, 4294901760
    %326 = vmatpush.msra.mxu0 %v325
    %v327 = vand.u32 %v65, 4294901760
    %328 = vmatpush.msra.mxu0 %v327
    %v329 = vand.u32 %v63, 4294901760
    %330 = vmatpush.msra.mxu0 %v329
    %v331 = vand.u32 %v61, 4294901760
    %332 = vmatpush.msra.mxu0 %v331
    %v333 = vand.u32 %v59, 4294901760
    %334 = vmatpush.msra.mxu0 %v333
    %v335 = vand.u32 %v57, 4294901760
    %336 = vmatpush.msra.mxu0 %v335
    %v337 = vand.u32 %v55, 4294901760
    %338 = vmatpush.msra.mxu0 %v337
    %v339 = vand.u32 %v53, 4294901760
    %340 = vmatpush.msra.mxu0 %v339
    %v341 = vand.u32 %v51, 4294901760
    %342 = vmatpush.msra.mxu0 %v341
    %v343 = vand.u32 %v49, 4294901760
    %v344 = vsub.f32 %v49, %v343
    %v345 = vand.u32 %v344, 4294901760
    %346 = vmatmul.f32.gmra.mxu0 %v345
    %v347 = vpop.f32.mrf.mxu0
    %v348 = vadd.f32 %v309, %v347
    %349 = vdwg.mxu0
    %v350 = vand.u32 %v81, 4294901760
    %v351 = vsub.f32 %v81, %v350
    %v352 = vand.u32 %v351, 4294901760
    %353 = vmatpush.msra.mxu0 %v352
    %v354 = vand.u32 %v79, 4294901760
    %v355 = vsub.f32 %v79, %v354
    %v356 = vand.u32 %v355, 4294901760
    %357 = vmatpush.msra.mxu0 %v356
    %v358 = vand.u32 %v77, 4294901760
    %v359 = vsub.f32 %v77, %v358
    %v360 = vand.u32 %v359, 4294901760
    %361 = vmatpush.msra.mxu0 %v360
    %v362 = vand.u32 %v75, 4294901760
    %v363 = vsub.f32 %v75, %v362
    %v364 = vand.u32 %v363, 4294901760
    %365 = vmatpush.msra.mxu0 %v364
    %v366 = vand.u32 %v73, 4294901760
    %v367 = vsub.f32 %v73, %v366
    %v368 = vand.u32 %v367, 4294901760
    %369 = vmatpush.msra.mxu0 %v368
    %v370 = vand.u32 %v71, 4294901760
    %v371 = vsub.f32 %v71, %v370
    %v372 = vand.u32 %v371, 4294901760
    %373 = vmatpush.msra.mxu0 %v372
    %v374 = vand.u32 %v69, 4294901760
    %v375 = vsub.f32 %v69, %v374
    %v376 = vand.u32 %v375, 4294901760
    %377 = vmatpush.msra.mxu0 %v376
    %v378 = vand.u32 %v67, 4294901760
    %v379 = vsub.f32 %v67, %v378
    %v380 = vand.u32 %v379, 4294901760
    %381 = vmatpush.msra.mxu0 %v380
    %v382 = vand.u32 %v65, 4294901760
    %v383 = vsub.f32 %v65, %v382
    %v384 = vand.u32 %v383, 4294901760
    %385 = vmatpush.msra.mxu0 %v384
    %v386 = vand.u32 %v63, 4294901760
    %v387 = vsub.f32 %v63, %v386
    %v388 = vand.u32 %v387, 4294901760
    %389 = vmatpush.msra.mxu0 %v388
    %v390 = vand.u32 %v61, 4294901760
    %v391 = vsub.f32 %v61, %v390
    %v392 = vand.u32 %v391, 4294901760
    %393 = vmatpush.msra.mxu0 %v392
    %v394 = vand.u32 %v59, 4294901760
    %v395 = vsub.f32 %v59, %v394
    %v396 = vand.u32 %v395, 4294901760
    %397 = vmatpush.msra.mxu0 %v396
    %v398 = vand.u32 %v57, 4294901760
    %v399 = vsub.f32 %v57, %v398
    %v400 = vand.u32 %v399, 4294901760
    %401 = vmatpush.msra.mxu0 %v400
    %v402 = vand.u32 %v55, 4294901760
    %v403 = vsub.f32 %v55, %v402
    %v404 = vand.u32 %v403, 4294901760
    %405 = vmatpush.msra.mxu0 %v404
    %v406 = vand.u32 %v53, 4294901760
    %v407 = vsub.f32 %v53, %v406
    %v408 = vand.u32 %v407, 4294901760
    %409 = vmatpush.msra.mxu0 %v408
    %v410 = vand.u32 %v51, 4294901760
    %v411 = vsub.f32 %v51, %v410
    %v412 = vand.u32 %v411, 4294901760
    %413 = vmatpush.msra.mxu0 %v412
    %v414 = vand.u32 %v49, 4294901760
    %415 = vmatmul.f32.gmra.mxu0 %v414
    %v416 = vpop.f32.mrf.mxu0
    %v417 = vadd.f32 %v348, %v416
    %418 = vdwg.mxu0
    %v419 = vand.u32 %v81, 4294901760
    %420 = vmatpush.msra.mxu0 %v419
    %v421 = vand.u32 %v79, 4294901760
    %422 = vmatpush.msra.mxu0 %v421
    %v423 = vand.u32 %v77, 4294901760
    %424 = vmatpush.msra.mxu0 %v423
    %v425 = vand.u32 %v75, 4294901760
    %426 = vmatpush.msra.mxu0 %v425
    %v427 = vand.u32 %v73, 4294901760
    %428 = vmatpush.msra.mxu0 %v427
    %v429 = vand.u32 %v71, 4294901760
    %430 = vmatpush.msra.mxu0 %v429
    %v431 = vand.u32 %v69, 4294901760
    %432 = vmatpush.msra.mxu0 %v431
    %v433 = vand.u32 %v67, 4294901760
    %434 = vmatpush.msra.mxu0 %v433
    %v435 = vand.u32 %v65, 4294901760
    %436 = vmatpush.msra.mxu0 %v435
    %v437 = vand.u32 %v63, 4294901760
    %438 = vmatpush.msra.mxu0 %v437
    %v439 = vand.u32 %v61, 4294901760
    %440 = vmatpush.msra.mxu0 %v439
    %v441 = vand.u32 %v59, 4294901760
    %442 = vmatpush.msra.mxu0 %v441
    %v443 = vand.u32 %v57, 4294901760
    %444 = vmatpush.msra.mxu0 %v443
    %v445 = vand.u32 %v55, 4294901760
    %446 = vmatpush.msra.mxu0 %v445
    %v447 = vand.u32 %v53, 4294901760
    %448 = vmatpush.msra.mxu0 %v447
    %v449 = vand.u32 %v51, 4294901760
    %450 = vmatpush.msra.mxu0 %v449
    %v451 = vand.u32 %v49, 4294901760
    %452 = vmatmul.f32.gmra.mxu0 %v451
    %v453 = vpop.f32.mrf.mxu0
    %v454 = vadd.f32 %v417, %v453
    %455 = vdwg.mxu0
    %v456 = vand.u32 %v113, 4294901760
    %457 = vmatpush.msra.mxu0 %v456
    %v458 = vand.u32 %v111, 4294901760
    %459 = vmatpush.msra.mxu0 %v458
    %v460 = vand.u32 %v109, 4294901760
    %461 = vmatpush.msra.mxu0 %v460
    %v462 = vand.u32 %v107, 4294901760
    %463 = vmatpush.msra.mxu0 %v462
    %v464 = vand.u32 %v105, 4294901760
    %465 = vmatpush.msra.mxu0 %v464
    %v466 = vand.u32 %v103, 4294901760
    %467 = vmatpush.msra.mxu0 %v466
    %v468 = vand.u32 %v101, 4294901760
    %469 = vmatpush.msra.mxu0 %v468
    %v470 = vand.u32 %v99, 4294901760
    %471 = vmatpush.msra.mxu0 %v470
    %v472 = vand.u32 %v97, 4294901760
    %473 = vmatpush.msra.mxu0 %v472
    %v474 = vand.u32 %v95, 4294901760
    %475 = vmatpush.msra.mxu0 %v474
    %v476 = vand.u32 %v93, 4294901760
    %477 = vmatpush.msra.mxu0 %v476
    %v478 = vand.u32 %v91, 4294901760
    %479 = vmatpush.msra.mxu0 %v478
    %v480 = vand.u32 %v89, 4294901760
    %481 = vmatpush.msra.mxu0 %v480
    %v482 = vand.u32 %v87, 4294901760
    %483 = vmatpush.msra.mxu0 %v482
    %v484 = vand.u32 %v85, 4294901760
    %485 = vmatpush.msra.mxu0 %v484
    %v486 = vand.u32 %v83, 4294901760
    %487 = vmatpush.msra.mxu0 %v486
    %v488 = vand.u32 %v50, 4294901760
    %v489 = vsub.f32 %v50, %v488
    %v490 = vand.u32 %v489, 4294901760
    %v491 = vsub.f32 %v489, %v490
    %v492 = vand.u32 %v491, 4294901760
    %493 = vmatmul.f32.gmra.mxu0 %v492
    %v494 = vpop.f32.mrf.mxu0
    %v495 = vadd.f32 %v454, %v494
    %496 = vdwg.mxu0
    %v497 = vand.u32 %v113, 4294901760
    %v498 = vsub.f32 %v113, %v497
    %v499 = vand.u32 %v498, 4294901760
    %v500 = vsub.f32 %v498, %v499
    %v501 = vand.u32 %v500, 4294901760
    %502 = vmatpush.msra.mxu0 %v501
    %v503 = vand.u32 %v111, 4294901760
    %v504 = vsub.f32 %v111, %v503
    %v505 = vand.u32 %v504, 4294901760
    %v506 = vsub.f32 %v504, %v505
    %v507 = vand.u32 %v506, 4294901760
    %508 = vmatpush.msra.mxu0 %v507
    %v509 = vand.u32 %v109, 4294901760
    %v510 = vsub.f32 %v109, %v509
    %v511 = vand.u32 %v510, 4294901760
    %v512 = vsub.f32 %v510, %v511
    %v513 = vand.u32 %v512, 4294901760
    %514 = vmatpush.msra.mxu0 %v513
    %v515 = vand.u32 %v107, 4294901760
    %v516 = vsub.f32 %v107, %v515
    %v517 = vand.u32 %v516, 4294901760
    %v518 = vsub.f32 %v516, %v517
    %v519 = vand.u32 %v518, 4294901760
    %520 = vmatpush.msra.mxu0 %v519
    %v521 = vand.u32 %v105, 4294901760
    %v522 = vsub.f32 %v105, %v521
    %v523 = vand.u32 %v522, 4294901760
    %v524 = vsub.f32 %v522, %v523
    %v525 = vand.u32 %v524, 4294901760
    %526 = vmatpush.msra.mxu0 %v525
    %v527 = vand.u32 %v103, 4294901760
    %v528 = vsub.f32 %v103, %v527
    %v529 = vand.u32 %v528, 4294901760
    %v530 = vsub.f32 %v528, %v529
    %v531 = vand.u32 %v530, 4294901760
    %532 = vmatpush.msra.mxu0 %v531
    %v533 = vand.u32 %v101, 4294901760
    %v534 = vsub.f32 %v101, %v533
    %v535 = vand.u32 %v534, 4294901760
    %v536 = vsub.f32 %v534, %v535
    %v537 = vand.u32 %v536, 4294901760
    %538 = vmatpush.msra.mxu0 %v537
    %v539 = vand.u32 %v99, 4294901760
    %v540 = vsub.f32 %v99, %v539
    %v541 = vand.u32 %v540, 4294901760
    %v542 = vsub.f32 %v540, %v541
    %v543 = vand.u32 %v542, 4294901760
    %544 = vmatpush.msra.mxu0 %v543
    %v545 = vand.u32 %v97, 4294901760
    %v546 = vsub.f32 %v97, %v545
    %v547 = vand.u32 %v546, 4294901760
    %v548 = vsub.f32 %v546, %v547
    %v549 = vand.u32 %v548, 4294901760
    %550 = vmatpush.msra.mxu0 %v549
    %v551 = vand.u32 %v95, 4294901760
    %v552 = vsub.f32 %v95, %v551
    %v553 = vand.u32 %v552, 4294901760
    %v554 = vsub.f32 %v552, %v553
    %v555 = vand.u32 %v554, 4294901760
    %556 = vmatpush.msra.mxu0 %v555
    %v557 = vand.u32 %v93, 4294901760
    %v558 = vsub.f32 %v93, %v557
    %v559 = vand.u32 %v558, 4294901760
    %v560 = vsub.f32 %v558, %v559
    %v561 = vand.u32 %v560, 4294901760
    %562 = vmatpush.msra.mxu0 %v561
    %v563 = vand.u32 %v91, 4294901760
    %v564 = vsub.f32 %v91, %v563
    %v565 = vand.u32 %v564, 4294901760
    %v566 = vsub.f32 %v564, %v565
    %v567 = vand.u32 %v566, 4294901760
    %568 = vmatpush.msra.mxu0 %v567
    %v569 = vand.u32 %v89, 4294901760
    %v570 = vsub.f32 %v89, %v569
    %v571 = vand.u32 %v570, 4294901760
    %v572 = vsub.f32 %v570, %v571
    %v573 = vand.u32 %v572, 4294901760
    %574 = vmatpush.msra.mxu0 %v573
    %v575 = vand.u32 %v87, 4294901760
    %v576 = vsub.f32 %v87, %v575
    %v577 = vand.u32 %v576, 4294901760
    %v578 = vsub.f32 %v576, %v577
    %v579 = vand.u32 %v578, 4294901760
    %580 = vmatpush.msra.mxu0 %v579
    %v581 = vand.u32 %v85, 4294901760
    %v582 = vsub.f32 %v85, %v581
    %v583 = vand.u32 %v582, 4294901760
    %v584 = vsub.f32 %v582, %v583
    %v585 = vand.u32 %v584, 4294901760
    %586 = vmatpush.msra.mxu0 %v585
    %v587 = vand.u32 %v83, 4294901760
    %v588 = vsub.f32 %v83, %v587
    %v589 = vand.u32 %v588, 4294901760
    %v590 = vsub.f32 %v588, %v589
    %v591 = vand.u32 %v590, 4294901760
    %592 = vmatpush.msra.mxu0 %v591
    %v593 = vand.u32 %v50, 4294901760
    %594 = vmatmul.f32.gmra.mxu0 %v593
    %v595 = vpop.f32.mrf.mxu0
    %v596 = vadd.f32 %v495, %v595
    %597 = vdwg.mxu0
    %v598 = vand.u32 %v113, 4294901760
    %v599 = vsub.f32 %v113, %v598
    %600 = vmatpush.msra.mxu0 %v599
    %v601 = vand.u32 %v111, 4294901760
    %v602 = vsub.f32 %v111, %v601
    %603 = vmatpush.msra.mxu0 %v602
    %v604 = vand.u32 %v109, 4294901760
    %v605 = vsub.f32 %v109, %v604
    %606 = vmatpush.msra.mxu0 %v605
    %v607 = vand.u32 %v107, 4294901760
    %v608 = vsub.f32 %v107, %v607
    %609 = vmatpush.msra.mxu0 %v608
    %v610 = vand.u32 %v105, 4294901760
    %v611 = vsub.f32 %v105, %v610
    %612 = vmatpush.msra.mxu0 %v611
    %v613 = vand.u32 %v103, 4294901760
    %v614 = vsub.f32 %v103, %v613
    %615 = vmatpush.msra.mxu0 %v614
    %v616 = vand.u32 %v101, 4294901760
    %v617 = vsub.f32 %v101, %v616
    %618 = vmatpush.msra.mxu0 %v617
    %v619 = vand.u32 %v99, 4294901760
    %v620 = vsub.f32 %v99, %v619
    %621 = vmatpush.msra.mxu0 %v620
    %v622 = vand.u32 %v97, 4294901760
    %v623 = vsub.f32 %v97, %v622
    %624 = vmatpush.msra.mxu0 %v623
    %v625 = vand.u32 %v95, 4294901760
    %v626 = vsub.f32 %v95, %v625
    %627 = vmatpush.msra.mxu0 %v626
    %v628 = vand.u32 %v93, 4294901760
    %v629 = vsub.f32 %v93, %v628
    %630 = vmatpush.msra.mxu0 %v629
    %v631 = vand.u32 %v91, 4294901760
    %v632 = vsub.f32 %v91, %v631
    %633 = vmatpush.msra.mxu0 %v632
    %v634 = vand.u32 %v89, 4294901760
    %v635 = vsub.f32 %v89, %v634
    %636 = vmatpush.msra.mxu0 %v635
    %v637 = vand.u32 %v87, 4294901760
    %v638 = vsub.f32 %v87, %v637
    %639 = vmatpush.msra.mxu0 %v638
    %v640 = vand.u32 %v85, 4294901760
    %v641 = vsub.f32 %v85, %v640
    %642 = vmatpush.msra.mxu0 %v641
    %v643 = vand.u32 %v83, 4294901760
    %v644 = vsub.f32 %v83, %v643
    %645 = vmatpush.msra.mxu0 %v644
    %v646 = vand.u32 %v50, 4294901760
    %v647 = vsub.f32 %v50, %v646
    %648 = vmatmul.f32.gmra.mxu0 %v647
    %v649 = vpop.f32.mrf.mxu0
    %v650 = vadd.f32 %v596, %v649
    %651 = vdwg.mxu0
    %v652 = vand.u32 %v113, 4294901760
    %653 = vmatpush.msra.mxu0 %v652
    %v654 = vand.u32 %v111, 4294901760
    %655 = vmatpush.msra.mxu0 %v654
    %v656 = vand.u32 %v109, 4294901760
    %657 = vmatpush.msra.mxu0 %v656
    %v658 = vand.u32 %v107, 4294901760
    %659 = vmatpush.msra.mxu0 %v658
    %v660 = vand.u32 %v105, 4294901760
    %661 = vmatpush.msra.mxu0 %v660
    %v662 = vand.u32 %v103, 4294901760
    %663 = vmatpush.msra.mxu0 %v662
    %v664 = vand.u32 %v101, 4294901760
    %665 = vmatpush.msra.mxu0 %v664
    %v666 = vand.u32 %v99, 4294901760
    %667 = vmatpush.msra.mxu0 %v666
    %v668 = vand.u32 %v97, 4294901760
    %669 = vmatpush.msra.mxu0 %v668
    %v670 = vand.u32 %v95, 4294901760
    %671 = vmatpush.msra.mxu0 %v670
    %v672 = vand.u32 %v93, 4294901760
    %673 = vmatpush.msra.mxu0 %v672
    %v674 = vand.u32 %v91, 4294901760
    %675 = vmatpush.msra.mxu0 %v674
    %v676 = vand.u32 %v89, 4294901760
    %677 = vmatpush.msra.mxu0 %v676
    %v678 = vand.u32 %v87, 4294901760
    %679 = vmatpush.msra.mxu0 %v678
    %v680 = vand.u32 %v85, 4294901760
    %681 = vmatpush.msra.mxu0 %v680
    %v682 = vand.u32 %v83, 4294901760
    %683 = vmatpush.msra.mxu0 %v682
    %v684 = vand.u32 %v50, 4294901760
    %v685 = vsub.f32 %v50, %v684
    %v686 = vand.u32 %v685, 4294901760
    %687 = vmatmul.f32.gmra.mxu0 %v686
    %v688 = vpop.f32.mrf.mxu0
    %v689 = vadd.f32 %v650, %v688
    %690 = vdwg.mxu0
    %v691 = vand.u32 %v113, 4294901760
    %v692 = vsub.f32 %v113, %v691
    %v693 = vand.u32 %v692, 4294901760
    %694 = vmatpush.msra.mxu0 %v693
    %v695 = vand.u32 %v111, 4294901760
    %v696 = vsub.f32 %v111, %v695
    %v697 = vand.u32 %v696, 4294901760
    %698 = vmatpush.msra.mxu0 %v697
    %v699 = vand.u32 %v109, 4294901760
    %v700 = vsub.f32 %v109, %v699
    %v701 = vand.u32 %v700, 4294901760
    %702 = vmatpush.msra.mxu0 %v701
    %v703 = vand.u32 %v107, 4294901760
    %v704 = vsub.f32 %v107, %v703
    %v705 = vand.u32 %v704, 4294901760
    %706 = vmatpush.msra.mxu0 %v705
    %v707 = vand.u32 %v105, 4294901760
    %v708 = vsub.f32 %v105, %v707
    %v709 = vand.u32 %v708, 4294901760
    %710 = vmatpush.msra.mxu0 %v709
    %v711 = vand.u32 %v103, 4294901760
    %v712 = vsub.f32 %v103, %v711
    %v713 = vand.u32 %v712, 4294901760
    %714 = vmatpush.msra.mxu0 %v713
    %v715 = vand.u32 %v101, 4294901760
    %v716 = vsub.f32 %v101, %v715
    %v717 = vand.u32 %v716, 4294901760
    %718 = vmatpush.msra.mxu0 %v717
    %v719 = vand.u32 %v99, 4294901760
    %v720 = vsub.f32 %v99, %v719
    %v721 = vand.u32 %v720, 4294901760
    %722 = vmatpush.msra.mxu0 %v721
    %v723 = vand.u32 %v97, 4294901760
    %v724 = vsub.f32 %v97, %v723
    %v725 = vand.u32 %v724, 4294901760
    %726 = vmatpush.msra.mxu0 %v725
    %v727 = vand.u32 %v95, 4294901760
    %v728 = vsub.f32 %v95, %v727
    %v729 = vand.u32 %v728, 4294901760
    %730 = vmatpush.msra.mxu0 %v729
    %v731 = vand.u32 %v93, 4294901760
    %v732 = vsub.f32 %v93, %v731
    %v733 = vand.u32 %v732, 4294901760
    %734 = vmatpush.msra.mxu0 %v733
    %v735 = vand.u32 %v91, 4294901760
    %v736 = vsub.f32 %v91, %v735
    %v737 = vand.u32 %v736, 4294901760
    %738 = vmatpush.msra.mxu0 %v737
    %v739 = vand.u32 %v89, 4294901760
    %v740 = vsub.f32 %v89, %v739
    %v741 = vand.u32 %v740, 4294901760
    %742 = vmatpush.msra.mxu0 %v741
    %v743 = vand.u32 %v87, 4294901760
    %v744 = vsub.f32 %v87, %v743
    %v745 = vand.u32 %v744, 4294901760
    %746 = vmatpush.msra.mxu0 %v745
    %v747 = vand.u32 %v85, 4294901760
    %v748 = vsub.f32 %v85, %v747
    %v749 = vand.u32 %v748, 4294901760
    %750 = vmatpush.msra.mxu0 %v749
    %v751 = vand.u32 %v83, 4294901760
    %v752 = vsub.f32 %v83, %v751
    %v753 = vand.u32 %v752, 4294901760
    %754 = vmatpush.msra.mxu0 %v753
    %v755 = vand.u32 %v50, 4294901760
    %756 = vmatmul.f32.gmra.mxu0 %v755
    %v757 = vpop.f32.mrf.mxu0
    %v758 = vadd.f32 %v689, %v757
    %759 = vdwg.mxu0
    %v760 = vand.u32 %v113, 4294901760
    %761 = vmatpush.msra.mxu0 %v760
    %v762 = vand.u32 %v111, 4294901760
    %763 = vmatpush.msra.mxu0 %v762
    %v764 = vand.u32 %v109, 4294901760
    %765 = vmatpush.msra.mxu0 %v764
    %v766 = vand.u32 %v107, 4294901760
    %767 = vmatpush.msra.mxu0 %v766
    %v768 = vand.u32 %v105, 4294901760
    %769 = vmatpush.msra.mxu0 %v768
    %v770 = vand.u32 %v103, 4294901760
    %771 = vmatpush.msra.mxu0 %v770
    %v772 = vand.u32 %v101, 4294901760
    %773 = vmatpush.msra.mxu0 %v772
    %v774 = vand.u32 %v99, 4294901760
    %775 = vmatpush.msra.mxu0 %v774
    %v776 = vand.u32 %v97, 4294901760
    %777 = vmatpush.msra.mxu0 %v776
    %v778 = vand.u32 %v95, 4294901760
    %779 = vmatpush.msra.mxu0 %v778
    %v780 = vand.u32 %v93, 4294901760
    %781 = vmatpush.msra.mxu0 %v780
    %v782 = vand.u32 %v91, 4294901760
    %783 = vmatpush.msra.mxu0 %v782
    %v784 = vand.u32 %v89, 4294901760
    %785 = vmatpush.msra.mxu0 %v784
    %v786 = vand.u32 %v87, 4294901760
    %787 = vmatpush.msra.mxu0 %v786
    %v788 = vand.u32 %v85, 4294901760
    %789 = vmatpush.msra.mxu0 %v788
    %v790 = vand.u32 %v83, 4294901760
    %791 = vmatpush.msra.mxu0 %v790
    %v792 = vand.u32 %v50, 4294901760
    %793 = vmatmul.f32.gmra.mxu0 %v792
    %v794 = vpop.f32.mrf.mxu0
    %v795 = vadd.f32 %v758, %v794
    %796 = vdwg.mxu0
    %v797 = vand.u32 %v82, 4294901760
    %798 = vmatpush.msra.mxu0 %v797
    %v799 = vand.u32 %v80, 4294901760
    %800 = vmatpush.msra.mxu0 %v799
    %v801 = vand.u32 %v78, 4294901760
    %802 = vmatpush.msra.mxu0 %v801
    %v803 = vand.u32 %v76, 4294901760
    %804 = vmatpush.msra.mxu0 %v803
    %v805 = vand.u32 %v74, 4294901760
    %806 = vmatpush.msra.mxu0 %v805
    %v807 = vand.u32 %v72, 4294901760
    %808 = vmatpush.msra.mxu0 %v807
    %v809 = vand.u32 %v70, 4294901760
    %810 = vmatpush.msra.mxu0 %v809
    %v811 = vand.u32 %v68, 4294901760
    %812 = vmatpush.msra.mxu0 %v811
    %v813 = vand.u32 %v66, 4294901760
    %814 = vmatpush.msra.mxu0 %v813
    %v815 = vand.u32 %v64, 4294901760
    %816 = vmatpush.msra.mxu0 %v815
    %v817 = vand.u32 %v62, 4294901760
    %818 = vmatpush.msra.mxu0 %v817
    %v819 = vand.u32 %v60, 4294901760
    %820 = vmatpush.msra.mxu0 %v819
    %v821 = vand.u32 %v58, 4294901760
    %822 = vmatpush.msra.mxu0 %v821
    %v823 = vand.u32 %v56, 4294901760
    %824 = vmatpush.msra.mxu0 %v823
    %v825 = vand.u32 %v54, 4294901760
    %826 = vmatpush.msra.mxu0 %v825
    %v827 = vand.u32 %v52, 4294901760
    %828 = vmatpush.msra.mxu0 %v827
    %v829 = vand.u32 %v49, 4294901760
    %v830 = vsub.f32 %v49, %v829
    %v831 = vand.u32 %v830, 4294901760
    %v832 = vsub.f32 %v830, %v831
    %v833 = vand.u32 %v832, 4294901760
    %834 = vmatmul.f32.gmra.mxu0 %v833
    %v835 = vpop.f32.mrf.mxu0
    %v836 = vadd.f32 0.0, %v835
    %837 = vdwg.mxu0
    %v838 = vand.u32 %v82, 4294901760
    %v839 = vsub.f32 %v82, %v838
    %v840 = vand.u32 %v839, 4294901760
    %v841 = vsub.f32 %v839, %v840
    %v842 = vand.u32 %v841, 4294901760
    %843 = vmatpush.msra.mxu0 %v842
    %v844 = vand.u32 %v80, 4294901760
    %v845 = vsub.f32 %v80, %v844
    %v846 = vand.u32 %v845, 4294901760
    %v847 = vsub.f32 %v845, %v846
    %v848 = vand.u32 %v847, 4294901760
    %849 = vmatpush.msra.mxu0 %v848
    %v850 = vand.u32 %v78, 4294901760
    %v851 = vsub.f32 %v78, %v850
    %v852 = vand.u32 %v851, 4294901760
    %v853 = vsub.f32 %v851, %v852
    %v854 = vand.u32 %v853, 4294901760
    %855 = vmatpush.msra.mxu0 %v854
    %v856 = vand.u32 %v76, 4294901760
    %v857 = vsub.f32 %v76, %v856
    %v858 = vand.u32 %v857, 4294901760
    %v859 = vsub.f32 %v857, %v858
    %v860 = vand.u32 %v859, 4294901760
    %861 = vmatpush.msra.mxu0 %v860
    %v862 = vand.u32 %v74, 4294901760
    %v863 = vsub.f32 %v74, %v862
    %v864 = vand.u32 %v863, 4294901760
    %v865 = vsub.f32 %v863, %v864
    %v866 = vand.u32 %v865, 4294901760
    %867 = vmatpush.msra.mxu0 %v866
    %v868 = vand.u32 %v72, 4294901760
    %v869 = vsub.f32 %v72, %v868
    %v870 = vand.u32 %v869, 4294901760
    %v871 = vsub.f32 %v869, %v870
    %v872 = vand.u32 %v871, 4294901760
    %873 = vmatpush.msra.mxu0 %v872
    %v874 = vand.u32 %v70, 4294901760
    %v875 = vsub.f32 %v70, %v874
    %v876 = vand.u32 %v875, 4294901760
    %v877 = vsub.f32 %v875, %v876
    %v878 = vand.u32 %v877, 4294901760
    %879 = vmatpush.msra.mxu0 %v878
    %v880 = vand.u32 %v68, 4294901760
    %v881 = vsub.f32 %v68, %v880
    %v882 = vand.u32 %v881, 4294901760
    %v883 = vsub.f32 %v881, %v882
    %v884 = vand.u32 %v883, 4294901760
    %885 = vmatpush.msra.mxu0 %v884
    %v886 = vand.u32 %v66, 4294901760
    %v887 = vsub.f32 %v66, %v886
    %v888 = vand.u32 %v887, 4294901760
    %v889 = vsub.f32 %v887, %v888
    %v890 = vand.u32 %v889, 4294901760
    %891 = vmatpush.msra.mxu0 %v890
    %v892 = vand.u32 %v64, 4294901760
    %v893 = vsub.f32 %v64, %v892
    %v894 = vand.u32 %v893, 4294901760
    %v895 = vsub.f32 %v893, %v894
    %v896 = vand.u32 %v895, 4294901760
    %897 = vmatpush.msra.mxu0 %v896
    %v898 = vand.u32 %v62, 4294901760
    %v899 = vsub.f32 %v62, %v898
    %v900 = vand.u32 %v899, 4294901760
    %v901 = vsub.f32 %v899, %v900
    %v902 = vand.u32 %v901, 4294901760
    %903 = vmatpush.msra.mxu0 %v902
    %v904 = vand.u32 %v60, 4294901760
    %v905 = vsub.f32 %v60, %v904
    %v906 = vand.u32 %v905, 4294901760
    %v907 = vsub.f32 %v905, %v906
    %v908 = vand.u32 %v907, 4294901760
    %909 = vmatpush.msra.mxu0 %v908
    %v910 = vand.u32 %v58, 4294901760
    %v911 = vsub.f32 %v58, %v910
    %v912 = vand.u32 %v911, 4294901760
    %v913 = vsub.f32 %v911, %v912
    %v914 = vand.u32 %v913, 4294901760
    %915 = vmatpush.msra.mxu0 %v914
    %v916 = vand.u32 %v56, 4294901760
    %v917 = vsub.f32 %v56, %v916
    %v918 = vand.u32 %v917, 4294901760
    %v919 = vsub.f32 %v917, %v918
    %v920 = vand.u32 %v919, 4294901760
    %921 = vmatpush.msra.mxu0 %v920
    %v922 = vand.u32 %v54, 4294901760
    %v923 = vsub.f32 %v54, %v922
    %v924 = vand.u32 %v923, 4294901760
    %v925 = vsub.f32 %v923, %v924
    %v926 = vand.u32 %v925, 4294901760
    %927 = vmatpush.msra.mxu0 %v926
    %v928 = vand.u32 %v52, 4294901760
    %v929 = vsub.f32 %v52, %v928
    %v930 = vand.u32 %v929, 4294901760
    %v931 = vsub.f32 %v929, %v930
    %v932 = vand.u32 %v931, 4294901760
    %933 = vmatpush.msra.mxu0 %v932
    %v934 = vand.u32 %v49, 4294901760
    %935 = vmatmul.f32.gmra.mxu0 %v934
    %v936 = vpop.f32.mrf.mxu0
    %v937 = vadd.f32 %v836, %v936
    %938 = vdwg.mxu0
    %v939 = vand.u32 %v82, 4294901760
    %v940 = vsub.f32 %v82, %v939
    %941 = vmatpush.msra.mxu0 %v940
    %v942 = vand.u32 %v80, 4294901760
    %v943 = vsub.f32 %v80, %v942
    %944 = vmatpush.msra.mxu0 %v943
    %v945 = vand.u32 %v78, 4294901760
    %v946 = vsub.f32 %v78, %v945
    %947 = vmatpush.msra.mxu0 %v946
    %v948 = vand.u32 %v76, 4294901760
    %v949 = vsub.f32 %v76, %v948
    %950 = vmatpush.msra.mxu0 %v949
    %v951 = vand.u32 %v74, 4294901760
    %v952 = vsub.f32 %v74, %v951
    %953 = vmatpush.msra.mxu0 %v952
    %v954 = vand.u32 %v72, 4294901760
    %v955 = vsub.f32 %v72, %v954
    %956 = vmatpush.msra.mxu0 %v955
    %v957 = vand.u32 %v70, 4294901760
    %v958 = vsub.f32 %v70, %v957
    %959 = vmatpush.msra.mxu0 %v958
    %v960 = vand.u32 %v68, 4294901760
    %v961 = vsub.f32 %v68, %v960
    %962 = vmatpush.msra.mxu0 %v961
    %v963 = vand.u32 %v66, 4294901760
    %v964 = vsub.f32 %v66, %v963
    %965 = vmatpush.msra.mxu0 %v964
    %v966 = vand.u32 %v64, 4294901760
    %v967 = vsub.f32 %v64, %v966
    %968 = vmatpush.msra.mxu0 %v967
    %v969 = vand.u32 %v62, 4294901760
    %v970 = vsub.f32 %v62, %v969
    %971 = vmatpush.msra.mxu0 %v970
    %v972 = vand.u32 %v60, 4294901760
    %v973 = vsub.f32 %v60, %v972
    %974 = vmatpush.msra.mxu0 %v973
    %v975 = vand.u32 %v58, 4294901760
    %v976 = vsub.f32 %v58, %v975
    %977 = vmatpush.msra.mxu0 %v976
    %v978 = vand.u32 %v56, 4294901760
    %v979 = vsub.f32 %v56, %v978
    %980 = vmatpush.msra.mxu0 %v979
    %v981 = vand.u32 %v54, 4294901760
    %v982 = vsub.f32 %v54, %v981
    %983 = vmatpush.msra.mxu0 %v982
    %v984 = vand.u32 %v52, 4294901760
    %v985 = vsub.f32 %v52, %v984
    %986 = vmatpush.msra.mxu0 %v985
    %v987 = vand.u32 %v49, 4294901760
    %v988 = vsub.f32 %v49, %v987
    %989 = vmatmul.f32.gmra.mxu0 %v988
    %v990 = vpop.f32.mrf.mxu0
    %v991 = vadd.f32 %v937, %v990
    %992 = vdwg.mxu0
    %v993 = vand.u32 %v82, 4294901760
    %994 = vmatpush.msra.mxu0 %v993
    %v995 = vand.u32 %v80, 4294901760
    %996 = vmatpush.msra.mxu0 %v995
    %v997 = vand.u32 %v78, 4294901760
    %998 = vmatpush.msra.mxu0 %v997
    %v999 = vand.u32 %v76, 4294901760
    %1000 = vmatpush.msra.mxu0 %v999
    %v1001 = vand.u32 %v74, 4294901760
    %1002 = vmatpush.msra.mxu0 %v1001
    %v1003 = vand.u32 %v72, 4294901760
    %1004 = vmatpush.msra.mxu0 %v1003
    %v1005 = vand.u32 %v70, 4294901760
    %1006 = vmatpush.msra.mxu0 %v1005
    %v1007 = vand.u32 %v68, 4294901760
    %1008 = vmatpush.msra.mxu0 %v1007
    %v1009 = vand.u32 %v66, 4294901760
    %1010 = vmatpush.msra.mxu0 %v1009
    %v1011 = vand.u32 %v64, 4294901760
    %1012 = vmatpush.msra.mxu0 %v1011
    %v1013 = vand.u32 %v62, 4294901760
    %1014 = vmatpush.msra.mxu0 %v1013
    %v1015 = vand.u32 %v60, 4294901760
    %1016 = vmatpush.msra.mxu0 %v1015
    %v1017 = vand.u32 %v58, 4294901760
    %1018 = vmatpush.msra.mxu0 %v1017
    %v1019 = vand.u32 %v56, 4294901760
    %1020 = vmatpush.msra.mxu0 %v1019
    %v1021 = vand.u32 %v54, 4294901760
    %1022 = vmatpush.msra.mxu0 %v1021
    %v1023 = vand.u32 %v52, 4294901760
    %1024 = vmatpush.msra.mxu0 %v1023
    %v1025 = vand.u32 %v49, 4294901760
    %v1026 = vsub.f32 %v49, %v1025
    %v1027 = vand.u32 %v1026, 4294901760
    %1028 = vmatmul.f32.gmra.mxu0 %v1027
    %v1029 = vpop.f32.mrf.mxu0
    %v1030 = vadd.f32 %v991, %v1029
    %1031 = vdwg.mxu0
    %v1032 = vand.u32 %v82, 4294901760
    %v1033 = vsub.f32 %v82, %v1032
    %v1034 = vand.u32 %v1033, 4294901760
    %1035 = vmatpush.msra.mxu0 %v1034
    %v1036 = vand.u32 %v80, 4294901760
    %v1037 = vsub.f32 %v80, %v1036
    %v1038 = vand.u32 %v1037, 4294901760
    %1039 = vmatpush.msra.mxu0 %v1038
    %v1040 = vand.u32 %v78, 4294901760
    %v1041 = vsub.f32 %v78, %v1040
    %v1042 = vand.u32 %v1041, 4294901760
    %1043 = vmatpush.msra.mxu0 %v1042
    %v1044 = vand.u32 %v76, 4294901760
    %v1045 = vsub.f32 %v76, %v1044
    %v1046 = vand.u32 %v1045, 4294901760
    %1047 = vmatpush.msra.mxu0 %v1046
    %v1048 = vand.u32 %v74, 4294901760
    %v1049 = vsub.f32 %v74, %v1048
    %v1050 = vand.u32 %v1049, 4294901760
    %1051 = vmatpush.msra.mxu0 %v1050
    %v1052 = vand.u32 %v72, 4294901760
    %v1053 = vsub.f32 %v72, %v1052
    %v1054 = vand.u32 %v1053, 4294901760
    %1055 = vmatpush.msra.mxu0 %v1054
    %v1056 = vand.u32 %v70, 4294901760
    %v1057 = vsub.f32 %v70, %v1056
    %v1058 = vand.u32 %v1057, 4294901760
    %1059 = vmatpush.msra.mxu0 %v1058
    %v1060 = vand.u32 %v68, 4294901760
    %v1061 = vsub.f32 %v68, %v1060
    %v1062 = vand.u32 %v1061, 4294901760
    %1063 = vmatpush.msra.mxu0 %v1062
    %v1064 = vand.u32 %v66, 4294901760
    %v1065 = vsub.f32 %v66, %v1064
    %v1066 = vand.u32 %v1065, 4294901760
    %1067 = vmatpush.msra.mxu0 %v1066
    %v1068 = vand.u32 %v64, 4294901760
    %v1069 = vsub.f32 %v64, %v1068
    %v1070 = vand.u32 %v1069, 4294901760
    %1071 = vmatpush.msra.mxu0 %v1070
    %v1072 = vand.u32 %v62, 4294901760
    %v1073 = vsub.f32 %v62, %v1072
    %v1074 = vand.u32 %v1073, 4294901760
    %1075 = vmatpush.msra.mxu0 %v1074
    %v1076 = vand.u32 %v60, 4294901760
    %v1077 = vsub.f32 %v60, %v1076
    %v1078 = vand.u32 %v1077, 4294901760
    %1079 = vmatpush.msra.mxu0 %v1078
    %v1080 = vand.u32 %v58, 4294901760
    %v1081 = vsub.f32 %v58, %v1080
    %v1082 = vand.u32 %v1081, 4294901760
    %1083 = vmatpush.msra.mxu0 %v1082
    %v1084 = vand.u32 %v56, 4294901760
    %v1085 = vsub.f32 %v56, %v1084
    %v1086 = vand.u32 %v1085, 4294901760
    %1087 = vmatpush.msra.mxu0 %v1086
    %v1088 = vand.u32 %v54, 4294901760
    %v1089 = vsub.f32 %v54, %v1088
    %v1090 = vand.u32 %v1089, 4294901760
    %1091 = vmatpush.msra.mxu0 %v1090
    %v1092 = vand.u32 %v52, 4294901760
    %v1093 = vsub.f32 %v52, %v1092
    %v1094 = vand.u32 %v1093, 4294901760
    %1095 = vmatpush.msra.mxu0 %v1094
    %v1096 = vand.u32 %v49, 4294901760
    %1097 = vmatmul.f32.gmra.mxu0 %v1096
    %v1098 = vpop.f32.mrf.mxu0
    %v1099 = vadd.f32 %v1030, %v1098
    %1100 = vdwg.mxu0
    %v1101 = vand.u32 %v82, 4294901760
    %1102 = vmatpush.msra.mxu0 %v1101
    %v1103 = vand.u32 %v80, 4294901760
    %1104 = vmatpush.msra.mxu0 %v1103
    %v1105 = vand.u32 %v78, 4294901760
    %1106 = vmatpush.msra.mxu0 %v1105
    %v1107 = vand.u32 %v76, 4294901760
    %1108 = vmatpush.msra.mxu0 %v1107
    %v1109 = vand.u32 %v74, 4294901760
    %1110 = vmatpush.msra.mxu0 %v1109
    %v1111 = vand.u32 %v72, 4294901760
    %1112 = vmatpush.msra.mxu0 %v1111
    %v1113 = vand.u32 %v70, 4294901760
    %1114 = vmatpush.msra.mxu0 %v1113
    %v1115 = vand.u32 %v68, 4294901760
    %1116 = vmatpush.msra.mxu0 %v1115
    %v1117 = vand.u32 %v66, 4294901760
    %1118 = vmatpush.msra.mxu0 %v1117
    %v1119 = vand.u32 %v64, 4294901760
    %1120 = vmatpush.msra.mxu0 %v1119
    %v1121 = vand.u32 %v62, 4294901760
    %1122 = vmatpush.msra.mxu0 %v1121
    %v1123 = vand.u32 %v60, 4294901760
    %1124 = vmatpush.msra.mxu0 %v1123
    %v1125 = vand.u32 %v58, 4294901760
    %1126 = vmatpush.msra.mxu0 %v1125
    %v1127 = vand.u32 %v56, 4294901760
    %1128 = vmatpush.msra.mxu0 %v1127
    %v1129 = vand.u32 %v54, 4294901760
    %1130 = vmatpush.msra.mxu0 %v1129
    %v1131 = vand.u32 %v52, 4294901760
    %1132 = vmatpush.msra.mxu0 %v1131
    %v1133 = vand.u32 %v49, 4294901760
    %1134 = vmatmul.f32.gmra.mxu0 %v1133
    %v1135 = vpop.f32.mrf.mxu0
    %v1136 = vadd.f32 %v1099, %v1135
    %1137 = vdwg.mxu0
    %v1138 = vand.u32 %v114, 4294901760
    %1139 = vmatpush.msra.mxu0 %v1138
    %v1140 = vand.u32 %v112, 4294901760
    %1141 = vmatpush.msra.mxu0 %v1140
    %v1142 = vand.u32 %v110, 4294901760
    %1143 = vmatpush.msra.mxu0 %v1142
    %v1144 = vand.u32 %v108, 4294901760
    %1145 = vmatpush.msra.mxu0 %v1144
    %v1146 = vand.u32 %v106, 4294901760
    %1147 = vmatpush.msra.mxu0 %v1146
    %v1148 = vand.u32 %v104, 4294901760
    %1149 = vmatpush.msra.mxu0 %v1148
    %v1150 = vand.u32 %v102, 4294901760
    %1151 = vmatpush.msra.mxu0 %v1150
    %v1152 = vand.u32 %v100, 4294901760
    %1153 = vmatpush.msra.mxu0 %v1152
    %v1154 = vand.u32 %v98, 4294901760
    %1155 = vmatpush.msra.mxu0 %v1154
    %v1156 = vand.u32 %v96, 4294901760
    %1157 = vmatpush.msra.mxu0 %v1156
    %v1158 = vand.u32 %v94, 4294901760
    %1159 = vmatpush.msra.mxu0 %v1158
    %v1160 = vand.u32 %v92, 4294901760
    %1161 = vmatpush.msra.mxu0 %v1160
    %v1162 = vand.u32 %v90, 4294901760
    %1163 = vmatpush.msra.mxu0 %v1162
    %v1164 = vand.u32 %v88, 4294901760
    %1165 = vmatpush.msra.mxu0 %v1164
    %v1166 = vand.u32 %v86, 4294901760
    %1167 = vmatpush.msra.mxu0 %v1166
    %v1168 = vand.u32 %v84, 4294901760
    %1169 = vmatpush.msra.mxu0 %v1168
    %v1170 = vand.u32 %v50, 4294901760
    %v1171 = vsub.f32 %v50, %v1170
    %v1172 = vand.u32 %v1171, 4294901760
    %v1173 = vsub.f32 %v1171, %v1172
    %v1174 = vand.u32 %v1173, 4294901760
    %1175 = vmatmul.f32.gmra.mxu0 %v1174
    %v1176 = vpop.f32.mrf.mxu0
    %v1177 = vadd.f32 %v1136, %v1176
    %1178 = vdwg.mxu0
    %v1179 = vand.u32 %v114, 4294901760
    %v1180 = vsub.f32 %v114, %v1179
    %v1181 = vand.u32 %v1180, 4294901760
    %v1182 = vsub.f32 %v1180, %v1181
    %v1183 = vand.u32 %v1182, 4294901760
    %1184 = vmatpush.msra.mxu0 %v1183
    %v1185 = vand.u32 %v112, 4294901760
    %v1186 = vsub.f32 %v112, %v1185
    %v1187 = vand.u32 %v1186, 4294901760
    %v1188 = vsub.f32 %v1186, %v1187
    %v1189 = vand.u32 %v1188, 4294901760
    %1190 = vmatpush.msra.mxu0 %v1189
    %v1191 = vand.u32 %v110, 4294901760
    %v1192 = vsub.f32 %v110, %v1191
    %v1193 = vand.u32 %v1192, 4294901760
    %v1194 = vsub.f32 %v1192, %v1193
    %v1195 = vand.u32 %v1194, 4294901760
    %1196 = vmatpush.msra.mxu0 %v1195
    %v1197 = vand.u32 %v108, 4294901760
    %v1198 = vsub.f32 %v108, %v1197
    %v1199 = vand.u32 %v1198, 4294901760
    %v1200 = vsub.f32 %v1198, %v1199
    %v1201 = vand.u32 %v1200, 4294901760
    %1202 = vmatpush.msra.mxu0 %v1201
    %v1203 = vand.u32 %v106, 4294901760
    %v1204 = vsub.f32 %v106, %v1203
    %v1205 = vand.u32 %v1204, 4294901760
    %v1206 = vsub.f32 %v1204, %v1205
    %v1207 = vand.u32 %v1206, 4294901760
    %1208 = vmatpush.msra.mxu0 %v1207
    %v1209 = vand.u32 %v104, 4294901760
    %v1210 = vsub.f32 %v104, %v1209
    %v1211 = vand.u32 %v1210, 4294901760
    %v1212 = vsub.f32 %v1210, %v1211
    %v1213 = vand.u32 %v1212, 4294901760
    %1214 = vmatpush.msra.mxu0 %v1213
    %v1215 = vand.u32 %v102, 4294901760
    %v1216 = vsub.f32 %v102, %v1215
    %v1217 = vand.u32 %v1216, 4294901760
    %v1218 = vsub.f32 %v1216, %v1217
    %v1219 = vand.u32 %v1218, 4294901760
    %1220 = vmatpush.msra.mxu0 %v1219
    %v1221 = vand.u32 %v100, 4294901760
    %v1222 = vsub.f32 %v100, %v1221
    %v1223 = vand.u32 %v1222, 4294901760
    %v1224 = vsub.f32 %v1222, %v1223
    %v1225 = vand.u32 %v1224, 4294901760
    %1226 = vmatpush.msra.mxu0 %v1225
    %v1227 = vand.u32 %v98, 4294901760
    %v1228 = vsub.f32 %v98, %v1227
    %v1229 = vand.u32 %v1228, 4294901760
    %v1230 = vsub.f32 %v1228, %v1229
    %v1231 = vand.u32 %v1230, 4294901760
    %1232 = vmatpush.msra.mxu0 %v1231
    %v1233 = vand.u32 %v96, 4294901760
    %v1234 = vsub.f32 %v96, %v1233
    %v1235 = vand.u32 %v1234, 4294901760
    %v1236 = vsub.f32 %v1234, %v1235
    %v1237 = vand.u32 %v1236, 4294901760
    %1238 = vmatpush.msra.mxu0 %v1237
    %v1239 = vand.u32 %v94, 4294901760
    %v1240 = vsub.f32 %v94, %v1239
    %v1241 = vand.u32 %v1240, 4294901760
    %v1242 = vsub.f32 %v1240, %v1241
    %v1243 = vand.u32 %v1242, 4294901760
    %1244 = vmatpush.msra.mxu0 %v1243
    %v1245 = vand.u32 %v92, 4294901760
    %v1246 = vsub.f32 %v92, %v1245
    %v1247 = vand.u32 %v1246, 4294901760
    %v1248 = vsub.f32 %v1246, %v1247
    %v1249 = vand.u32 %v1248, 4294901760
    %1250 = vmatpush.msra.mxu0 %v1249
    %v1251 = vand.u32 %v90, 4294901760
    %v1252 = vsub.f32 %v90, %v1251
    %v1253 = vand.u32 %v1252, 4294901760
    %v1254 = vsub.f32 %v1252, %v1253
    %v1255 = vand.u32 %v1254, 4294901760
    %1256 = vmatpush.msra.mxu0 %v1255
    %v1257 = vand.u32 %v88, 4294901760
    %v1258 = vsub.f32 %v88, %v1257
    %v1259 = vand.u32 %v1258, 4294901760
    %v1260 = vsub.f32 %v1258, %v1259
    %v1261 = vand.u32 %v1260, 4294901760
    %1262 = vmatpush.msra.mxu0 %v1261
    %v1263 = vand.u32 %v86, 4294901760
    %v1264 = vsub.f32 %v86, %v1263
    %v1265 = vand.u32 %v1264, 4294901760
    %v1266 = vsub.f32 %v1264, %v1265
    %v1267 = vand.u32 %v1266, 4294901760
    %1268 = vmatpush.msra.mxu0 %v1267
    %v1269 = vand.u32 %v84, 4294901760
    %v1270 = vsub.f32 %v84, %v1269
    %v1271 = vand.u32 %v1270, 4294901760
    %v1272 = vsub.f32 %v1270, %v1271
    %v1273 = vand.u32 %v1272, 4294901760
    %1274 = vmatpush.msra.mxu0 %v1273
    %v1275 = vand.u32 %v50, 4294901760
    %1276 = vmatmul.f32.gmra.mxu0 %v1275
    %v1277 = vpop.f32.mrf.mxu0
    %v1278 = vadd.f32 %v1177, %v1277
    %1279 = vdwg.mxu0
    %v1280 = vand.u32 %v114, 4294901760
    %v1281 = vsub.f32 %v114, %v1280
    %1282 = vmatpush.msra.mxu0 %v1281
    %v1283 = vand.u32 %v112, 4294901760
    %v1284 = vsub.f32 %v112, %v1283
    %1285 = vmatpush.msra.mxu0 %v1284
    %v1286 = vand.u32 %v110, 4294901760
    %v1287 = vsub.f32 %v110, %v1286
    %1288 = vmatpush.msra.mxu0 %v1287
    %v1289 = vand.u32 %v108, 4294901760
    %v1290 = vsub.f32 %v108, %v1289
    %1291 = vmatpush.msra.mxu0 %v1290
    %v1292 = vand.u32 %v106, 4294901760
    %v1293 = vsub.f32 %v106, %v1292
    %1294 = vmatpush.msra.mxu0 %v1293
    %v1295 = vand.u32 %v104, 4294901760
    %v1296 = vsub.f32 %v104, %v1295
    %1297 = vmatpush.msra.mxu0 %v1296
    %v1298 = vand.u32 %v102, 4294901760
    %v1299 = vsub.f32 %v102, %v1298
    %1300 = vmatpush.msra.mxu0 %v1299
    %v1301 = vand.u32 %v100, 4294901760
    %v1302 = vsub.f32 %v100, %v1301
    %1303 = vmatpush.msra.mxu0 %v1302
    %v1304 = vand.u32 %v98, 4294901760
    %v1305 = vsub.f32 %v98, %v1304
    %1306 = vmatpush.msra.mxu0 %v1305
    %v1307 = vand.u32 %v96, 4294901760
    %v1308 = vsub.f32 %v96, %v1307
    %1309 = vmatpush.msra.mxu0 %v1308
    %v1310 = vand.u32 %v94, 4294901760
    %v1311 = vsub.f32 %v94, %v1310
    %1312 = vmatpush.msra.mxu0 %v1311
    %v1313 = vand.u32 %v92, 4294901760
    %v1314 = vsub.f32 %v92, %v1313
    %1315 = vmatpush.msra.mxu0 %v1314
    %v1316 = vand.u32 %v90, 4294901760
    %v1317 = vsub.f32 %v90, %v1316
    %1318 = vmatpush.msra.mxu0 %v1317
    %v1319 = vand.u32 %v88, 4294901760
    %v1320 = vsub.f32 %v88, %v1319
    %1321 = vmatpush.msra.mxu0 %v1320
    %v1322 = vand.u32 %v86, 4294901760
    %v1323 = vsub.f32 %v86, %v1322
    %1324 = vmatpush.msra.mxu0 %v1323
    %v1325 = vand.u32 %v84, 4294901760
    %v1326 = vsub.f32 %v84, %v1325
    %1327 = vmatpush.msra.mxu0 %v1326
    %v1328 = vand.u32 %v50, 4294901760
    %v1329 = vsub.f32 %v50, %v1328
    %1330 = vmatmul.f32.gmra.mxu0 %v1329
    %v1331 = vpop.f32.mrf.mxu0
    %v1332 = vadd.f32 %v1278, %v1331
    %1333 = vdwg.mxu0
    %v1334 = vand.u32 %v114, 4294901760
    %1335 = vmatpush.msra.mxu0 %v1334
    %v1336 = vand.u32 %v112, 4294901760
    %1337 = vmatpush.msra.mxu0 %v1336
    %v1338 = vand.u32 %v110, 4294901760
    %1339 = vmatpush.msra.mxu0 %v1338
    %v1340 = vand.u32 %v108, 4294901760
    %1341 = vmatpush.msra.mxu0 %v1340
    %v1342 = vand.u32 %v106, 4294901760
    %1343 = vmatpush.msra.mxu0 %v1342
    %v1344 = vand.u32 %v104, 4294901760
    %1345 = vmatpush.msra.mxu0 %v1344
    %v1346 = vand.u32 %v102, 4294901760
    %1347 = vmatpush.msra.mxu0 %v1346
    %v1348 = vand.u32 %v100, 4294901760
    %1349 = vmatpush.msra.mxu0 %v1348
    %v1350 = vand.u32 %v98, 4294901760
    %1351 = vmatpush.msra.mxu0 %v1350
    %v1352 = vand.u32 %v96, 4294901760
    %1353 = vmatpush.msra.mxu0 %v1352
    %v1354 = vand.u32 %v94, 4294901760
    %1355 = vmatpush.msra.mxu0 %v1354
    %v1356 = vand.u32 %v92, 4294901760
    %1357 = vmatpush.msra.mxu0 %v1356
    %v1358 = vand.u32 %v90, 4294901760
    %1359 = vmatpush.msra.mxu0 %v1358
    %v1360 = vand.u32 %v88, 4294901760
    %1361 = vmatpush.msra.mxu0 %v1360
    %v1362 = vand.u32 %v86, 4294901760
    %1363 = vmatpush.msra.mxu0 %v1362
    %v1364 = vand.u32 %v84, 4294901760
    %1365 = vmatpush.msra.mxu0 %v1364
    %v1366 = vand.u32 %v50, 4294901760
    %v1367 = vsub.f32 %v50, %v1366
    %v1368 = vand.u32 %v1367, 4294901760
    %1369 = vmatmul.f32.gmra.mxu0 %v1368
    %v1370 = vpop.f32.mrf.mxu0
    %v1371 = vadd.f32 %v1332, %v1370
    %1372 = vdwg.mxu0
    %v1373 = vand.u32 %v114, 4294901760
    %v1374 = vsub.f32 %v114, %v1373
    %v1375 = vand.u32 %v1374, 4294901760
    %1376 = vmatpush.msra.mxu0 %v1375
    %v1377 = vand.u32 %v112, 4294901760
    %v1378 = vsub.f32 %v112, %v1377
    %v1379 = vand.u32 %v1378, 4294901760
    %1380 = vmatpush.msra.mxu0 %v1379
    %v1381 = vand.u32 %v110, 4294901760
    %v1382 = vsub.f32 %v110, %v1381
    %v1383 = vand.u32 %v1382, 4294901760
    %1384 = vmatpush.msra.mxu0 %v1383
    %v1385 = vand.u32 %v108, 4294901760
    %v1386 = vsub.f32 %v108, %v1385
    %v1387 = vand.u32 %v1386, 4294901760
    %1388 = vmatpush.msra.mxu0 %v1387
    %v1389 = vand.u32 %v106, 4294901760
    %v1390 = vsub.f32 %v106, %v1389
    %v1391 = vand.u32 %v1390, 4294901760
    %1392 = vmatpush.msra.mxu0 %v1391
    %v1393 = vand.u32 %v104, 4294901760
    %v1394 = vsub.f32 %v104, %v1393
    %v1395 = vand.u32 %v1394, 4294901760
    %1396 = vmatpush.msra.mxu0 %v1395
    %v1397 = vand.u32 %v102, 4294901760
    %v1398 = vsub.f32 %v102, %v1397
    %v1399 = vand.u32 %v1398, 4294901760
    %1400 = vmatpush.msra.mxu0 %v1399
    %v1401 = vand.u32 %v100, 4294901760
    %v1402 = vsub.f32 %v100, %v1401
    %v1403 = vand.u32 %v1402, 4294901760
    %1404 = vmatpush.msra.mxu0 %v1403
    %v1405 = vand.u32 %v98, 4294901760
    %v1406 = vsub.f32 %v98, %v1405
    %v1407 = vand.u32 %v1406, 4294901760
    %1408 = vmatpush.msra.mxu0 %v1407
    %v1409 = vand.u32 %v96, 4294901760
    %v1410 = vsub.f32 %v96, %v1409
    %v1411 = vand.u32 %v1410, 4294901760
    %1412 = vmatpush.msra.mxu0 %v1411
    %v1413 = vand.u32 %v94, 4294901760
    %v1414 = vsub.f32 %v94, %v1413
    %v1415 = vand.u32 %v1414, 4294901760
    %1416 = vmatpush.msra.mxu0 %v1415
    %v1417 = vand.u32 %v92, 4294901760
    %v1418 = vsub.f32 %v92, %v1417
    %v1419 = vand.u32 %v1418, 4294901760
    %1420 = vmatpush.msra.mxu0 %v1419
    %v1421 = vand.u32 %v90, 4294901760
    %v1422 = vsub.f32 %v90, %v1421
    %v1423 = vand.u32 %v1422, 4294901760
    %1424 = vmatpush.msra.mxu0 %v1423
    %v1425 = vand.u32 %v88, 4294901760
    %v1426 = vsub.f32 %v88, %v1425
    %v1427 = vand.u32 %v1426, 4294901760
    %1428 = vmatpush.msra.mxu0 %v1427
    %v1429 = vand.u32 %v86, 4294901760
    %v1430 = vsub.f32 %v86, %v1429
    %v1431 = vand.u32 %v1430, 4294901760
    %1432 = vmatpush.msra.mxu0 %v1431
    %v1433 = vand.u32 %v84, 4294901760
    %v1434 = vsub.f32 %v84, %v1433
    %v1435 = vand.u32 %v1434, 4294901760
    %1436 = vmatpush.msra.mxu0 %v1435
    %v1437 = vand.u32 %v50, 4294901760
    %1438 = vmatmul.f32.gmra.mxu0 %v1437
    %v1439 = vpop.f32.mrf.mxu0
    %v1440 = vadd.f32 %v1371, %v1439
    %1441 = vdwg.mxu0
    %v1442 = vand.u32 %v114, 4294901760
    %1443 = vmatpush.msra.mxu0 %v1442
    %v1444 = vand.u32 %v112, 4294901760
    %1445 = vmatpush.msra.mxu0 %v1444
    %v1446 = vand.u32 %v110, 4294901760
    %1447 = vmatpush.msra.mxu0 %v1446
    %v1448 = vand.u32 %v108, 4294901760
    %1449 = vmatpush.msra.mxu0 %v1448
    %v1450 = vand.u32 %v106, 4294901760
    %1451 = vmatpush.msra.mxu0 %v1450
    %v1452 = vand.u32 %v104, 4294901760
    %1453 = vmatpush.msra.mxu0 %v1452
    %v1454 = vand.u32 %v102, 4294901760
    %1455 = vmatpush.msra.mxu0 %v1454
    %v1456 = vand.u32 %v100, 4294901760
    %1457 = vmatpush.msra.mxu0 %v1456
    %v1458 = vand.u32 %v98, 4294901760
    %1459 = vmatpush.msra.mxu0 %v1458
    %v1460 = vand.u32 %v96, 4294901760
    %1461 = vmatpush.msra.mxu0 %v1460
    %v1462 = vand.u32 %v94, 4294901760
    %1463 = vmatpush.msra.mxu0 %v1462
    %v1464 = vand.u32 %v92, 4294901760
    %1465 = vmatpush.msra.mxu0 %v1464
    %v1466 = vand.u32 %v90, 4294901760
    %1467 = vmatpush.msra.mxu0 %v1466
    %v1468 = vand.u32 %v88, 4294901760
    %1469 = vmatpush.msra.mxu0 %v1468
    %v1470 = vand.u32 %v86, 4294901760
    %1471 = vmatpush.msra.mxu0 %v1470
    %v1472 = vand.u32 %v84, 4294901760
    %1473 = vmatpush.msra.mxu0 %v1472
    %v1474 = vand.u32 %v50, 4294901760
    %1475 = vmatmul.f32.gmra.mxu0 %v1474
    %v1476 = vpop.f32.mrf.mxu0
    %v1477 = vadd.f32 %v1440, %v1476
    %1478 = vdwg.mxu0
    %v1479 = vmul.f32 %v47, %v47
    %v1480 = vmul.f32 %v48, %v48
    %v1481 = vand.u32 %v81, 4294901760
    %1482 = vmatpush.msra.mxu0 %v1481
    %v1483 = vand.u32 %v79, 4294901760
    %1484 = vmatpush.msra.mxu0 %v1483
    %v1485 = vand.u32 %v77, 4294901760
    %1486 = vmatpush.msra.mxu0 %v1485
    %v1487 = vand.u32 %v75, 4294901760
    %1488 = vmatpush.msra.mxu0 %v1487
    %v1489 = vand.u32 %v73, 4294901760
    %1490 = vmatpush.msra.mxu0 %v1489
    %v1491 = vand.u32 %v71, 4294901760
    %1492 = vmatpush.msra.mxu0 %v1491
    %v1493 = vand.u32 %v69, 4294901760
    %1494 = vmatpush.msra.mxu0 %v1493
    %v1495 = vand.u32 %v67, 4294901760
    %1496 = vmatpush.msra.mxu0 %v1495
    %v1497 = vand.u32 %v65, 4294901760
    %1498 = vmatpush.msra.mxu0 %v1497
    %v1499 = vand.u32 %v63, 4294901760
    %1500 = vmatpush.msra.mxu0 %v1499
    %v1501 = vand.u32 %v61, 4294901760
    %1502 = vmatpush.msra.mxu0 %v1501
    %v1503 = vand.u32 %v59, 4294901760
    %1504 = vmatpush.msra.mxu0 %v1503
    %v1505 = vand.u32 %v57, 4294901760
    %1506 = vmatpush.msra.mxu0 %v1505
    %v1507 = vand.u32 %v55, 4294901760
    %1508 = vmatpush.msra.mxu0 %v1507
    %v1509 = vand.u32 %v53, 4294901760
    %1510 = vmatpush.msra.mxu0 %v1509
    %v1511 = vand.u32 %v51, 4294901760
    %1512 = vmatpush.msra.mxu0 %v1511
    %v1513 = vand.u32 %v1479, 4294901760
    %v1514 = vsub.f32 %v1479, %v1513
    %v1515 = vand.u32 %v1514, 4294901760
    %v1516 = vsub.f32 %v1514, %v1515
    %v1517 = vand.u32 %v1516, 4294901760
    %1518 = vmatmul.f32.gmra.mxu0 %v1517
    %v1519 = vpop.f32.mrf.mxu0
    %v1520 = vadd.f32 0.0, %v1519
    %1521 = vdwg.mxu0
    %v1522 = vand.u32 %v81, 4294901760
    %v1523 = vsub.f32 %v81, %v1522
    %v1524 = vand.u32 %v1523, 4294901760
    %v1525 = vsub.f32 %v1523, %v1524
    %v1526 = vand.u32 %v1525, 4294901760
    %1527 = vmatpush.msra.mxu0 %v1526
    %v1528 = vand.u32 %v79, 4294901760
    %v1529 = vsub.f32 %v79, %v1528
    %v1530 = vand.u32 %v1529, 4294901760
    %v1531 = vsub.f32 %v1529, %v1530
    %v1532 = vand.u32 %v1531, 4294901760
    %1533 = vmatpush.msra.mxu0 %v1532
    %v1534 = vand.u32 %v77, 4294901760
    %v1535 = vsub.f32 %v77, %v1534
    %v1536 = vand.u32 %v1535, 4294901760
    %v1537 = vsub.f32 %v1535, %v1536
    %v1538 = vand.u32 %v1537, 4294901760
    %1539 = vmatpush.msra.mxu0 %v1538
    %v1540 = vand.u32 %v75, 4294901760
    %v1541 = vsub.f32 %v75, %v1540
    %v1542 = vand.u32 %v1541, 4294901760
    %v1543 = vsub.f32 %v1541, %v1542
    %v1544 = vand.u32 %v1543, 4294901760
    %1545 = vmatpush.msra.mxu0 %v1544
    %v1546 = vand.u32 %v73, 4294901760
    %v1547 = vsub.f32 %v73, %v1546
    %v1548 = vand.u32 %v1547, 4294901760
    %v1549 = vsub.f32 %v1547, %v1548
    %v1550 = vand.u32 %v1549, 4294901760
    %1551 = vmatpush.msra.mxu0 %v1550
    %v1552 = vand.u32 %v71, 4294901760
    %v1553 = vsub.f32 %v71, %v1552
    %v1554 = vand.u32 %v1553, 4294901760
    %v1555 = vsub.f32 %v1553, %v1554
    %v1556 = vand.u32 %v1555, 4294901760
    %1557 = vmatpush.msra.mxu0 %v1556
    %v1558 = vand.u32 %v69, 4294901760
    %v1559 = vsub.f32 %v69, %v1558
    %v1560 = vand.u32 %v1559, 4294901760
    %v1561 = vsub.f32 %v1559, %v1560
    %v1562 = vand.u32 %v1561, 4294901760
    %1563 = vmatpush.msra.mxu0 %v1562
    %v1564 = vand.u32 %v67, 4294901760
    %v1565 = vsub.f32 %v67, %v1564
    %v1566 = vand.u32 %v1565, 4294901760
    %v1567 = vsub.f32 %v1565, %v1566
    %v1568 = vand.u32 %v1567, 4294901760
    %1569 = vmatpush.msra.mxu0 %v1568
    %v1570 = vand.u32 %v65, 4294901760
    %v1571 = vsub.f32 %v65, %v1570
    %v1572 = vand.u32 %v1571, 4294901760
    %v1573 = vsub.f32 %v1571, %v1572
    %v1574 = vand.u32 %v1573, 4294901760
    %1575 = vmatpush.msra.mxu0 %v1574
    %v1576 = vand.u32 %v63, 4294901760
    %v1577 = vsub.f32 %v63, %v1576
    %v1578 = vand.u32 %v1577, 4294901760
    %v1579 = vsub.f32 %v1577, %v1578
    %v1580 = vand.u32 %v1579, 4294901760
    %1581 = vmatpush.msra.mxu0 %v1580
    %v1582 = vand.u32 %v61, 4294901760
    %v1583 = vsub.f32 %v61, %v1582
    %v1584 = vand.u32 %v1583, 4294901760
    %v1585 = vsub.f32 %v1583, %v1584
    %v1586 = vand.u32 %v1585, 4294901760
    %1587 = vmatpush.msra.mxu0 %v1586
    %v1588 = vand.u32 %v59, 4294901760
    %v1589 = vsub.f32 %v59, %v1588
    %v1590 = vand.u32 %v1589, 4294901760
    %v1591 = vsub.f32 %v1589, %v1590
    %v1592 = vand.u32 %v1591, 4294901760
    %1593 = vmatpush.msra.mxu0 %v1592
    %v1594 = vand.u32 %v57, 4294901760
    %v1595 = vsub.f32 %v57, %v1594
    %v1596 = vand.u32 %v1595, 4294901760
    %v1597 = vsub.f32 %v1595, %v1596
    %v1598 = vand.u32 %v1597, 4294901760
    %1599 = vmatpush.msra.mxu0 %v1598
    %v1600 = vand.u32 %v55, 4294901760
    %v1601 = vsub.f32 %v55, %v1600
    %v1602 = vand.u32 %v1601, 4294901760
    %v1603 = vsub.f32 %v1601, %v1602
    %v1604 = vand.u32 %v1603, 4294901760
    %1605 = vmatpush.msra.mxu0 %v1604
    %v1606 = vand.u32 %v53, 4294901760
    %v1607 = vsub.f32 %v53, %v1606
    %v1608 = vand.u32 %v1607, 4294901760
    %v1609 = vsub.f32 %v1607, %v1608
    %v1610 = vand.u32 %v1609, 4294901760
    %1611 = vmatpush.msra.mxu0 %v1610
    %v1612 = vand.u32 %v51, 4294901760
    %v1613 = vsub.f32 %v51, %v1612
    %v1614 = vand.u32 %v1613, 4294901760
    %v1615 = vsub.f32 %v1613, %v1614
    %v1616 = vand.u32 %v1615, 4294901760
    %1617 = vmatpush.msra.mxu0 %v1616
    %v1618 = vand.u32 %v1479, 4294901760
    %1619 = vmatmul.f32.gmra.mxu0 %v1618
    %v1620 = vpop.f32.mrf.mxu0
    %v1621 = vadd.f32 %v1520, %v1620
    %1622 = vdwg.mxu0
    %v1623 = vand.u32 %v81, 4294901760
    %v1624 = vsub.f32 %v81, %v1623
    %1625 = vmatpush.msra.mxu0 %v1624
    %v1626 = vand.u32 %v79, 4294901760
    %v1627 = vsub.f32 %v79, %v1626
    %1628 = vmatpush.msra.mxu0 %v1627
    %v1629 = vand.u32 %v77, 4294901760
    %v1630 = vsub.f32 %v77, %v1629
    %1631 = vmatpush.msra.mxu0 %v1630
    %v1632 = vand.u32 %v75, 4294901760
    %v1633 = vsub.f32 %v75, %v1632
    %1634 = vmatpush.msra.mxu0 %v1633
    %v1635 = vand.u32 %v73, 4294901760
    %v1636 = vsub.f32 %v73, %v1635
    %1637 = vmatpush.msra.mxu0 %v1636
    %v1638 = vand.u32 %v71, 4294901760
    %v1639 = vsub.f32 %v71, %v1638
    %1640 = vmatpush.msra.mxu0 %v1639
    %v1641 = vand.u32 %v69, 4294901760
    %v1642 = vsub.f32 %v69, %v1641
    %1643 = vmatpush.msra.mxu0 %v1642
    %v1644 = vand.u32 %v67, 4294901760
    %v1645 = vsub.f32 %v67, %v1644
    %1646 = vmatpush.msra.mxu0 %v1645
    %v1647 = vand.u32 %v65, 4294901760
    %v1648 = vsub.f32 %v65, %v1647
    %1649 = vmatpush.msra.mxu0 %v1648
    %v1650 = vand.u32 %v63, 4294901760
    %v1651 = vsub.f32 %v63, %v1650
    %1652 = vmatpush.msra.mxu0 %v1651
    %v1653 = vand.u32 %v61, 4294901760
    %v1654 = vsub.f32 %v61, %v1653
    %1655 = vmatpush.msra.mxu0 %v1654
    %v1656 = vand.u32 %v59, 4294901760
    %v1657 = vsub.f32 %v59, %v1656
    %1658 = vmatpush.msra.mxu0 %v1657
    %v1659 = vand.u32 %v57, 4294901760
    %v1660 = vsub.f32 %v57, %v1659
    %1661 = vmatpush.msra.mxu0 %v1660
    %v1662 = vand.u32 %v55, 4294901760
    %v1663 = vsub.f32 %v55, %v1662
    %1664 = vmatpush.msra.mxu0 %v1663
    %v1665 = vand.u32 %v53, 4294901760
    %v1666 = vsub.f32 %v53, %v1665
    %1667 = vmatpush.msra.mxu0 %v1666
    %v1668 = vand.u32 %v51, 4294901760
    %v1669 = vsub.f32 %v51, %v1668
    %1670 = vmatpush.msra.mxu0 %v1669
    %v1671 = vand.u32 %v1479, 4294901760
    %v1672 = vsub.f32 %v1479, %v1671
    %1673 = vmatmul.f32.gmra.mxu0 %v1672
    %v1674 = vpop.f32.mrf.mxu0
    %v1675 = vadd.f32 %v1621, %v1674
    %1676 = vdwg.mxu0
    %v1677 = vand.u32 %v81, 4294901760
    %1678 = vmatpush.msra.mxu0 %v1677
    %v1679 = vand.u32 %v79, 4294901760
    %1680 = vmatpush.msra.mxu0 %v1679
    %v1681 = vand.u32 %v77, 4294901760
    %1682 = vmatpush.msra.mxu0 %v1681
    %v1683 = vand.u32 %v75, 4294901760
    %1684 = vmatpush.msra.mxu0 %v1683
    %v1685 = vand.u32 %v73, 4294901760
    %1686 = vmatpush.msra.mxu0 %v1685
    %v1687 = vand.u32 %v71, 4294901760
    %1688 = vmatpush.msra.mxu0 %v1687
    %v1689 = vand.u32 %v69, 4294901760
    %1690 = vmatpush.msra.mxu0 %v1689
    %v1691 = vand.u32 %v67, 4294901760
    %1692 = vmatpush.msra.mxu0 %v1691
    %v1693 = vand.u32 %v65, 4294901760
    %1694 = vmatpush.msra.mxu0 %v1693
    %v1695 = vand.u32 %v63, 4294901760
    %1696 = vmatpush.msra.mxu0 %v1695
    %v1697 = vand.u32 %v61, 4294901760
    %1698 = vmatpush.msra.mxu0 %v1697
    %v1699 = vand.u32 %v59, 4294901760
    %1700 = vmatpush.msra.mxu0 %v1699
    %v1701 = vand.u32 %v57, 4294901760
    %1702 = vmatpush.msra.mxu0 %v1701
    %v1703 = vand.u32 %v55, 4294901760
    %1704 = vmatpush.msra.mxu0 %v1703
    %v1705 = vand.u32 %v53, 4294901760
    %1706 = vmatpush.msra.mxu0 %v1705
    %v1707 = vand.u32 %v51, 4294901760
    %1708 = vmatpush.msra.mxu0 %v1707
    %v1709 = vand.u32 %v1479, 4294901760
    %v1710 = vsub.f32 %v1479, %v1709
    %v1711 = vand.u32 %v1710, 4294901760
    %1712 = vmatmul.f32.gmra.mxu0 %v1711
    %v1713 = vpop.f32.mrf.mxu0
    %v1714 = vadd.f32 %v1675, %v1713
    %1715 = vdwg.mxu0
    %v1716 = vand.u32 %v81, 4294901760
    %v1717 = vsub.f32 %v81, %v1716
    %v1718 = vand.u32 %v1717, 4294901760
    %1719 = vmatpush.msra.mxu0 %v1718
    %v1720 = vand.u32 %v79, 4294901760
    %v1721 = vsub.f32 %v79, %v1720
    %v1722 = vand.u32 %v1721, 4294901760
    %1723 = vmatpush.msra.mxu0 %v1722
    %v1724 = vand.u32 %v77, 4294901760
    %v1725 = vsub.f32 %v77, %v1724
    %v1726 = vand.u32 %v1725, 4294901760
    %1727 = vmatpush.msra.mxu0 %v1726
    %v1728 = vand.u32 %v75, 4294901760
    %v1729 = vsub.f32 %v75, %v1728
    %v1730 = vand.u32 %v1729, 4294901760
    %1731 = vmatpush.msra.mxu0 %v1730
    %v1732 = vand.u32 %v73, 4294901760
    %v1733 = vsub.f32 %v73, %v1732
    %v1734 = vand.u32 %v1733, 4294901760
    %1735 = vmatpush.msra.mxu0 %v1734
    %v1736 = vand.u32 %v71, 4294901760
    %v1737 = vsub.f32 %v71, %v1736
    %v1738 = vand.u32 %v1737, 4294901760
    %1739 = vmatpush.msra.mxu0 %v1738
    %v1740 = vand.u32 %v69, 4294901760
    %v1741 = vsub.f32 %v69, %v1740
    %v1742 = vand.u32 %v1741, 4294901760
    %1743 = vmatpush.msra.mxu0 %v1742
    %v1744 = vand.u32 %v67, 4294901760
    %v1745 = vsub.f32 %v67, %v1744
    %v1746 = vand.u32 %v1745, 4294901760
    %1747 = vmatpush.msra.mxu0 %v1746
    %v1748 = vand.u32 %v65, 4294901760
    %v1749 = vsub.f32 %v65, %v1748
    %v1750 = vand.u32 %v1749, 4294901760
    %1751 = vmatpush.msra.mxu0 %v1750
    %v1752 = vand.u32 %v63, 4294901760
    %v1753 = vsub.f32 %v63, %v1752
    %v1754 = vand.u32 %v1753, 4294901760
    %1755 = vmatpush.msra.mxu0 %v1754
    %v1756 = vand.u32 %v61, 4294901760
    %v1757 = vsub.f32 %v61, %v1756
    %v1758 = vand.u32 %v1757, 4294901760
    %1759 = vmatpush.msra.mxu0 %v1758
    %v1760 = vand.u32 %v59, 4294901760
    %v1761 = vsub.f32 %v59, %v1760
    %v1762 = vand.u32 %v1761, 4294901760
    %1763 = vmatpush.msra.mxu0 %v1762
    %v1764 = vand.u32 %v57, 4294901760
    %v1765 = vsub.f32 %v57, %v1764
    %v1766 = vand.u32 %v1765, 4294901760
    %1767 = vmatpush.msra.mxu0 %v1766
    %v1768 = vand.u32 %v55, 4294901760
    %v1769 = vsub.f32 %v55, %v1768
    %v1770 = vand.u32 %v1769, 4294901760
    %1771 = vmatpush.msra.mxu0 %v1770
    %v1772 = vand.u32 %v53, 4294901760
    %v1773 = vsub.f32 %v53, %v1772
    %v1774 = vand.u32 %v1773, 4294901760
    %1775 = vmatpush.msra.mxu0 %v1774
    %v1776 = vand.u32 %v51, 4294901760
    %v1777 = vsub.f32 %v51, %v1776
    %v1778 = vand.u32 %v1777, 4294901760
    %1779 = vmatpush.msra.mxu0 %v1778
    %v1780 = vand.u32 %v1479, 4294901760
    %1781 = vmatmul.f32.gmra.mxu0 %v1780
    %v1782 = vpop.f32.mrf.mxu0
    %v1783 = vadd.f32 %v1714, %v1782
    %1784 = vdwg.mxu0
    %v1785 = vand.u32 %v81, 4294901760
    %1786 = vmatpush.msra.mxu0 %v1785
    %v1787 = vand.u32 %v79, 4294901760
    %1788 = vmatpush.msra.mxu0 %v1787
    %v1789 = vand.u32 %v77, 4294901760
    %1790 = vmatpush.msra.mxu0 %v1789
    %v1791 = vand.u32 %v75, 4294901760
    %1792 = vmatpush.msra.mxu0 %v1791
    %v1793 = vand.u32 %v73, 4294901760
    %1794 = vmatpush.msra.mxu0 %v1793
    %v1795 = vand.u32 %v71, 4294901760
    %1796 = vmatpush.msra.mxu0 %v1795
    %v1797 = vand.u32 %v69, 4294901760
    %1798 = vmatpush.msra.mxu0 %v1797
    %v1799 = vand.u32 %v67, 4294901760
    %1800 = vmatpush.msra.mxu0 %v1799
    %v1801 = vand.u32 %v65, 4294901760
    %1802 = vmatpush.msra.mxu0 %v1801
    %v1803 = vand.u32 %v63, 4294901760
    %1804 = vmatpush.msra.mxu0 %v1803
    %v1805 = vand.u32 %v61, 4294901760
    %1806 = vmatpush.msra.mxu0 %v1805
    %v1807 = vand.u32 %v59, 4294901760
    %1808 = vmatpush.msra.mxu0 %v1807
    %v1809 = vand.u32 %v57, 4294901760
    %1810 = vmatpush.msra.mxu0 %v1809
    %v1811 = vand.u32 %v55, 4294901760
    %1812 = vmatpush.msra.mxu0 %v1811
    %v1813 = vand.u32 %v53, 4294901760
    %1814 = vmatpush.msra.mxu0 %v1813
    %v1815 = vand.u32 %v51, 4294901760
    %1816 = vmatpush.msra.mxu0 %v1815
    %v1817 = vand.u32 %v1479, 4294901760
    %1818 = vmatmul.f32.gmra.mxu0 %v1817
    %v1819 = vpop.f32.mrf.mxu0
    %v1820 = vadd.f32 %v1783, %v1819
    %1821 = vdwg.mxu0
    %v1822 = vand.u32 %v113, 4294901760
    %1823 = vmatpush.msra.mxu0 %v1822
    %v1824 = vand.u32 %v111, 4294901760
    %1825 = vmatpush.msra.mxu0 %v1824
    %v1826 = vand.u32 %v109, 4294901760
    %1827 = vmatpush.msra.mxu0 %v1826
    %v1828 = vand.u32 %v107, 4294901760
    %1829 = vmatpush.msra.mxu0 %v1828
    %v1830 = vand.u32 %v105, 4294901760
    %1831 = vmatpush.msra.mxu0 %v1830
    %v1832 = vand.u32 %v103, 4294901760
    %1833 = vmatpush.msra.mxu0 %v1832
    %v1834 = vand.u32 %v101, 4294901760
    %1835 = vmatpush.msra.mxu0 %v1834
    %v1836 = vand.u32 %v99, 4294901760
    %1837 = vmatpush.msra.mxu0 %v1836
    %v1838 = vand.u32 %v97, 4294901760
    %1839 = vmatpush.msra.mxu0 %v1838
    %v1840 = vand.u32 %v95, 4294901760
    %1841 = vmatpush.msra.mxu0 %v1840
    %v1842 = vand.u32 %v93, 4294901760
    %1843 = vmatpush.msra.mxu0 %v1842
    %v1844 = vand.u32 %v91, 4294901760
    %1845 = vmatpush.msra.mxu0 %v1844
    %v1846 = vand.u32 %v89, 4294901760
    %1847 = vmatpush.msra.mxu0 %v1846
    %v1848 = vand.u32 %v87, 4294901760
    %1849 = vmatpush.msra.mxu0 %v1848
    %v1850 = vand.u32 %v85, 4294901760
    %1851 = vmatpush.msra.mxu0 %v1850
    %v1852 = vand.u32 %v83, 4294901760
    %1853 = vmatpush.msra.mxu0 %v1852
    %v1854 = vand.u32 %v1480, 4294901760
    %v1855 = vsub.f32 %v1480, %v1854
    %v1856 = vand.u32 %v1855, 4294901760
    %v1857 = vsub.f32 %v1855, %v1856
    %v1858 = vand.u32 %v1857, 4294901760
    %1859 = vmatmul.f32.gmra.mxu0 %v1858
    %v1860 = vpop.f32.mrf.mxu0
    %v1861 = vadd.f32 %v1820, %v1860
    %1862 = vdwg.mxu0
    %v1863 = vand.u32 %v113, 4294901760
    %v1864 = vsub.f32 %v113, %v1863
    %v1865 = vand.u32 %v1864, 4294901760
    %v1866 = vsub.f32 %v1864, %v1865
    %v1867 = vand.u32 %v1866, 4294901760
    %1868 = vmatpush.msra.mxu0 %v1867
    %v1869 = vand.u32 %v111, 4294901760
    %v1870 = vsub.f32 %v111, %v1869
    %v1871 = vand.u32 %v1870, 4294901760
    %v1872 = vsub.f32 %v1870, %v1871
    %v1873 = vand.u32 %v1872, 4294901760
    %1874 = vmatpush.msra.mxu0 %v1873
    %v1875 = vand.u32 %v109, 4294901760
    %v1876 = vsub.f32 %v109, %v1875
    %v1877 = vand.u32 %v1876, 4294901760
    %v1878 = vsub.f32 %v1876, %v1877
    %v1879 = vand.u32 %v1878, 4294901760
    %1880 = vmatpush.msra.mxu0 %v1879
    %v1881 = vand.u32 %v107, 4294901760
    %v1882 = vsub.f32 %v107, %v1881
    %v1883 = vand.u32 %v1882, 4294901760
    %v1884 = vsub.f32 %v1882, %v1883
    %v1885 = vand.u32 %v1884, 4294901760
    %1886 = vmatpush.msra.mxu0 %v1885
    %v1887 = vand.u32 %v105, 4294901760
    %v1888 = vsub.f32 %v105, %v1887
    %v1889 = vand.u32 %v1888, 4294901760
    %v1890 = vsub.f32 %v1888, %v1889
    %v1891 = vand.u32 %v1890, 4294901760
    %1892 = vmatpush.msra.mxu0 %v1891
    %v1893 = vand.u32 %v103, 4294901760
    %v1894 = vsub.f32 %v103, %v1893
    %v1895 = vand.u32 %v1894, 4294901760
    %v1896 = vsub.f32 %v1894, %v1895
    %v1897 = vand.u32 %v1896, 4294901760
    %1898 = vmatpush.msra.mxu0 %v1897
    %v1899 = vand.u32 %v101, 4294901760
    %v1900 = vsub.f32 %v101, %v1899
    %v1901 = vand.u32 %v1900, 4294901760
    %v1902 = vsub.f32 %v1900, %v1901
    %v1903 = vand.u32 %v1902, 4294901760
    %1904 = vmatpush.msra.mxu0 %v1903
    %v1905 = vand.u32 %v99, 4294901760
    %v1906 = vsub.f32 %v99, %v1905
    %v1907 = vand.u32 %v1906, 4294901760
    %v1908 = vsub.f32 %v1906, %v1907
    %v1909 = vand.u32 %v1908, 4294901760
    %1910 = vmatpush.msra.mxu0 %v1909
    %v1911 = vand.u32 %v97, 4294901760
    %v1912 = vsub.f32 %v97, %v1911
    %v1913 = vand.u32 %v1912, 4294901760
    %v1914 = vsub.f32 %v1912, %v1913
    %v1915 = vand.u32 %v1914, 4294901760
    %1916 = vmatpush.msra.mxu0 %v1915
    %v1917 = vand.u32 %v95, 4294901760
    %v1918 = vsub.f32 %v95, %v1917
    %v1919 = vand.u32 %v1918, 4294901760
    %v1920 = vsub.f32 %v1918, %v1919
    %v1921 = vand.u32 %v1920, 4294901760
    %1922 = vmatpush.msra.mxu0 %v1921
    %v1923 = vand.u32 %v93, 4294901760
    %v1924 = vsub.f32 %v93, %v1923
    %v1925 = vand.u32 %v1924, 4294901760
    %v1926 = vsub.f32 %v1924, %v1925
    %v1927 = vand.u32 %v1926, 4294901760
    %1928 = vmatpush.msra.mxu0 %v1927
    %v1929 = vand.u32 %v91, 4294901760
    %v1930 = vsub.f32 %v91, %v1929
    %v1931 = vand.u32 %v1930, 4294901760
    %v1932 = vsub.f32 %v1930, %v1931
    %v1933 = vand.u32 %v1932, 4294901760
    %1934 = vmatpush.msra.mxu0 %v1933
    %v1935 = vand.u32 %v89, 4294901760
    %v1936 = vsub.f32 %v89, %v1935
    %v1937 = vand.u32 %v1936, 4294901760
    %v1938 = vsub.f32 %v1936, %v1937
    %v1939 = vand.u32 %v1938, 4294901760
    %1940 = vmatpush.msra.mxu0 %v1939
    %v1941 = vand.u32 %v87, 4294901760
    %v1942 = vsub.f32 %v87, %v1941
    %v1943 = vand.u32 %v1942, 4294901760
    %v1944 = vsub.f32 %v1942, %v1943
    %v1945 = vand.u32 %v1944, 4294901760
    %1946 = vmatpush.msra.mxu0 %v1945
    %v1947 = vand.u32 %v85, 4294901760
    %v1948 = vsub.f32 %v85, %v1947
    %v1949 = vand.u32 %v1948, 4294901760
    %v1950 = vsub.f32 %v1948, %v1949
    %v1951 = vand.u32 %v1950, 4294901760
    %1952 = vmatpush.msra.mxu0 %v1951
    %v1953 = vand.u32 %v83, 4294901760
    %v1954 = vsub.f32 %v83, %v1953
    %v1955 = vand.u32 %v1954, 4294901760
    %v1956 = vsub.f32 %v1954, %v1955
    %v1957 = vand.u32 %v1956, 4294901760
    %1958 = vmatpush.msra.mxu0 %v1957
    %v1959 = vand.u32 %v1480, 4294901760
    %1960 = vmatmul.f32.gmra.mxu0 %v1959
    %v1961 = vpop.f32.mrf.mxu0
    %v1962 = vadd.f32 %v1861, %v1961
    %1963 = vdwg.mxu0
    %v1964 = vand.u32 %v113, 4294901760
    %v1965 = vsub.f32 %v113, %v1964
    %1966 = vmatpush.msra.mxu0 %v1965
    %v1967 = vand.u32 %v111, 4294901760
    %v1968 = vsub.f32 %v111, %v1967
    %1969 = vmatpush.msra.mxu0 %v1968
    %v1970 = vand.u32 %v109, 4294901760
    %v1971 = vsub.f32 %v109, %v1970
    %1972 = vmatpush.msra.mxu0 %v1971
    %v1973 = vand.u32 %v107, 4294901760
    %v1974 = vsub.f32 %v107, %v1973
    %1975 = vmatpush.msra.mxu0 %v1974
    %v1976 = vand.u32 %v105, 4294901760
    %v1977 = vsub.f32 %v105, %v1976
    %1978 = vmatpush.msra.mxu0 %v1977
    %v1979 = vand.u32 %v103, 4294901760
    %v1980 = vsub.f32 %v103, %v1979
    %1981 = vmatpush.msra.mxu0 %v1980
    %v1982 = vand.u32 %v101, 4294901760
    %v1983 = vsub.f32 %v101, %v1982
    %1984 = vmatpush.msra.mxu0 %v1983
    %v1985 = vand.u32 %v99, 4294901760
    %v1986 = vsub.f32 %v99, %v1985
    %1987 = vmatpush.msra.mxu0 %v1986
    %v1988 = vand.u32 %v97, 4294901760
    %v1989 = vsub.f32 %v97, %v1988
    %1990 = vmatpush.msra.mxu0 %v1989
    %v1991 = vand.u32 %v95, 4294901760
    %v1992 = vsub.f32 %v95, %v1991
    %1993 = vmatpush.msra.mxu0 %v1992
    %v1994 = vand.u32 %v93, 4294901760
    %v1995 = vsub.f32 %v93, %v1994
    %1996 = vmatpush.msra.mxu0 %v1995
    %v1997 = vand.u32 %v91, 4294901760
    %v1998 = vsub.f32 %v91, %v1997
    %1999 = vmatpush.msra.mxu0 %v1998
    %v2000 = vand.u32 %v89, 4294901760
    %v2001 = vsub.f32 %v89, %v2000
    %2002 = vmatpush.msra.mxu0 %v2001
    %v2003 = vand.u32 %v87, 4294901760
    %v2004 = vsub.f32 %v87, %v2003
    %2005 = vmatpush.msra.mxu0 %v2004
    %v2006 = vand.u32 %v85, 4294901760
    %v2007 = vsub.f32 %v85, %v2006
    %2008 = vmatpush.msra.mxu0 %v2007
    %v2009 = vand.u32 %v83, 4294901760
    %v2010 = vsub.f32 %v83, %v2009
    %2011 = vmatpush.msra.mxu0 %v2010
    %v2012 = vand.u32 %v1480, 4294901760
    %v2013 = vsub.f32 %v1480, %v2012
    %2014 = vmatmul.f32.gmra.mxu0 %v2013
    %v2015 = vpop.f32.mrf.mxu0
    %v2016 = vadd.f32 %v1962, %v2015
    %2017 = vdwg.mxu0
    %v2018 = vand.u32 %v113, 4294901760
    %2019 = vmatpush.msra.mxu0 %v2018
    %v2020 = vand.u32 %v111, 4294901760
    %2021 = vmatpush.msra.mxu0 %v2020
    %v2022 = vand.u32 %v109, 4294901760
    %2023 = vmatpush.msra.mxu0 %v2022
    %v2024 = vand.u32 %v107, 4294901760
    %2025 = vmatpush.msra.mxu0 %v2024
    %v2026 = vand.u32 %v105, 4294901760
    %2027 = vmatpush.msra.mxu0 %v2026
    %v2028 = vand.u32 %v103, 4294901760
    %2029 = vmatpush.msra.mxu0 %v2028
    %v2030 = vand.u32 %v101, 4294901760
    %2031 = vmatpush.msra.mxu0 %v2030
    %v2032 = vand.u32 %v99, 4294901760
    %2033 = vmatpush.msra.mxu0 %v2032
    %v2034 = vand.u32 %v97, 4294901760
    %2035 = vmatpush.msra.mxu0 %v2034
    %v2036 = vand.u32 %v95, 4294901760
    %2037 = vmatpush.msra.mxu0 %v2036
    %v2038 = vand.u32 %v93, 4294901760
    %2039 = vmatpush.msra.mxu0 %v2038
    %v2040 = vand.u32 %v91, 4294901760
    %2041 = vmatpush.msra.mxu0 %v2040
    %v2042 = vand.u32 %v89, 4294901760
    %2043 = vmatpush.msra.mxu0 %v2042
    %v2044 = vand.u32 %v87, 4294901760
    %2045 = vmatpush.msra.mxu0 %v2044
    %v2046 = vand.u32 %v85, 4294901760
    %2047 = vmatpush.msra.mxu0 %v2046
    %v2048 = vand.u32 %v83, 4294901760
    %2049 = vmatpush.msra.mxu0 %v2048
    %v2050 = vand.u32 %v1480, 4294901760
    %v2051 = vsub.f32 %v1480, %v2050
    %v2052 = vand.u32 %v2051, 4294901760
    %2053 = vmatmul.f32.gmra.mxu0 %v2052
    %v2054 = vpop.f32.mrf.mxu0
    %v2055 = vadd.f32 %v2016, %v2054
    %2056 = vdwg.mxu0
    %v2057 = vand.u32 %v113, 4294901760
    %v2058 = vsub.f32 %v113, %v2057
    %v2059 = vand.u32 %v2058, 4294901760
    %2060 = vmatpush.msra.mxu0 %v2059
    %v2061 = vand.u32 %v111, 4294901760
    %v2062 = vsub.f32 %v111, %v2061
    %v2063 = vand.u32 %v2062, 4294901760
    %2064 = vmatpush.msra.mxu0 %v2063
    %v2065 = vand.u32 %v109, 4294901760
    %v2066 = vsub.f32 %v109, %v2065
    %v2067 = vand.u32 %v2066, 4294901760
    %2068 = vmatpush.msra.mxu0 %v2067
    %v2069 = vand.u32 %v107, 4294901760
    %v2070 = vsub.f32 %v107, %v2069
    %v2071 = vand.u32 %v2070, 4294901760
    %2072 = vmatpush.msra.mxu0 %v2071
    %v2073 = vand.u32 %v105, 4294901760
    %v2074 = vsub.f32 %v105, %v2073
    %v2075 = vand.u32 %v2074, 4294901760
    %2076 = vmatpush.msra.mxu0 %v2075
    %v2077 = vand.u32 %v103, 4294901760
    %v2078 = vsub.f32 %v103, %v2077
    %v2079 = vand.u32 %v2078, 4294901760
    %2080 = vmatpush.msra.mxu0 %v2079
    %v2081 = vand.u32 %v101, 4294901760
    %v2082 = vsub.f32 %v101, %v2081
    %v2083 = vand.u32 %v2082, 4294901760
    %2084 = vmatpush.msra.mxu0 %v2083
    %v2085 = vand.u32 %v99, 4294901760
    %v2086 = vsub.f32 %v99, %v2085
    %v2087 = vand.u32 %v2086, 4294901760
    %2088 = vmatpush.msra.mxu0 %v2087
    %v2089 = vand.u32 %v97, 4294901760
    %v2090 = vsub.f32 %v97, %v2089
    %v2091 = vand.u32 %v2090, 4294901760
    %2092 = vmatpush.msra.mxu0 %v2091
    %v2093 = vand.u32 %v95, 4294901760
    %v2094 = vsub.f32 %v95, %v2093
    %v2095 = vand.u32 %v2094, 4294901760
    %2096 = vmatpush.msra.mxu0 %v2095
    %v2097 = vand.u32 %v93, 4294901760
    %v2098 = vsub.f32 %v93, %v2097
    %v2099 = vand.u32 %v2098, 4294901760
    %2100 = vmatpush.msra.mxu0 %v2099
    %v2101 = vand.u32 %v91, 4294901760
    %v2102 = vsub.f32 %v91, %v2101
    %v2103 = vand.u32 %v2102, 4294901760
    %2104 = vmatpush.msra.mxu0 %v2103
    %v2105 = vand.u32 %v89, 4294901760
    %v2106 = vsub.f32 %v89, %v2105
    %v2107 = vand.u32 %v2106, 4294901760
    %2108 = vmatpush.msra.mxu0 %v2107
    %v2109 = vand.u32 %v87, 4294901760
    %v2110 = vsub.f32 %v87, %v2109
    %v2111 = vand.u32 %v2110, 4294901760
    %2112 = vmatpush.msra.mxu0 %v2111
    %v2113 = vand.u32 %v85, 4294901760
    %v2114 = vsub.f32 %v85, %v2113
    %v2115 = vand.u32 %v2114, 4294901760
    %2116 = vmatpush.msra.mxu0 %v2115
    %v2117 = vand.u32 %v83, 4294901760
    %v2118 = vsub.f32 %v83, %v2117
    %v2119 = vand.u32 %v2118, 4294901760
    %2120 = vmatpush.msra.mxu0 %v2119
    %v2121 = vand.u32 %v1480, 4294901760
    %2122 = vmatmul.f32.gmra.mxu0 %v2121
    %v2123 = vpop.f32.mrf.mxu0
    %v2124 = vadd.f32 %v2055, %v2123
    %2125 = vdwg.mxu0
    %v2126 = vand.u32 %v113, 4294901760
    %2127 = vmatpush.msra.mxu0 %v2126
    %v2128 = vand.u32 %v111, 4294901760
    %2129 = vmatpush.msra.mxu0 %v2128
    %v2130 = vand.u32 %v109, 4294901760
    %2131 = vmatpush.msra.mxu0 %v2130
    %v2132 = vand.u32 %v107, 4294901760
    %2133 = vmatpush.msra.mxu0 %v2132
    %v2134 = vand.u32 %v105, 4294901760
    %2135 = vmatpush.msra.mxu0 %v2134
    %v2136 = vand.u32 %v103, 4294901760
    %2137 = vmatpush.msra.mxu0 %v2136
    %v2138 = vand.u32 %v101, 4294901760
    %2139 = vmatpush.msra.mxu0 %v2138
    %v2140 = vand.u32 %v99, 4294901760
    %2141 = vmatpush.msra.mxu0 %v2140
    %v2142 = vand.u32 %v97, 4294901760
    %2143 = vmatpush.msra.mxu0 %v2142
    %v2144 = vand.u32 %v95, 4294901760
    %2145 = vmatpush.msra.mxu0 %v2144
    %v2146 = vand.u32 %v93, 4294901760
    %2147 = vmatpush.msra.mxu0 %v2146
    %v2148 = vand.u32 %v91, 4294901760
    %2149 = vmatpush.msra.mxu0 %v2148
    %v2150 = vand.u32 %v89, 4294901760
    %2151 = vmatpush.msra.mxu0 %v2150
    %v2152 = vand.u32 %v87, 4294901760
    %2153 = vmatpush.msra.mxu0 %v2152
    %v2154 = vand.u32 %v85, 4294901760
    %2155 = vmatpush.msra.mxu0 %v2154
    %v2156 = vand.u32 %v83, 4294901760
    %2157 = vmatpush.msra.mxu0 %v2156
    %v2158 = vand.u32 %v1480, 4294901760
    %2159 = vmatmul.f32.gmra.mxu0 %v2158
    %v2160 = vpop.f32.mrf.mxu0
    %v2161 = vadd.f32 %v2124, %v2160
    %2162 = vdwg.mxu0
    %v2163 = vand.u32 %v82, 4294901760
    %2164 = vmatpush.msra.mxu0 %v2163
    %v2165 = vand.u32 %v80, 4294901760
    %2166 = vmatpush.msra.mxu0 %v2165
    %v2167 = vand.u32 %v78, 4294901760
    %2168 = vmatpush.msra.mxu0 %v2167
    %v2169 = vand.u32 %v76, 4294901760
    %2170 = vmatpush.msra.mxu0 %v2169
    %v2171 = vand.u32 %v74, 4294901760
    %2172 = vmatpush.msra.mxu0 %v2171
    %v2173 = vand.u32 %v72, 4294901760
    %2174 = vmatpush.msra.mxu0 %v2173
    %v2175 = vand.u32 %v70, 4294901760
    %2176 = vmatpush.msra.mxu0 %v2175
    %v2177 = vand.u32 %v68, 4294901760
    %2178 = vmatpush.msra.mxu0 %v2177
    %v2179 = vand.u32 %v66, 4294901760
    %2180 = vmatpush.msra.mxu0 %v2179
    %v2181 = vand.u32 %v64, 4294901760
    %2182 = vmatpush.msra.mxu0 %v2181
    %v2183 = vand.u32 %v62, 4294901760
    %2184 = vmatpush.msra.mxu0 %v2183
    %v2185 = vand.u32 %v60, 4294901760
    %2186 = vmatpush.msra.mxu0 %v2185
    %v2187 = vand.u32 %v58, 4294901760
    %2188 = vmatpush.msra.mxu0 %v2187
    %v2189 = vand.u32 %v56, 4294901760
    %2190 = vmatpush.msra.mxu0 %v2189
    %v2191 = vand.u32 %v54, 4294901760
    %2192 = vmatpush.msra.mxu0 %v2191
    %v2193 = vand.u32 %v52, 4294901760
    %2194 = vmatpush.msra.mxu0 %v2193
    %v2195 = vand.u32 %v1479, 4294901760
    %v2196 = vsub.f32 %v1479, %v2195
    %v2197 = vand.u32 %v2196, 4294901760
    %v2198 = vsub.f32 %v2196, %v2197
    %v2199 = vand.u32 %v2198, 4294901760
    %2200 = vmatmul.f32.gmra.mxu0 %v2199
    %v2201 = vpop.f32.mrf.mxu0
    %v2202 = vadd.f32 0.0, %v2201
    %2203 = vdwg.mxu0
    %v2204 = vand.u32 %v82, 4294901760
    %v2205 = vsub.f32 %v82, %v2204
    %v2206 = vand.u32 %v2205, 4294901760
    %v2207 = vsub.f32 %v2205, %v2206
    %v2208 = vand.u32 %v2207, 4294901760
    %2209 = vmatpush.msra.mxu0 %v2208
    %v2210 = vand.u32 %v80, 4294901760
    %v2211 = vsub.f32 %v80, %v2210
    %v2212 = vand.u32 %v2211, 4294901760
    %v2213 = vsub.f32 %v2211, %v2212
    %v2214 = vand.u32 %v2213, 4294901760
    %2215 = vmatpush.msra.mxu0 %v2214
    %v2216 = vand.u32 %v78, 4294901760
    %v2217 = vsub.f32 %v78, %v2216
    %v2218 = vand.u32 %v2217, 4294901760
    %v2219 = vsub.f32 %v2217, %v2218
    %v2220 = vand.u32 %v2219, 4294901760
    %2221 = vmatpush.msra.mxu0 %v2220
    %v2222 = vand.u32 %v76, 4294901760
    %v2223 = vsub.f32 %v76, %v2222
    %v2224 = vand.u32 %v2223, 4294901760
    %v2225 = vsub.f32 %v2223, %v2224
    %v2226 = vand.u32 %v2225, 4294901760
    %2227 = vmatpush.msra.mxu0 %v2226
    %v2228 = vand.u32 %v74, 4294901760
    %v2229 = vsub.f32 %v74, %v2228
    %v2230 = vand.u32 %v2229, 4294901760
    %v2231 = vsub.f32 %v2229, %v2230
    %v2232 = vand.u32 %v2231, 4294901760
    %2233 = vmatpush.msra.mxu0 %v2232
    %v2234 = vand.u32 %v72, 4294901760
    %v2235 = vsub.f32 %v72, %v2234
    %v2236 = vand.u32 %v2235, 4294901760
    %v2237 = vsub.f32 %v2235, %v2236
    %v2238 = vand.u32 %v2237, 4294901760
    %2239 = vmatpush.msra.mxu0 %v2238
    %v2240 = vand.u32 %v70, 4294901760
    %v2241 = vsub.f32 %v70, %v2240
    %v2242 = vand.u32 %v2241, 4294901760
    %v2243 = vsub.f32 %v2241, %v2242
    %v2244 = vand.u32 %v2243, 4294901760
    %2245 = vmatpush.msra.mxu0 %v2244
    %v2246 = vand.u32 %v68, 4294901760
    %v2247 = vsub.f32 %v68, %v2246
    %v2248 = vand.u32 %v2247, 4294901760
    %v2249 = vsub.f32 %v2247, %v2248
    %v2250 = vand.u32 %v2249, 4294901760
    %2251 = vmatpush.msra.mxu0 %v2250
    %v2252 = vand.u32 %v66, 4294901760
    %v2253 = vsub.f32 %v66, %v2252
    %v2254 = vand.u32 %v2253, 4294901760
    %v2255 = vsub.f32 %v2253, %v2254
    %v2256 = vand.u32 %v2255, 4294901760
    %2257 = vmatpush.msra.mxu0 %v2256
    %v2258 = vand.u32 %v64, 4294901760
    %v2259 = vsub.f32 %v64, %v2258
    %v2260 = vand.u32 %v2259, 4294901760
    %v2261 = vsub.f32 %v2259, %v2260
    %v2262 = vand.u32 %v2261, 4294901760
    %2263 = vmatpush.msra.mxu0 %v2262
    %v2264 = vand.u32 %v62, 4294901760
    %v2265 = vsub.f32 %v62, %v2264
    %v2266 = vand.u32 %v2265, 4294901760
    %v2267 = vsub.f32 %v2265, %v2266
    %v2268 = vand.u32 %v2267, 4294901760
    %2269 = vmatpush.msra.mxu0 %v2268
    %v2270 = vand.u32 %v60, 4294901760
    %v2271 = vsub.f32 %v60, %v2270
    %v2272 = vand.u32 %v2271, 4294901760
    %v2273 = vsub.f32 %v2271, %v2272
    %v2274 = vand.u32 %v2273, 4294901760
    %2275 = vmatpush.msra.mxu0 %v2274
    %v2276 = vand.u32 %v58, 4294901760
    %v2277 = vsub.f32 %v58, %v2276
    %v2278 = vand.u32 %v2277, 4294901760
    %v2279 = vsub.f32 %v2277, %v2278
    %v2280 = vand.u32 %v2279, 4294901760
    %2281 = vmatpush.msra.mxu0 %v2280
    %v2282 = vand.u32 %v56, 4294901760
    %v2283 = vsub.f32 %v56, %v2282
    %v2284 = vand.u32 %v2283, 4294901760
    %v2285 = vsub.f32 %v2283, %v2284
    %v2286 = vand.u32 %v2285, 4294901760
    %2287 = vmatpush.msra.mxu0 %v2286
    %v2288 = vand.u32 %v54, 4294901760
    %v2289 = vsub.f32 %v54, %v2288
    %v2290 = vand.u32 %v2289, 4294901760
    %v2291 = vsub.f32 %v2289, %v2290
    %v2292 = vand.u32 %v2291, 4294901760
    %2293 = vmatpush.msra.mxu0 %v2292
    %v2294 = vand.u32 %v52, 4294901760
    %v2295 = vsub.f32 %v52, %v2294
    %v2296 = vand.u32 %v2295, 4294901760
    %v2297 = vsub.f32 %v2295, %v2296
    %v2298 = vand.u32 %v2297, 4294901760
    %2299 = vmatpush.msra.mxu0 %v2298
    %v2300 = vand.u32 %v1479, 4294901760
    %2301 = vmatmul.f32.gmra.mxu0 %v2300
    %v2302 = vpop.f32.mrf.mxu0
    %v2303 = vadd.f32 %v2202, %v2302
    %2304 = vdwg.mxu0
    %v2305 = vand.u32 %v82, 4294901760
    %v2306 = vsub.f32 %v82, %v2305
    %2307 = vmatpush.msra.mxu0 %v2306
    %v2308 = vand.u32 %v80, 4294901760
    %v2309 = vsub.f32 %v80, %v2308
    %2310 = vmatpush.msra.mxu0 %v2309
    %v2311 = vand.u32 %v78, 4294901760
    %v2312 = vsub.f32 %v78, %v2311
    %2313 = vmatpush.msra.mxu0 %v2312
    %v2314 = vand.u32 %v76, 4294901760
    %v2315 = vsub.f32 %v76, %v2314
    %2316 = vmatpush.msra.mxu0 %v2315
    %v2317 = vand.u32 %v74, 4294901760
    %v2318 = vsub.f32 %v74, %v2317
    %2319 = vmatpush.msra.mxu0 %v2318
    %v2320 = vand.u32 %v72, 4294901760
    %v2321 = vsub.f32 %v72, %v2320
    %2322 = vmatpush.msra.mxu0 %v2321
    %v2323 = vand.u32 %v70, 4294901760
    %v2324 = vsub.f32 %v70, %v2323
    %2325 = vmatpush.msra.mxu0 %v2324
    %v2326 = vand.u32 %v68, 4294901760
    %v2327 = vsub.f32 %v68, %v2326
    %2328 = vmatpush.msra.mxu0 %v2327
    %v2329 = vand.u32 %v66, 4294901760
    %v2330 = vsub.f32 %v66, %v2329
    %2331 = vmatpush.msra.mxu0 %v2330
    %v2332 = vand.u32 %v64, 4294901760
    %v2333 = vsub.f32 %v64, %v2332
    %2334 = vmatpush.msra.mxu0 %v2333
    %v2335 = vand.u32 %v62, 4294901760
    %v2336 = vsub.f32 %v62, %v2335
    %2337 = vmatpush.msra.mxu0 %v2336
    %v2338 = vand.u32 %v60, 4294901760
    %v2339 = vsub.f32 %v60, %v2338
    %2340 = vmatpush.msra.mxu0 %v2339
    %v2341 = vand.u32 %v58, 4294901760
    %v2342 = vsub.f32 %v58, %v2341
    %2343 = vmatpush.msra.mxu0 %v2342
    %v2344 = vand.u32 %v56, 4294901760
    %v2345 = vsub.f32 %v56, %v2344
    %2346 = vmatpush.msra.mxu0 %v2345
    %v2347 = vand.u32 %v54, 4294901760
    %v2348 = vsub.f32 %v54, %v2347
    %2349 = vmatpush.msra.mxu0 %v2348
    %v2350 = vand.u32 %v52, 4294901760
    %v2351 = vsub.f32 %v52, %v2350
    %2352 = vmatpush.msra.mxu0 %v2351
    %v2353 = vand.u32 %v1479, 4294901760
    %v2354 = vsub.f32 %v1479, %v2353
    %2355 = vmatmul.f32.gmra.mxu0 %v2354
    %v2356 = vpop.f32.mrf.mxu0
    %v2357 = vadd.f32 %v2303, %v2356
    %2358 = vdwg.mxu0
    %v2359 = vand.u32 %v82, 4294901760
    %2360 = vmatpush.msra.mxu0 %v2359
    %v2361 = vand.u32 %v80, 4294901760
    %2362 = vmatpush.msra.mxu0 %v2361
    %v2363 = vand.u32 %v78, 4294901760
    %2364 = vmatpush.msra.mxu0 %v2363
    %v2365 = vand.u32 %v76, 4294901760
    %2366 = vmatpush.msra.mxu0 %v2365
    %v2367 = vand.u32 %v74, 4294901760
    %2368 = vmatpush.msra.mxu0 %v2367
    %v2369 = vand.u32 %v72, 4294901760
    %2370 = vmatpush.msra.mxu0 %v2369
    %v2371 = vand.u32 %v70, 4294901760
    %2372 = vmatpush.msra.mxu0 %v2371
    %v2373 = vand.u32 %v68, 4294901760
    %2374 = vmatpush.msra.mxu0 %v2373
    %v2375 = vand.u32 %v66, 4294901760
    %2376 = vmatpush.msra.mxu0 %v2375
    %v2377 = vand.u32 %v64, 4294901760
    %2378 = vmatpush.msra.mxu0 %v2377
    %v2379 = vand.u32 %v62, 4294901760
    %2380 = vmatpush.msra.mxu0 %v2379
    %v2381 = vand.u32 %v60, 4294901760
    %2382 = vmatpush.msra.mxu0 %v2381
    %v2383 = vand.u32 %v58, 4294901760
    %2384 = vmatpush.msra.mxu0 %v2383
    %v2385 = vand.u32 %v56, 4294901760
    %2386 = vmatpush.msra.mxu0 %v2385
    %v2387 = vand.u32 %v54, 4294901760
    %2388 = vmatpush.msra.mxu0 %v2387
    %v2389 = vand.u32 %v52, 4294901760
    %2390 = vmatpush.msra.mxu0 %v2389
    %v2391 = vand.u32 %v1479, 4294901760
    %v2392 = vsub.f32 %v1479, %v2391
    %v2393 = vand.u32 %v2392, 4294901760
    %2394 = vmatmul.f32.gmra.mxu0 %v2393
    %v2395 = vpop.f32.mrf.mxu0
    %v2396 = vadd.f32 %v2357, %v2395
    %2397 = vdwg.mxu0
    %v2398 = vand.u32 %v82, 4294901760
    %v2399 = vsub.f32 %v82, %v2398
    %v2400 = vand.u32 %v2399, 4294901760
    %2401 = vmatpush.msra.mxu0 %v2400
    %v2402 = vand.u32 %v80, 4294901760
    %v2403 = vsub.f32 %v80, %v2402
    %v2404 = vand.u32 %v2403, 4294901760
    %2405 = vmatpush.msra.mxu0 %v2404
    %v2406 = vand.u32 %v78, 4294901760
    %v2407 = vsub.f32 %v78, %v2406
    %v2408 = vand.u32 %v2407, 4294901760
    %2409 = vmatpush.msra.mxu0 %v2408
    %v2410 = vand.u32 %v76, 4294901760
    %v2411 = vsub.f32 %v76, %v2410
    %v2412 = vand.u32 %v2411, 4294901760
    %2413 = vmatpush.msra.mxu0 %v2412
    %v2414 = vand.u32 %v74, 4294901760
    %v2415 = vsub.f32 %v74, %v2414
    %v2416 = vand.u32 %v2415, 4294901760
    %2417 = vmatpush.msra.mxu0 %v2416
    %v2418 = vand.u32 %v72, 4294901760
    %v2419 = vsub.f32 %v72, %v2418
    %v2420 = vand.u32 %v2419, 4294901760
    %2421 = vmatpush.msra.mxu0 %v2420
    %v2422 = vand.u32 %v70, 4294901760
    %v2423 = vsub.f32 %v70, %v2422
    %v2424 = vand.u32 %v2423, 4294901760
    %2425 = vmatpush.msra.mxu0 %v2424
    %v2426 = vand.u32 %v68, 4294901760
    %v2427 = vsub.f32 %v68, %v2426
    %v2428 = vand.u32 %v2427, 4294901760
    %2429 = vmatpush.msra.mxu0 %v2428
    %v2430 = vand.u32 %v66, 4294901760
    %v2431 = vsub.f32 %v66, %v2430
    %v2432 = vand.u32 %v2431, 4294901760
    %2433 = vmatpush.msra.mxu0 %v2432
    %v2434 = vand.u32 %v64, 4294901760
    %v2435 = vsub.f32 %v64, %v2434
    %v2436 = vand.u32 %v2435, 4294901760
    %2437 = vmatpush.msra.mxu0 %v2436
    %v2438 = vand.u32 %v62, 4294901760
    %v2439 = vsub.f32 %v62, %v2438
    %v2440 = vand.u32 %v2439, 4294901760
    %2441 = vmatpush.msra.mxu0 %v2440
    %v2442 = vand.u32 %v60, 4294901760
    %v2443 = vsub.f32 %v60, %v2442
    %v2444 = vand.u32 %v2443, 4294901760
    %2445 = vmatpush.msra.mxu0 %v2444
    %v2446 = vand.u32 %v58, 4294901760
    %v2447 = vsub.f32 %v58, %v2446
    %v2448 = vand.u32 %v2447, 4294901760
    %2449 = vmatpush.msra.mxu0 %v2448
    %v2450 = vand.u32 %v56, 4294901760
    %v2451 = vsub.f32 %v56, %v2450
    %v2452 = vand.u32 %v2451, 4294901760
    %2453 = vmatpush.msra.mxu0 %v2452
    %v2454 = vand.u32 %v54, 4294901760
    %v2455 = vsub.f32 %v54, %v2454
    %v2456 = vand.u32 %v2455, 4294901760
    %2457 = vmatpush.msra.mxu0 %v2456
    %v2458 = vand.u32 %v52, 4294901760
    %v2459 = vsub.f32 %v52, %v2458
    %v2460 = vand.u32 %v2459, 4294901760
    %2461 = vmatpush.msra.mxu0 %v2460
    %v2462 = vand.u32 %v1479, 4294901760
    %2463 = vmatmul.f32.gmra.mxu0 %v2462
    %v2464 = vpop.f32.mrf.mxu0
    %v2465 = vadd.f32 %v2396, %v2464
    %2466 = vdwg.mxu0
    %v2467 = vand.u32 %v82, 4294901760
    %2468 = vmatpush.msra.mxu0 %v2467
    %v2469 = vand.u32 %v80, 4294901760
    %2470 = vmatpush.msra.mxu0 %v2469
    %v2471 = vand.u32 %v78, 4294901760
    %2472 = vmatpush.msra.mxu0 %v2471
    %v2473 = vand.u32 %v76, 4294901760
    %2474 = vmatpush.msra.mxu0 %v2473
    %v2475 = vand.u32 %v74, 4294901760
    %2476 = vmatpush.msra.mxu0 %v2475
    %v2477 = vand.u32 %v72, 4294901760
    %2478 = vmatpush.msra.mxu0 %v2477
    %v2479 = vand.u32 %v70, 4294901760
    %2480 = vmatpush.msra.mxu0 %v2479
    %v2481 = vand.u32 %v68, 4294901760
    %2482 = vmatpush.msra.mxu0 %v2481
    %v2483 = vand.u32 %v66, 4294901760
    %2484 = vmatpush.msra.mxu0 %v2483
    %v2485 = vand.u32 %v64, 4294901760
    %2486 = vmatpush.msra.mxu0 %v2485
    %v2487 = vand.u32 %v62, 4294901760
    %2488 = vmatpush.msra.mxu0 %v2487
    %v2489 = vand.u32 %v60, 4294901760
    %2490 = vmatpush.msra.mxu0 %v2489
    %v2491 = vand.u32 %v58, 4294901760
    %2492 = vmatpush.msra.mxu0 %v2491
    %v2493 = vand.u32 %v56, 4294901760
    %2494 = vmatpush.msra.mxu0 %v2493
    %v2495 = vand.u32 %v54, 4294901760
    %2496 = vmatpush.msra.mxu0 %v2495
    %v2497 = vand.u32 %v52, 4294901760
    %2498 = vmatpush.msra.mxu0 %v2497
    %v2499 = vand.u32 %v1479, 4294901760
    %2500 = vmatmul.f32.gmra.mxu0 %v2499
    %v2501 = vpop.f32.mrf.mxu0
    %v2502 = vadd.f32 %v2465, %v2501
    %2503 = vdwg.mxu0
    %v2504 = vand.u32 %v114, 4294901760
    %2505 = vmatpush.msra.mxu0 %v2504
    %v2506 = vand.u32 %v112, 4294901760
    %2507 = vmatpush.msra.mxu0 %v2506
    %v2508 = vand.u32 %v110, 4294901760
    %2509 = vmatpush.msra.mxu0 %v2508
    %v2510 = vand.u32 %v108, 4294901760
    %2511 = vmatpush.msra.mxu0 %v2510
    %v2512 = vand.u32 %v106, 4294901760
    %2513 = vmatpush.msra.mxu0 %v2512
    %v2514 = vand.u32 %v104, 4294901760
    %2515 = vmatpush.msra.mxu0 %v2514
    %v2516 = vand.u32 %v102, 4294901760
    %2517 = vmatpush.msra.mxu0 %v2516
    %v2518 = vand.u32 %v100, 4294901760
    %2519 = vmatpush.msra.mxu0 %v2518
    %v2520 = vand.u32 %v98, 4294901760
    %2521 = vmatpush.msra.mxu0 %v2520
    %v2522 = vand.u32 %v96, 4294901760
    %2523 = vmatpush.msra.mxu0 %v2522
    %v2524 = vand.u32 %v94, 4294901760
    %2525 = vmatpush.msra.mxu0 %v2524
    %v2526 = vand.u32 %v92, 4294901760
    %2527 = vmatpush.msra.mxu0 %v2526
    %v2528 = vand.u32 %v90, 4294901760
    %2529 = vmatpush.msra.mxu0 %v2528
    %v2530 = vand.u32 %v88, 4294901760
    %2531 = vmatpush.msra.mxu0 %v2530
    %v2532 = vand.u32 %v86, 4294901760
    %2533 = vmatpush.msra.mxu0 %v2532
    %v2534 = vand.u32 %v84, 4294901760
    %2535 = vmatpush.msra.mxu0 %v2534
    %v2536 = vand.u32 %v1480, 4294901760
    %v2537 = vsub.f32 %v1480, %v2536
    %v2538 = vand.u32 %v2537, 4294901760
    %v2539 = vsub.f32 %v2537, %v2538
    %v2540 = vand.u32 %v2539, 4294901760
    %2541 = vmatmul.f32.gmra.mxu0 %v2540
    %v2542 = vpop.f32.mrf.mxu0
    %v2543 = vadd.f32 %v2502, %v2542
    %2544 = vdwg.mxu0
    %v2545 = vand.u32 %v114, 4294901760
    %v2546 = vsub.f32 %v114, %v2545
    %v2547 = vand.u32 %v2546, 4294901760
    %v2548 = vsub.f32 %v2546, %v2547
    %v2549 = vand.u32 %v2548, 4294901760
    %2550 = vmatpush.msra.mxu0 %v2549
    %v2551 = vand.u32 %v112, 4294901760
    %v2552 = vsub.f32 %v112, %v2551
    %v2553 = vand.u32 %v2552, 4294901760
    %v2554 = vsub.f32 %v2552, %v2553
    %v2555 = vand.u32 %v2554, 4294901760
    %2556 = vmatpush.msra.mxu0 %v2555
    %v2557 = vand.u32 %v110, 4294901760
    %v2558 = vsub.f32 %v110, %v2557
    %v2559 = vand.u32 %v2558, 4294901760
    %v2560 = vsub.f32 %v2558, %v2559
    %v2561 = vand.u32 %v2560, 4294901760
    %2562 = vmatpush.msra.mxu0 %v2561
    %v2563 = vand.u32 %v108, 4294901760
    %v2564 = vsub.f32 %v108, %v2563
    %v2565 = vand.u32 %v2564, 4294901760
    %v2566 = vsub.f32 %v2564, %v2565
    %v2567 = vand.u32 %v2566, 4294901760
    %2568 = vmatpush.msra.mxu0 %v2567
    %v2569 = vand.u32 %v106, 4294901760
    %v2570 = vsub.f32 %v106, %v2569
    %v2571 = vand.u32 %v2570, 4294901760
    %v2572 = vsub.f32 %v2570, %v2571
    %v2573 = vand.u32 %v2572, 4294901760
    %2574 = vmatpush.msra.mxu0 %v2573
    %v2575 = vand.u32 %v104, 4294901760
    %v2576 = vsub.f32 %v104, %v2575
    %v2577 = vand.u32 %v2576, 4294901760
    %v2578 = vsub.f32 %v2576, %v2577
    %v2579 = vand.u32 %v2578, 4294901760
    %2580 = vmatpush.msra.mxu0 %v2579
    %v2581 = vand.u32 %v102, 4294901760
    %v2582 = vsub.f32 %v102, %v2581
    %v2583 = vand.u32 %v2582, 4294901760
    %v2584 = vsub.f32 %v2582, %v2583
    %v2585 = vand.u32 %v2584, 4294901760
    %2586 = vmatpush.msra.mxu0 %v2585
    %v2587 = vand.u32 %v100, 4294901760
    %v2588 = vsub.f32 %v100, %v2587
    %v2589 = vand.u32 %v2588, 4294901760
    %v2590 = vsub.f32 %v2588, %v2589
    %v2591 = vand.u32 %v2590, 4294901760
    %2592 = vmatpush.msra.mxu0 %v2591
    %v2593 = vand.u32 %v98, 4294901760
    %v2594 = vsub.f32 %v98, %v2593
    %v2595 = vand.u32 %v2594, 4294901760
    %v2596 = vsub.f32 %v2594, %v2595
    %v2597 = vand.u32 %v2596, 4294901760
    %2598 = vmatpush.msra.mxu0 %v2597
    %v2599 = vand.u32 %v96, 4294901760
    %v2600 = vsub.f32 %v96, %v2599
    %v2601 = vand.u32 %v2600, 4294901760
    %v2602 = vsub.f32 %v2600, %v2601
    %v2603 = vand.u32 %v2602, 4294901760
    %2604 = vmatpush.msra.mxu0 %v2603
    %v2605 = vand.u32 %v94, 4294901760
    %v2606 = vsub.f32 %v94, %v2605
    %v2607 = vand.u32 %v2606, 4294901760
    %v2608 = vsub.f32 %v2606, %v2607
    %v2609 = vand.u32 %v2608, 4294901760
    %2610 = vmatpush.msra.mxu0 %v2609
    %v2611 = vand.u32 %v92, 4294901760
    %v2612 = vsub.f32 %v92, %v2611
    %v2613 = vand.u32 %v2612, 4294901760
    %v2614 = vsub.f32 %v2612, %v2613
    %v2615 = vand.u32 %v2614, 4294901760
    %2616 = vmatpush.msra.mxu0 %v2615
    %v2617 = vand.u32 %v90, 4294901760
    %v2618 = vsub.f32 %v90, %v2617
    %v2619 = vand.u32 %v2618, 4294901760
    %v2620 = vsub.f32 %v2618, %v2619
    %v2621 = vand.u32 %v2620, 4294901760
    %2622 = vmatpush.msra.mxu0 %v2621
    %v2623 = vand.u32 %v88, 4294901760
    %v2624 = vsub.f32 %v88, %v2623
    %v2625 = vand.u32 %v2624, 4294901760
    %v2626 = vsub.f32 %v2624, %v2625
    %v2627 = vand.u32 %v2626, 4294901760
    %2628 = vmatpush.msra.mxu0 %v2627
    %v2629 = vand.u32 %v86, 4294901760
    %v2630 = vsub.f32 %v86, %v2629
    %v2631 = vand.u32 %v2630, 4294901760
    %v2632 = vsub.f32 %v2630, %v2631
    %v2633 = vand.u32 %v2632, 4294901760
    %2634 = vmatpush.msra.mxu0 %v2633
    %v2635 = vand.u32 %v84, 4294901760
    %v2636 = vsub.f32 %v84, %v2635
    %v2637 = vand.u32 %v2636, 4294901760
    %v2638 = vsub.f32 %v2636, %v2637
    %v2639 = vand.u32 %v2638, 4294901760
    %2640 = vmatpush.msra.mxu0 %v2639
    %v2641 = vand.u32 %v1480, 4294901760
    %2642 = vmatmul.f32.gmra.mxu0 %v2641
    %v2643 = vpop.f32.mrf.mxu0
    %v2644 = vadd.f32 %v2543, %v2643
    %2645 = vdwg.mxu0
    %v2646 = vand.u32 %v114, 4294901760
    %v2647 = vsub.f32 %v114, %v2646
    %2648 = vmatpush.msra.mxu0 %v2647
    %v2649 = vand.u32 %v112, 4294901760
    %v2650 = vsub.f32 %v112, %v2649
    %2651 = vmatpush.msra.mxu0 %v2650
    %v2652 = vand.u32 %v110, 4294901760
    %v2653 = vsub.f32 %v110, %v2652
    %2654 = vmatpush.msra.mxu0 %v2653
    %v2655 = vand.u32 %v108, 4294901760
    %v2656 = vsub.f32 %v108, %v2655
    %2657 = vmatpush.msra.mxu0 %v2656
    %v2658 = vand.u32 %v106, 4294901760
    %v2659 = vsub.f32 %v106, %v2658
    %2660 = vmatpush.msra.mxu0 %v2659
    %v2661 = vand.u32 %v104, 4294901760
    %v2662 = vsub.f32 %v104, %v2661
    %2663 = vmatpush.msra.mxu0 %v2662
    %v2664 = vand.u32 %v102, 4294901760
    %v2665 = vsub.f32 %v102, %v2664
    %2666 = vmatpush.msra.mxu0 %v2665
    %v2667 = vand.u32 %v100, 4294901760
    %v2668 = vsub.f32 %v100, %v2667
    %2669 = vmatpush.msra.mxu0 %v2668
    %v2670 = vand.u32 %v98, 4294901760
    %v2671 = vsub.f32 %v98, %v2670
    %2672 = vmatpush.msra.mxu0 %v2671
    %v2673 = vand.u32 %v96, 4294901760
    %v2674 = vsub.f32 %v96, %v2673
    %2675 = vmatpush.msra.mxu0 %v2674
    %v2676 = vand.u32 %v94, 4294901760
    %v2677 = vsub.f32 %v94, %v2676
    %2678 = vmatpush.msra.mxu0 %v2677
    %v2679 = vand.u32 %v92, 4294901760
    %v2680 = vsub.f32 %v92, %v2679
    %2681 = vmatpush.msra.mxu0 %v2680
    %v2682 = vand.u32 %v90, 4294901760
    %v2683 = vsub.f32 %v90, %v2682
    %2684 = vmatpush.msra.mxu0 %v2683
    %v2685 = vand.u32 %v88, 4294901760
    %v2686 = vsub.f32 %v88, %v2685
    %2687 = vmatpush.msra.mxu0 %v2686
    %v2688 = vand.u32 %v86, 4294901760
    %v2689 = vsub.f32 %v86, %v2688
    %2690 = vmatpush.msra.mxu0 %v2689
    %v2691 = vand.u32 %v84, 4294901760
    %v2692 = vsub.f32 %v84, %v2691
    %2693 = vmatpush.msra.mxu0 %v2692
    %v2694 = vand.u32 %v1480, 4294901760
    %v2695 = vsub.f32 %v1480, %v2694
    %2696 = vmatmul.f32.gmra.mxu0 %v2695
    %v2697 = vpop.f32.mrf.mxu0
    %v2698 = vadd.f32 %v2644, %v2697
    %2699 = vdwg.mxu0
    %v2700 = vand.u32 %v114, 4294901760
    %2701 = vmatpush.msra.mxu0 %v2700
    %v2702 = vand.u32 %v112, 4294901760
    %2703 = vmatpush.msra.mxu0 %v2702
    %v2704 = vand.u32 %v110, 4294901760
    %2705 = vmatpush.msra.mxu0 %v2704
    %v2706 = vand.u32 %v108, 4294901760
    %2707 = vmatpush.msra.mxu0 %v2706
    %v2708 = vand.u32 %v106, 4294901760
    %2709 = vmatpush.msra.mxu0 %v2708
    %v2710 = vand.u32 %v104, 4294901760
    %2711 = vmatpush.msra.mxu0 %v2710
    %v2712 = vand.u32 %v102, 4294901760
    %2713 = vmatpush.msra.mxu0 %v2712
    %v2714 = vand.u32 %v100, 4294901760
    %2715 = vmatpush.msra.mxu0 %v2714
    %v2716 = vand.u32 %v98, 4294901760
    %2717 = vmatpush.msra.mxu0 %v2716
    %v2718 = vand.u32 %v96, 4294901760
    %2719 = vmatpush.msra.mxu0 %v2718
    %v2720 = vand.u32 %v94, 4294901760
    %2721 = vmatpush.msra.mxu0 %v2720
    %v2722 = vand.u32 %v92, 4294901760
    %2723 = vmatpush.msra.mxu0 %v2722
    %v2724 = vand.u32 %v90, 4294901760
    %2725 = vmatpush.msra.mxu0 %v2724
    %v2726 = vand.u32 %v88, 4294901760
    %2727 = vmatpush.msra.mxu0 %v2726
    %v2728 = vand.u32 %v86, 4294901760
    %2729 = vmatpush.msra.mxu0 %v2728
    %v2730 = vand.u32 %v84, 4294901760
    %2731 = vmatpush.msra.mxu0 %v2730
    %v2732 = vand.u32 %v1480, 4294901760
    %v2733 = vsub.f32 %v1480, %v2732
    %v2734 = vand.u32 %v2733, 4294901760
    %2735 = vmatmul.f32.gmra.mxu0 %v2734
    %v2736 = vpop.f32.mrf.mxu0
    %v2737 = vadd.f32 %v2698, %v2736
    %2738 = vdwg.mxu0
    %v2739 = vand.u32 %v114, 4294901760
    %v2740 = vsub.f32 %v114, %v2739
    %v2741 = vand.u32 %v2740, 4294901760
    %2742 = vmatpush.msra.mxu0 %v2741
    %v2743 = vand.u32 %v112, 4294901760
    %v2744 = vsub.f32 %v112, %v2743
    %v2745 = vand.u32 %v2744, 4294901760
    %2746 = vmatpush.msra.mxu0 %v2745
    %v2747 = vand.u32 %v110, 4294901760
    %v2748 = vsub.f32 %v110, %v2747
    %v2749 = vand.u32 %v2748, 4294901760
    %2750 = vmatpush.msra.mxu0 %v2749
    %v2751 = vand.u32 %v108, 4294901760
    %v2752 = vsub.f32 %v108, %v2751
    %v2753 = vand.u32 %v2752, 4294901760
    %2754 = vmatpush.msra.mxu0 %v2753
    %v2755 = vand.u32 %v106, 4294901760
    %v2756 = vsub.f32 %v106, %v2755
    %v2757 = vand.u32 %v2756, 4294901760
    %2758 = vmatpush.msra.mxu0 %v2757
    %v2759 = vand.u32 %v104, 4294901760
    %v2760 = vsub.f32 %v104, %v2759
    %v2761 = vand.u32 %v2760, 4294901760
    %2762 = vmatpush.msra.mxu0 %v2761
    %v2763 = vand.u32 %v102, 4294901760
    %v2764 = vsub.f32 %v102, %v2763
    %v2765 = vand.u32 %v2764, 4294901760
    %2766 = vmatpush.msra.mxu0 %v2765
    %v2767 = vand.u32 %v100, 4294901760
    %v2768 = vsub.f32 %v100, %v2767
    %v2769 = vand.u32 %v2768, 4294901760
    %2770 = vmatpush.msra.mxu0 %v2769
    %v2771 = vand.u32 %v98, 4294901760
    %v2772 = vsub.f32 %v98, %v2771
    %v2773 = vand.u32 %v2772, 4294901760
    %2774 = vmatpush.msra.mxu0 %v2773
    %v2775 = vand.u32 %v96, 4294901760
    %v2776 = vsub.f32 %v96, %v2775
    %v2777 = vand.u32 %v2776, 4294901760
    %2778 = vmatpush.msra.mxu0 %v2777
    %v2779 = vand.u32 %v94, 4294901760
    %v2780 = vsub.f32 %v94, %v2779
    %v2781 = vand.u32 %v2780, 4294901760
    %2782 = vmatpush.msra.mxu0 %v2781
    %v2783 = vand.u32 %v92, 4294901760
    %v2784 = vsub.f32 %v92, %v2783
    %v2785 = vand.u32 %v2784, 4294901760
    %2786 = vmatpush.msra.mxu0 %v2785
    %v2787 = vand.u32 %v90, 4294901760
    %v2788 = vsub.f32 %v90, %v2787
    %v2789 = vand.u32 %v2788, 4294901760
    %2790 = vmatpush.msra.mxu0 %v2789
    %v2791 = vand.u32 %v88, 4294901760
    %v2792 = vsub.f32 %v88, %v2791
    %v2793 = vand.u32 %v2792, 4294901760
    %2794 = vmatpush.msra.mxu0 %v2793
    %v2795 = vand.u32 %v86, 4294901760
    %v2796 = vsub.f32 %v86, %v2795
    %v2797 = vand.u32 %v2796, 4294901760
    %2798 = vmatpush.msra.mxu0 %v2797
    %v2799 = vand.u32 %v84, 4294901760
    %v2800 = vsub.f32 %v84, %v2799
    %v2801 = vand.u32 %v2800, 4294901760
    %2802 = vmatpush.msra.mxu0 %v2801
    %v2803 = vand.u32 %v1480, 4294901760
    %2804 = vmatmul.f32.gmra.mxu0 %v2803
    %v2805 = vpop.f32.mrf.mxu0
    %v2806 = vadd.f32 %v2737, %v2805
    %2807 = vdwg.mxu0
    %v2808 = vand.u32 %v114, 4294901760
    %2809 = vmatpush.msra.mxu0 %v2808
    %v2810 = vand.u32 %v112, 4294901760
    %2811 = vmatpush.msra.mxu0 %v2810
    %v2812 = vand.u32 %v110, 4294901760
    %2813 = vmatpush.msra.mxu0 %v2812
    %v2814 = vand.u32 %v108, 4294901760
    %2815 = vmatpush.msra.mxu0 %v2814
    %v2816 = vand.u32 %v106, 4294901760
    %2817 = vmatpush.msra.mxu0 %v2816
    %v2818 = vand.u32 %v104, 4294901760
    %2819 = vmatpush.msra.mxu0 %v2818
    %v2820 = vand.u32 %v102, 4294901760
    %2821 = vmatpush.msra.mxu0 %v2820
    %v2822 = vand.u32 %v100, 4294901760
    %2823 = vmatpush.msra.mxu0 %v2822
    %v2824 = vand.u32 %v98, 4294901760
    %2825 = vmatpush.msra.mxu0 %v2824
    %v2826 = vand.u32 %v96, 4294901760
    %2827 = vmatpush.msra.mxu0 %v2826
    %v2828 = vand.u32 %v94, 4294901760
    %2829 = vmatpush.msra.mxu0 %v2828
    %v2830 = vand.u32 %v92, 4294901760
    %2831 = vmatpush.msra.mxu0 %v2830
    %v2832 = vand.u32 %v90, 4294901760
    %2833 = vmatpush.msra.mxu0 %v2832
    %v2834 = vand.u32 %v88, 4294901760
    %2835 = vmatpush.msra.mxu0 %v2834
    %v2836 = vand.u32 %v86, 4294901760
    %2837 = vmatpush.msra.mxu0 %v2836
    %v2838 = vand.u32 %v84, 4294901760
    %2839 = vmatpush.msra.mxu0 %v2838
    %v2840 = vand.u32 %v1480, 4294901760
    %2841 = vmatmul.f32.gmra.mxu0 %v2840
    %v2842 = vpop.f32.mrf.mxu0
    %v2843 = vadd.f32 %v2806, %v2842
    %2844 = vdwg.mxu0
    %v2845 = vmax.f32 %v795, 1e-24
    %v2846 = vmax.f32 %v1477, 1e-24
    %v2847 = vrsqrt.pop %v2845
    %v2848 = vmul.f32 %v2847, %v2845
    %v2849 = vmul.f32 %v2848, %v2847
    %v2850 = vmul.f32 0.5, %v2849
    %v2851 = vsub.f32 1.5, %v2850
    %v2852 = vmul.f32 %v2847, %v2851
    %vm2853 = vweird.f32 %v2845
    %vm2854 = vweird.f32 %v2847
    %vm2855 = vmor %vm2853, %vm2854
    %v2856 = vsel %vm2855, %v2847, %v2852
    %v2857 = vrsqrt.pop %v2846
    %v2858 = vmul.f32 %v2857, %v2846
    %v2859 = vmul.f32 %v2858, %v2857
    %v2860 = vmul.f32 0.5, %v2859
    %v2861 = vsub.f32 1.5, %v2860
    %v2862 = vmul.f32 %v2857, %v2861
    %vm2863 = vweird.f32 %v2846
    %vm2864 = vweird.f32 %v2857
    %vm2865 = vmor %vm2863, %vm2864
    %v2866 = vsel %vm2865, %v2857, %v2862
    %v2867 = vmul.f32 %v45, %v2856
    %v2868 = vmul.f32 %v46, %v2866
    %v2869 = vmax.f32 %v2161, 1e-24
    %v2870 = vmax.f32 %v2843, 1e-24
    %v2871 = vrsqrt.pop %v2869
    %v2872 = vmul.f32 %v2871, %v2869
    %v2873 = vmul.f32 %v2872, %v2871
    %v2874 = vmul.f32 0.5, %v2873
    %v2875 = vsub.f32 1.5, %v2874
    %v2876 = vmul.f32 %v2871, %v2875
    %vm2877 = vweird.f32 %v2869
    %vm2878 = vweird.f32 %v2871
    %vm2879 = vmor %vm2877, %vm2878
    %v2880 = vsel %vm2879, %v2871, %v2876
    %v2881 = vrsqrt.pop %v2870
    %v2882 = vmul.f32 %v2881, %v2870
    %v2883 = vmul.f32 %v2882, %v2881
    %v2884 = vmul.f32 0.5, %v2883
    %v2885 = vsub.f32 1.5, %v2884
    %v2886 = vmul.f32 %v2881, %v2885
    %vm2887 = vweird.f32 %v2870
    %vm2888 = vweird.f32 %v2881
    %vm2889 = vmor %vm2887, %vm2888
    %v2890 = vsel %vm2889, %v2881, %v2886
    %v2891 = vmul.f32 %v47, %v2880
    %v2892 = vmul.f32 %v48, %v2890
    %v2893 = vadd.f32 %v2867, %v2891
    %v2894 = vadd.f32 %v2868, %v2892
    %v2895 = vld [vmem:[%s2] sm:$0xff]
    %v2896 = vld [vmem:[%s2 + $0x8] sm:$0xff]
    %v2897 = vld [vmem:[%s2 + $0x10] sm:$0xff]
    %v2898 = vld [vmem:[%s2 + $0x18] sm:$0xff]
    %v2899 = vld [vmem:[%s2 + $0x20] sm:$0xff]
    %v2900 = vld [vmem:[%s2 + $0x28] sm:$0xff]
    %v2901 = vld [vmem:[%s2 + $0x30] sm:$0xff]
    %v2902 = vld [vmem:[%s2 + $0x38] sm:$0xff]
    %v2903 = vld [vmem:[%s2 + $0x40] sm:$0xff]
    %v2904 = vld [vmem:[%s2 + $0x48] sm:$0xff]
    %v2905 = vld [vmem:[%s2 + $0x50] sm:$0xff]
    %v2906 = vld [vmem:[%s2 + $0x58] sm:$0xff]
    %v2907 = vld [vmem:[%s2 + $0x60] sm:$0xff]
    %v2908 = vld [vmem:[%s2 + $0x68] sm:$0xff]
    %v2909 = vld [vmem:[%s2 + $0x70] sm:$0xff]
    %v2910 = vld [vmem:[%s2 + $0x78] sm:$0xff]
    %v2911 = vld [vmem:[%s2 + $0x80] sm:$0xff]
    %v2912 = vld [vmem:[%s2 + $0x88] sm:$0xff]
    %v2913 = vld [vmem:[%s2 + $0x90] sm:$0xff]
    %v2914 = vld [vmem:[%s2 + $0x98] sm:$0xff]
    %v2915 = vld [vmem:[%s2 + $0xa0] sm:$0xff]
    %v2916 = vld [vmem:[%s2 + $0xa8] sm:$0xff]
    %v2917 = vld [vmem:[%s2 + $0xb0] sm:$0xff]
    %v2918 = vld [vmem:[%s2 + $0xb8] sm:$0xff]
    %v2919 = vld [vmem:[%s2 + $0xc0] sm:$0xff]
    %v2920 = vld [vmem:[%s2 + $0xc8] sm:$0xff]
    %v2921 = vld [vmem:[%s2 + $0xd0] sm:$0xff]
    %v2922 = vld [vmem:[%s2 + $0xd8] sm:$0xff]
    %v2923 = vld [vmem:[%s2 + $0xe0] sm:$0xff]
    %v2924 = vld [vmem:[%s2 + $0xe8] sm:$0xff]
    %v2925 = vld [vmem:[%s2 + $0xf0] sm:$0xff]
    %v2926 = vld [vmem:[%s2 + $0xf8] sm:$0xff]
    %v2927 = vand.u32 %v2910, 4294901760
    %2928 = vmatpush.msra.mxu0 %v2927
    %v2929 = vand.u32 %v2909, 4294901760
    %2930 = vmatpush.msra.mxu0 %v2929
    %v2931 = vand.u32 %v2908, 4294901760
    %2932 = vmatpush.msra.mxu0 %v2931
    %v2933 = vand.u32 %v2907, 4294901760
    %2934 = vmatpush.msra.mxu0 %v2933
    %v2935 = vand.u32 %v2906, 4294901760
    %2936 = vmatpush.msra.mxu0 %v2935
    %v2937 = vand.u32 %v2905, 4294901760
    %2938 = vmatpush.msra.mxu0 %v2937
    %v2939 = vand.u32 %v2904, 4294901760
    %2940 = vmatpush.msra.mxu0 %v2939
    %v2941 = vand.u32 %v2903, 4294901760
    %2942 = vmatpush.msra.mxu0 %v2941
    %v2943 = vand.u32 %v2902, 4294901760
    %2944 = vmatpush.msra.mxu0 %v2943
    %v2945 = vand.u32 %v2901, 4294901760
    %2946 = vmatpush.msra.mxu0 %v2945
    %v2947 = vand.u32 %v2900, 4294901760
    %2948 = vmatpush.msra.mxu0 %v2947
    %v2949 = vand.u32 %v2899, 4294901760
    %2950 = vmatpush.msra.mxu0 %v2949
    %v2951 = vand.u32 %v2898, 4294901760
    %2952 = vmatpush.msra.mxu0 %v2951
    %v2953 = vand.u32 %v2897, 4294901760
    %2954 = vmatpush.msra.mxu0 %v2953
    %v2955 = vand.u32 %v2896, 4294901760
    %2956 = vmatpush.msra.mxu0 %v2955
    %v2957 = vand.u32 %v2895, 4294901760
    %2958 = vmatpush.msra.mxu0 %v2957
    %v2959 = vand.u32 %v2893, 4294901760
    %v2960 = vsub.f32 %v2893, %v2959
    %v2961 = vand.u32 %v2960, 4294901760
    %v2962 = vsub.f32 %v2960, %v2961
    %v2963 = vand.u32 %v2962, 4294901760
    %2964 = vmatmul.f32.gmra.mxu0 %v2963
    %v2965 = vpop.f32.mrf.mxu0
    %v2966 = vadd.f32 0.0, %v2965
    %2967 = vdwg.mxu0
    %v2968 = vand.u32 %v2910, 4294901760
    %v2969 = vsub.f32 %v2910, %v2968
    %v2970 = vand.u32 %v2969, 4294901760
    %v2971 = vsub.f32 %v2969, %v2970
    %v2972 = vand.u32 %v2971, 4294901760
    %2973 = vmatpush.msra.mxu0 %v2972
    %v2974 = vand.u32 %v2909, 4294901760
    %v2975 = vsub.f32 %v2909, %v2974
    %v2976 = vand.u32 %v2975, 4294901760
    %v2977 = vsub.f32 %v2975, %v2976
    %v2978 = vand.u32 %v2977, 4294901760
    %2979 = vmatpush.msra.mxu0 %v2978
    %v2980 = vand.u32 %v2908, 4294901760
    %v2981 = vsub.f32 %v2908, %v2980
    %v2982 = vand.u32 %v2981, 4294901760
    %v2983 = vsub.f32 %v2981, %v2982
    %v2984 = vand.u32 %v2983, 4294901760
    %2985 = vmatpush.msra.mxu0 %v2984
    %v2986 = vand.u32 %v2907, 4294901760
    %v2987 = vsub.f32 %v2907, %v2986
    %v2988 = vand.u32 %v2987, 4294901760
    %v2989 = vsub.f32 %v2987, %v2988
    %v2990 = vand.u32 %v2989, 4294901760
    %2991 = vmatpush.msra.mxu0 %v2990
    %v2992 = vand.u32 %v2906, 4294901760
    %v2993 = vsub.f32 %v2906, %v2992
    %v2994 = vand.u32 %v2993, 4294901760
    %v2995 = vsub.f32 %v2993, %v2994
    %v2996 = vand.u32 %v2995, 4294901760
    %2997 = vmatpush.msra.mxu0 %v2996
    %v2998 = vand.u32 %v2905, 4294901760
    %v2999 = vsub.f32 %v2905, %v2998
    %v3000 = vand.u32 %v2999, 4294901760
    %v3001 = vsub.f32 %v2999, %v3000
    %v3002 = vand.u32 %v3001, 4294901760
    %3003 = vmatpush.msra.mxu0 %v3002
    %v3004 = vand.u32 %v2904, 4294901760
    %v3005 = vsub.f32 %v2904, %v3004
    %v3006 = vand.u32 %v3005, 4294901760
    %v3007 = vsub.f32 %v3005, %v3006
    %v3008 = vand.u32 %v3007, 4294901760
    %3009 = vmatpush.msra.mxu0 %v3008
    %v3010 = vand.u32 %v2903, 4294901760
    %v3011 = vsub.f32 %v2903, %v3010
    %v3012 = vand.u32 %v3011, 4294901760
    %v3013 = vsub.f32 %v3011, %v3012
    %v3014 = vand.u32 %v3013, 4294901760
    %3015 = vmatpush.msra.mxu0 %v3014
    %v3016 = vand.u32 %v2902, 4294901760
    %v3017 = vsub.f32 %v2902, %v3016
    %v3018 = vand.u32 %v3017, 4294901760
    %v3019 = vsub.f32 %v3017, %v3018
    %v3020 = vand.u32 %v3019, 4294901760
    %3021 = vmatpush.msra.mxu0 %v3020
    %v3022 = vand.u32 %v2901, 4294901760
    %v3023 = vsub.f32 %v2901, %v3022
    %v3024 = vand.u32 %v3023, 4294901760
    %v3025 = vsub.f32 %v3023, %v3024
    %v3026 = vand.u32 %v3025, 4294901760
    %3027 = vmatpush.msra.mxu0 %v3026
    %v3028 = vand.u32 %v2900, 4294901760
    %v3029 = vsub.f32 %v2900, %v3028
    %v3030 = vand.u32 %v3029, 4294901760
    %v3031 = vsub.f32 %v3029, %v3030
    %v3032 = vand.u32 %v3031, 4294901760
    %3033 = vmatpush.msra.mxu0 %v3032
    %v3034 = vand.u32 %v2899, 4294901760
    %v3035 = vsub.f32 %v2899, %v3034
    %v3036 = vand.u32 %v3035, 4294901760
    %v3037 = vsub.f32 %v3035, %v3036
    %v3038 = vand.u32 %v3037, 4294901760
    %3039 = vmatpush.msra.mxu0 %v3038
    %v3040 = vand.u32 %v2898, 4294901760
    %v3041 = vsub.f32 %v2898, %v3040
    %v3042 = vand.u32 %v3041, 4294901760
    %v3043 = vsub.f32 %v3041, %v3042
    %v3044 = vand.u32 %v3043, 4294901760
    %3045 = vmatpush.msra.mxu0 %v3044
    %v3046 = vand.u32 %v2897, 4294901760
    %v3047 = vsub.f32 %v2897, %v3046
    %v3048 = vand.u32 %v3047, 4294901760
    %v3049 = vsub.f32 %v3047, %v3048
    %v3050 = vand.u32 %v3049, 4294901760
    %3051 = vmatpush.msra.mxu0 %v3050
    %v3052 = vand.u32 %v2896, 4294901760
    %v3053 = vsub.f32 %v2896, %v3052
    %v3054 = vand.u32 %v3053, 4294901760
    %v3055 = vsub.f32 %v3053, %v3054
    %v3056 = vand.u32 %v3055, 4294901760
    %3057 = vmatpush.msra.mxu0 %v3056
    %v3058 = vand.u32 %v2895, 4294901760
    %v3059 = vsub.f32 %v2895, %v3058
    %v3060 = vand.u32 %v3059, 4294901760
    %v3061 = vsub.f32 %v3059, %v3060
    %v3062 = vand.u32 %v3061, 4294901760
    %3063 = vmatpush.msra.mxu0 %v3062
    %v3064 = vand.u32 %v2893, 4294901760
    %3065 = vmatmul.f32.gmra.mxu0 %v3064
    %v3066 = vpop.f32.mrf.mxu0
    %v3067 = vadd.f32 %v2966, %v3066
    %3068 = vdwg.mxu0
    %v3069 = vand.u32 %v2910, 4294901760
    %v3070 = vsub.f32 %v2910, %v3069
    %3071 = vmatpush.msra.mxu0 %v3070
    %v3072 = vand.u32 %v2909, 4294901760
    %v3073 = vsub.f32 %v2909, %v3072
    %3074 = vmatpush.msra.mxu0 %v3073
    %v3075 = vand.u32 %v2908, 4294901760
    %v3076 = vsub.f32 %v2908, %v3075
    %3077 = vmatpush.msra.mxu0 %v3076
    %v3078 = vand.u32 %v2907, 4294901760
    %v3079 = vsub.f32 %v2907, %v3078
    %3080 = vmatpush.msra.mxu0 %v3079
    %v3081 = vand.u32 %v2906, 4294901760
    %v3082 = vsub.f32 %v2906, %v3081
    %3083 = vmatpush.msra.mxu0 %v3082
    %v3084 = vand.u32 %v2905, 4294901760
    %v3085 = vsub.f32 %v2905, %v3084
    %3086 = vmatpush.msra.mxu0 %v3085
    %v3087 = vand.u32 %v2904, 4294901760
    %v3088 = vsub.f32 %v2904, %v3087
    %3089 = vmatpush.msra.mxu0 %v3088
    %v3090 = vand.u32 %v2903, 4294901760
    %v3091 = vsub.f32 %v2903, %v3090
    %3092 = vmatpush.msra.mxu0 %v3091
    %v3093 = vand.u32 %v2902, 4294901760
    %v3094 = vsub.f32 %v2902, %v3093
    %3095 = vmatpush.msra.mxu0 %v3094
    %v3096 = vand.u32 %v2901, 4294901760
    %v3097 = vsub.f32 %v2901, %v3096
    %3098 = vmatpush.msra.mxu0 %v3097
    %v3099 = vand.u32 %v2900, 4294901760
    %v3100 = vsub.f32 %v2900, %v3099
    %3101 = vmatpush.msra.mxu0 %v3100
    %v3102 = vand.u32 %v2899, 4294901760
    %v3103 = vsub.f32 %v2899, %v3102
    %3104 = vmatpush.msra.mxu0 %v3103
    %v3105 = vand.u32 %v2898, 4294901760
    %v3106 = vsub.f32 %v2898, %v3105
    %3107 = vmatpush.msra.mxu0 %v3106
    %v3108 = vand.u32 %v2897, 4294901760
    %v3109 = vsub.f32 %v2897, %v3108
    %3110 = vmatpush.msra.mxu0 %v3109
    %v3111 = vand.u32 %v2896, 4294901760
    %v3112 = vsub.f32 %v2896, %v3111
    %3113 = vmatpush.msra.mxu0 %v3112
    %v3114 = vand.u32 %v2895, 4294901760
    %v3115 = vsub.f32 %v2895, %v3114
    %3116 = vmatpush.msra.mxu0 %v3115
    %v3117 = vand.u32 %v2893, 4294901760
    %v3118 = vsub.f32 %v2893, %v3117
    %3119 = vmatmul.f32.gmra.mxu0 %v3118
    %v3120 = vpop.f32.mrf.mxu0
    %v3121 = vadd.f32 %v3067, %v3120
    %3122 = vdwg.mxu0
    %v3123 = vand.u32 %v2910, 4294901760
    %3124 = vmatpush.msra.mxu0 %v3123
    %v3125 = vand.u32 %v2909, 4294901760
    %3126 = vmatpush.msra.mxu0 %v3125
    %v3127 = vand.u32 %v2908, 4294901760
    %3128 = vmatpush.msra.mxu0 %v3127
    %v3129 = vand.u32 %v2907, 4294901760
    %3130 = vmatpush.msra.mxu0 %v3129
    %v3131 = vand.u32 %v2906, 4294901760
    %3132 = vmatpush.msra.mxu0 %v3131
    %v3133 = vand.u32 %v2905, 4294901760
    %3134 = vmatpush.msra.mxu0 %v3133
    %v3135 = vand.u32 %v2904, 4294901760
    %3136 = vmatpush.msra.mxu0 %v3135
    %v3137 = vand.u32 %v2903, 4294901760
    %3138 = vmatpush.msra.mxu0 %v3137
    %v3139 = vand.u32 %v2902, 4294901760
    %3140 = vmatpush.msra.mxu0 %v3139
    %v3141 = vand.u32 %v2901, 4294901760
    %3142 = vmatpush.msra.mxu0 %v3141
    %v3143 = vand.u32 %v2900, 4294901760
    %3144 = vmatpush.msra.mxu0 %v3143
    %v3145 = vand.u32 %v2899, 4294901760
    %3146 = vmatpush.msra.mxu0 %v3145
    %v3147 = vand.u32 %v2898, 4294901760
    %3148 = vmatpush.msra.mxu0 %v3147
    %v3149 = vand.u32 %v2897, 4294901760
    %3150 = vmatpush.msra.mxu0 %v3149
    %v3151 = vand.u32 %v2896, 4294901760
    %3152 = vmatpush.msra.mxu0 %v3151
    %v3153 = vand.u32 %v2895, 4294901760
    %3154 = vmatpush.msra.mxu0 %v3153
    %v3155 = vand.u32 %v2893, 4294901760
    %v3156 = vsub.f32 %v2893, %v3155
    %v3157 = vand.u32 %v3156, 4294901760
    %3158 = vmatmul.f32.gmra.mxu0 %v3157
    %v3159 = vpop.f32.mrf.mxu0
    %v3160 = vadd.f32 %v3121, %v3159
    %3161 = vdwg.mxu0
    %v3162 = vand.u32 %v2910, 4294901760
    %v3163 = vsub.f32 %v2910, %v3162
    %v3164 = vand.u32 %v3163, 4294901760
    %3165 = vmatpush.msra.mxu0 %v3164
    %v3166 = vand.u32 %v2909, 4294901760
    %v3167 = vsub.f32 %v2909, %v3166
    %v3168 = vand.u32 %v3167, 4294901760
    %3169 = vmatpush.msra.mxu0 %v3168
    %v3170 = vand.u32 %v2908, 4294901760
    %v3171 = vsub.f32 %v2908, %v3170
    %v3172 = vand.u32 %v3171, 4294901760
    %3173 = vmatpush.msra.mxu0 %v3172
    %v3174 = vand.u32 %v2907, 4294901760
    %v3175 = vsub.f32 %v2907, %v3174
    %v3176 = vand.u32 %v3175, 4294901760
    %3177 = vmatpush.msra.mxu0 %v3176
    %v3178 = vand.u32 %v2906, 4294901760
    %v3179 = vsub.f32 %v2906, %v3178
    %v3180 = vand.u32 %v3179, 4294901760
    %3181 = vmatpush.msra.mxu0 %v3180
    %v3182 = vand.u32 %v2905, 4294901760
    %v3183 = vsub.f32 %v2905, %v3182
    %v3184 = vand.u32 %v3183, 4294901760
    %3185 = vmatpush.msra.mxu0 %v3184
    %v3186 = vand.u32 %v2904, 4294901760
    %v3187 = vsub.f32 %v2904, %v3186
    %v3188 = vand.u32 %v3187, 4294901760
    %3189 = vmatpush.msra.mxu0 %v3188
    %v3190 = vand.u32 %v2903, 4294901760
    %v3191 = vsub.f32 %v2903, %v3190
    %v3192 = vand.u32 %v3191, 4294901760
    %3193 = vmatpush.msra.mxu0 %v3192
    %v3194 = vand.u32 %v2902, 4294901760
    %v3195 = vsub.f32 %v2902, %v3194
    %v3196 = vand.u32 %v3195, 4294901760
    %3197 = vmatpush.msra.mxu0 %v3196
    %v3198 = vand.u32 %v2901, 4294901760
    %v3199 = vsub.f32 %v2901, %v3198
    %v3200 = vand.u32 %v3199, 4294901760
    %3201 = vmatpush.msra.mxu0 %v3200
    %v3202 = vand.u32 %v2900, 4294901760
    %v3203 = vsub.f32 %v2900, %v3202
    %v3204 = vand.u32 %v3203, 4294901760
    %3205 = vmatpush.msra.mxu0 %v3204
    %v3206 = vand.u32 %v2899, 4294901760
    %v3207 = vsub.f32 %v2899, %v3206
    %v3208 = vand.u32 %v3207, 4294901760
    %3209 = vmatpush.msra.mxu0 %v3208
    %v3210 = vand.u32 %v2898, 4294901760
    %v3211 = vsub.f32 %v2898, %v3210
    %v3212 = vand.u32 %v3211, 4294901760
    %3213 = vmatpush.msra.mxu0 %v3212
    %v3214 = vand.u32 %v2897, 4294901760
    %v3215 = vsub.f32 %v2897, %v3214
    %v3216 = vand.u32 %v3215, 4294901760
    %3217 = vmatpush.msra.mxu0 %v3216
    %v3218 = vand.u32 %v2896, 4294901760
    %v3219 = vsub.f32 %v2896, %v3218
    %v3220 = vand.u32 %v3219, 4294901760
    %3221 = vmatpush.msra.mxu0 %v3220
    %v3222 = vand.u32 %v2895, 4294901760
    %v3223 = vsub.f32 %v2895, %v3222
    %v3224 = vand.u32 %v3223, 4294901760
    %3225 = vmatpush.msra.mxu0 %v3224
    %v3226 = vand.u32 %v2893, 4294901760
    %3227 = vmatmul.f32.gmra.mxu0 %v3226
    %v3228 = vpop.f32.mrf.mxu0
    %v3229 = vadd.f32 %v3160, %v3228
    %3230 = vdwg.mxu0
    %v3231 = vand.u32 %v2910, 4294901760
    %3232 = vmatpush.msra.mxu0 %v3231
    %v3233 = vand.u32 %v2909, 4294901760
    %3234 = vmatpush.msra.mxu0 %v3233
    %v3235 = vand.u32 %v2908, 4294901760
    %3236 = vmatpush.msra.mxu0 %v3235
    %v3237 = vand.u32 %v2907, 4294901760
    %3238 = vmatpush.msra.mxu0 %v3237
    %v3239 = vand.u32 %v2906, 4294901760
    %3240 = vmatpush.msra.mxu0 %v3239
    %v3241 = vand.u32 %v2905, 4294901760
    %3242 = vmatpush.msra.mxu0 %v3241
    %v3243 = vand.u32 %v2904, 4294901760
    %3244 = vmatpush.msra.mxu0 %v3243
    %v3245 = vand.u32 %v2903, 4294901760
    %3246 = vmatpush.msra.mxu0 %v3245
    %v3247 = vand.u32 %v2902, 4294901760
    %3248 = vmatpush.msra.mxu0 %v3247
    %v3249 = vand.u32 %v2901, 4294901760
    %3250 = vmatpush.msra.mxu0 %v3249
    %v3251 = vand.u32 %v2900, 4294901760
    %3252 = vmatpush.msra.mxu0 %v3251
    %v3253 = vand.u32 %v2899, 4294901760
    %3254 = vmatpush.msra.mxu0 %v3253
    %v3255 = vand.u32 %v2898, 4294901760
    %3256 = vmatpush.msra.mxu0 %v3255
    %v3257 = vand.u32 %v2897, 4294901760
    %3258 = vmatpush.msra.mxu0 %v3257
    %v3259 = vand.u32 %v2896, 4294901760
    %3260 = vmatpush.msra.mxu0 %v3259
    %v3261 = vand.u32 %v2895, 4294901760
    %3262 = vmatpush.msra.mxu0 %v3261
    %v3263 = vand.u32 %v2893, 4294901760
    %3264 = vmatmul.f32.gmra.mxu0 %v3263
    %v3265 = vpop.f32.mrf.mxu0
    %v3266 = vadd.f32 %v3229, %v3265
    %3267 = vdwg.mxu0
    %v3268 = vand.u32 %v2926, 4294901760
    %3269 = vmatpush.msra.mxu0 %v3268
    %v3270 = vand.u32 %v2925, 4294901760
    %3271 = vmatpush.msra.mxu0 %v3270
    %v3272 = vand.u32 %v2924, 4294901760
    %3273 = vmatpush.msra.mxu0 %v3272
    %v3274 = vand.u32 %v2923, 4294901760
    %3275 = vmatpush.msra.mxu0 %v3274
    %v3276 = vand.u32 %v2922, 4294901760
    %3277 = vmatpush.msra.mxu0 %v3276
    %v3278 = vand.u32 %v2921, 4294901760
    %3279 = vmatpush.msra.mxu0 %v3278
    %v3280 = vand.u32 %v2920, 4294901760
    %3281 = vmatpush.msra.mxu0 %v3280
    %v3282 = vand.u32 %v2919, 4294901760
    %3283 = vmatpush.msra.mxu0 %v3282
    %v3284 = vand.u32 %v2918, 4294901760
    %3285 = vmatpush.msra.mxu0 %v3284
    %v3286 = vand.u32 %v2917, 4294901760
    %3287 = vmatpush.msra.mxu0 %v3286
    %v3288 = vand.u32 %v2916, 4294901760
    %3289 = vmatpush.msra.mxu0 %v3288
    %v3290 = vand.u32 %v2915, 4294901760
    %3291 = vmatpush.msra.mxu0 %v3290
    %v3292 = vand.u32 %v2914, 4294901760
    %3293 = vmatpush.msra.mxu0 %v3292
    %v3294 = vand.u32 %v2913, 4294901760
    %3295 = vmatpush.msra.mxu0 %v3294
    %v3296 = vand.u32 %v2912, 4294901760
    %3297 = vmatpush.msra.mxu0 %v3296
    %v3298 = vand.u32 %v2911, 4294901760
    %3299 = vmatpush.msra.mxu0 %v3298
    %v3300 = vand.u32 %v2894, 4294901760
    %v3301 = vsub.f32 %v2894, %v3300
    %v3302 = vand.u32 %v3301, 4294901760
    %v3303 = vsub.f32 %v3301, %v3302
    %v3304 = vand.u32 %v3303, 4294901760
    %3305 = vmatmul.f32.gmra.mxu0 %v3304
    %v3306 = vpop.f32.mrf.mxu0
    %v3307 = vadd.f32 %v3266, %v3306
    %3308 = vdwg.mxu0
    %v3309 = vand.u32 %v2926, 4294901760
    %v3310 = vsub.f32 %v2926, %v3309
    %v3311 = vand.u32 %v3310, 4294901760
    %v3312 = vsub.f32 %v3310, %v3311
    %v3313 = vand.u32 %v3312, 4294901760
    %3314 = vmatpush.msra.mxu0 %v3313
    %v3315 = vand.u32 %v2925, 4294901760
    %v3316 = vsub.f32 %v2925, %v3315
    %v3317 = vand.u32 %v3316, 4294901760
    %v3318 = vsub.f32 %v3316, %v3317
    %v3319 = vand.u32 %v3318, 4294901760
    %3320 = vmatpush.msra.mxu0 %v3319
    %v3321 = vand.u32 %v2924, 4294901760
    %v3322 = vsub.f32 %v2924, %v3321
    %v3323 = vand.u32 %v3322, 4294901760
    %v3324 = vsub.f32 %v3322, %v3323
    %v3325 = vand.u32 %v3324, 4294901760
    %3326 = vmatpush.msra.mxu0 %v3325
    %v3327 = vand.u32 %v2923, 4294901760
    %v3328 = vsub.f32 %v2923, %v3327
    %v3329 = vand.u32 %v3328, 4294901760
    %v3330 = vsub.f32 %v3328, %v3329
    %v3331 = vand.u32 %v3330, 4294901760
    %3332 = vmatpush.msra.mxu0 %v3331
    %v3333 = vand.u32 %v2922, 4294901760
    %v3334 = vsub.f32 %v2922, %v3333
    %v3335 = vand.u32 %v3334, 4294901760
    %v3336 = vsub.f32 %v3334, %v3335
    %v3337 = vand.u32 %v3336, 4294901760
    %3338 = vmatpush.msra.mxu0 %v3337
    %v3339 = vand.u32 %v2921, 4294901760
    %v3340 = vsub.f32 %v2921, %v3339
    %v3341 = vand.u32 %v3340, 4294901760
    %v3342 = vsub.f32 %v3340, %v3341
    %v3343 = vand.u32 %v3342, 4294901760
    %3344 = vmatpush.msra.mxu0 %v3343
    %v3345 = vand.u32 %v2920, 4294901760
    %v3346 = vsub.f32 %v2920, %v3345
    %v3347 = vand.u32 %v3346, 4294901760
    %v3348 = vsub.f32 %v3346, %v3347
    %v3349 = vand.u32 %v3348, 4294901760
    %3350 = vmatpush.msra.mxu0 %v3349
    %v3351 = vand.u32 %v2919, 4294901760
    %v3352 = vsub.f32 %v2919, %v3351
    %v3353 = vand.u32 %v3352, 4294901760
    %v3354 = vsub.f32 %v3352, %v3353
    %v3355 = vand.u32 %v3354, 4294901760
    %3356 = vmatpush.msra.mxu0 %v3355
    %v3357 = vand.u32 %v2918, 4294901760
    %v3358 = vsub.f32 %v2918, %v3357
    %v3359 = vand.u32 %v3358, 4294901760
    %v3360 = vsub.f32 %v3358, %v3359
    %v3361 = vand.u32 %v3360, 4294901760
    %3362 = vmatpush.msra.mxu0 %v3361
    %v3363 = vand.u32 %v2917, 4294901760
    %v3364 = vsub.f32 %v2917, %v3363
    %v3365 = vand.u32 %v3364, 4294901760
    %v3366 = vsub.f32 %v3364, %v3365
    %v3367 = vand.u32 %v3366, 4294901760
    %3368 = vmatpush.msra.mxu0 %v3367
    %v3369 = vand.u32 %v2916, 4294901760
    %v3370 = vsub.f32 %v2916, %v3369
    %v3371 = vand.u32 %v3370, 4294901760
    %v3372 = vsub.f32 %v3370, %v3371
    %v3373 = vand.u32 %v3372, 4294901760
    %3374 = vmatpush.msra.mxu0 %v3373
    %v3375 = vand.u32 %v2915, 4294901760
    %v3376 = vsub.f32 %v2915, %v3375
    %v3377 = vand.u32 %v3376, 4294901760
    %v3378 = vsub.f32 %v3376, %v3377
    %v3379 = vand.u32 %v3378, 4294901760
    %3380 = vmatpush.msra.mxu0 %v3379
    %v3381 = vand.u32 %v2914, 4294901760
    %v3382 = vsub.f32 %v2914, %v3381
    %v3383 = vand.u32 %v3382, 4294901760
    %v3384 = vsub.f32 %v3382, %v3383
    %v3385 = vand.u32 %v3384, 4294901760
    %3386 = vmatpush.msra.mxu0 %v3385
    %v3387 = vand.u32 %v2913, 4294901760
    %v3388 = vsub.f32 %v2913, %v3387
    %v3389 = vand.u32 %v3388, 4294901760
    %v3390 = vsub.f32 %v3388, %v3389
    %v3391 = vand.u32 %v3390, 4294901760
    %3392 = vmatpush.msra.mxu0 %v3391
    %v3393 = vand.u32 %v2912, 4294901760
    %v3394 = vsub.f32 %v2912, %v3393
    %v3395 = vand.u32 %v3394, 4294901760
    %v3396 = vsub.f32 %v3394, %v3395
    %v3397 = vand.u32 %v3396, 4294901760
    %3398 = vmatpush.msra.mxu0 %v3397
    %v3399 = vand.u32 %v2911, 4294901760
    %v3400 = vsub.f32 %v2911, %v3399
    %v3401 = vand.u32 %v3400, 4294901760
    %v3402 = vsub.f32 %v3400, %v3401
    %v3403 = vand.u32 %v3402, 4294901760
    %3404 = vmatpush.msra.mxu0 %v3403
    %v3405 = vand.u32 %v2894, 4294901760
    %3406 = vmatmul.f32.gmra.mxu0 %v3405
    %v3407 = vpop.f32.mrf.mxu0
    %v3408 = vadd.f32 %v3307, %v3407
    %3409 = vdwg.mxu0
    %v3410 = vand.u32 %v2926, 4294901760
    %v3411 = vsub.f32 %v2926, %v3410
    %3412 = vmatpush.msra.mxu0 %v3411
    %v3413 = vand.u32 %v2925, 4294901760
    %v3414 = vsub.f32 %v2925, %v3413
    %3415 = vmatpush.msra.mxu0 %v3414
    %v3416 = vand.u32 %v2924, 4294901760
    %v3417 = vsub.f32 %v2924, %v3416
    %3418 = vmatpush.msra.mxu0 %v3417
    %v3419 = vand.u32 %v2923, 4294901760
    %v3420 = vsub.f32 %v2923, %v3419
    %3421 = vmatpush.msra.mxu0 %v3420
    %v3422 = vand.u32 %v2922, 4294901760
    %v3423 = vsub.f32 %v2922, %v3422
    %3424 = vmatpush.msra.mxu0 %v3423
    %v3425 = vand.u32 %v2921, 4294901760
    %v3426 = vsub.f32 %v2921, %v3425
    %3427 = vmatpush.msra.mxu0 %v3426
    %v3428 = vand.u32 %v2920, 4294901760
    %v3429 = vsub.f32 %v2920, %v3428
    %3430 = vmatpush.msra.mxu0 %v3429
    %v3431 = vand.u32 %v2919, 4294901760
    %v3432 = vsub.f32 %v2919, %v3431
    %3433 = vmatpush.msra.mxu0 %v3432
    %v3434 = vand.u32 %v2918, 4294901760
    %v3435 = vsub.f32 %v2918, %v3434
    %3436 = vmatpush.msra.mxu0 %v3435
    %v3437 = vand.u32 %v2917, 4294901760
    %v3438 = vsub.f32 %v2917, %v3437
    %3439 = vmatpush.msra.mxu0 %v3438
    %v3440 = vand.u32 %v2916, 4294901760
    %v3441 = vsub.f32 %v2916, %v3440
    %3442 = vmatpush.msra.mxu0 %v3441
    %v3443 = vand.u32 %v2915, 4294901760
    %v3444 = vsub.f32 %v2915, %v3443
    %3445 = vmatpush.msra.mxu0 %v3444
    %v3446 = vand.u32 %v2914, 4294901760
    %v3447 = vsub.f32 %v2914, %v3446
    %3448 = vmatpush.msra.mxu0 %v3447
    %v3449 = vand.u32 %v2913, 4294901760
    %v3450 = vsub.f32 %v2913, %v3449
    %3451 = vmatpush.msra.mxu0 %v3450
    %v3452 = vand.u32 %v2912, 4294901760
    %v3453 = vsub.f32 %v2912, %v3452
    %3454 = vmatpush.msra.mxu0 %v3453
    %v3455 = vand.u32 %v2911, 4294901760
    %v3456 = vsub.f32 %v2911, %v3455
    %3457 = vmatpush.msra.mxu0 %v3456
    %v3458 = vand.u32 %v2894, 4294901760
    %v3459 = vsub.f32 %v2894, %v3458
    %3460 = vmatmul.f32.gmra.mxu0 %v3459
    %v3461 = vpop.f32.mrf.mxu0
    %v3462 = vadd.f32 %v3408, %v3461
    %3463 = vdwg.mxu0
    %v3464 = vand.u32 %v2926, 4294901760
    %3465 = vmatpush.msra.mxu0 %v3464
    %v3466 = vand.u32 %v2925, 4294901760
    %3467 = vmatpush.msra.mxu0 %v3466
    %v3468 = vand.u32 %v2924, 4294901760
    %3469 = vmatpush.msra.mxu0 %v3468
    %v3470 = vand.u32 %v2923, 4294901760
    %3471 = vmatpush.msra.mxu0 %v3470
    %v3472 = vand.u32 %v2922, 4294901760
    %3473 = vmatpush.msra.mxu0 %v3472
    %v3474 = vand.u32 %v2921, 4294901760
    %3475 = vmatpush.msra.mxu0 %v3474
    %v3476 = vand.u32 %v2920, 4294901760
    %3477 = vmatpush.msra.mxu0 %v3476
    %v3478 = vand.u32 %v2919, 4294901760
    %3479 = vmatpush.msra.mxu0 %v3478
    %v3480 = vand.u32 %v2918, 4294901760
    %3481 = vmatpush.msra.mxu0 %v3480
    %v3482 = vand.u32 %v2917, 4294901760
    %3483 = vmatpush.msra.mxu0 %v3482
    %v3484 = vand.u32 %v2916, 4294901760
    %3485 = vmatpush.msra.mxu0 %v3484
    %v3486 = vand.u32 %v2915, 4294901760
    %3487 = vmatpush.msra.mxu0 %v3486
    %v3488 = vand.u32 %v2914, 4294901760
    %3489 = vmatpush.msra.mxu0 %v3488
    %v3490 = vand.u32 %v2913, 4294901760
    %3491 = vmatpush.msra.mxu0 %v3490
    %v3492 = vand.u32 %v2912, 4294901760
    %3493 = vmatpush.msra.mxu0 %v3492
    %v3494 = vand.u32 %v2911, 4294901760
    %3495 = vmatpush.msra.mxu0 %v3494
    %v3496 = vand.u32 %v2894, 4294901760
    %v3497 = vsub.f32 %v2894, %v3496
    %v3498 = vand.u32 %v3497, 4294901760
    %3499 = vmatmul.f32.gmra.mxu0 %v3498
    %v3500 = vpop.f32.mrf.mxu0
    %v3501 = vadd.f32 %v3462, %v3500
    %3502 = vdwg.mxu0
    %v3503 = vand.u32 %v2926, 4294901760
    %v3504 = vsub.f32 %v2926, %v3503
    %v3505 = vand.u32 %v3504, 4294901760
    %3506 = vmatpush.msra.mxu0 %v3505
    %v3507 = vand.u32 %v2925, 4294901760
    %v3508 = vsub.f32 %v2925, %v3507
    %v3509 = vand.u32 %v3508, 4294901760
    %3510 = vmatpush.msra.mxu0 %v3509
    %v3511 = vand.u32 %v2924, 4294901760
    %v3512 = vsub.f32 %v2924, %v3511
    %v3513 = vand.u32 %v3512, 4294901760
    %3514 = vmatpush.msra.mxu0 %v3513
    %v3515 = vand.u32 %v2923, 4294901760
    %v3516 = vsub.f32 %v2923, %v3515
    %v3517 = vand.u32 %v3516, 4294901760
    %3518 = vmatpush.msra.mxu0 %v3517
    %v3519 = vand.u32 %v2922, 4294901760
    %v3520 = vsub.f32 %v2922, %v3519
    %v3521 = vand.u32 %v3520, 4294901760
    %3522 = vmatpush.msra.mxu0 %v3521
    %v3523 = vand.u32 %v2921, 4294901760
    %v3524 = vsub.f32 %v2921, %v3523
    %v3525 = vand.u32 %v3524, 4294901760
    %3526 = vmatpush.msra.mxu0 %v3525
    %v3527 = vand.u32 %v2920, 4294901760
    %v3528 = vsub.f32 %v2920, %v3527
    %v3529 = vand.u32 %v3528, 4294901760
    %3530 = vmatpush.msra.mxu0 %v3529
    %v3531 = vand.u32 %v2919, 4294901760
    %v3532 = vsub.f32 %v2919, %v3531
    %v3533 = vand.u32 %v3532, 4294901760
    %3534 = vmatpush.msra.mxu0 %v3533
    %v3535 = vand.u32 %v2918, 4294901760
    %v3536 = vsub.f32 %v2918, %v3535
    %v3537 = vand.u32 %v3536, 4294901760
    %3538 = vmatpush.msra.mxu0 %v3537
    %v3539 = vand.u32 %v2917, 4294901760
    %v3540 = vsub.f32 %v2917, %v3539
    %v3541 = vand.u32 %v3540, 4294901760
    %3542 = vmatpush.msra.mxu0 %v3541
    %v3543 = vand.u32 %v2916, 4294901760
    %v3544 = vsub.f32 %v2916, %v3543
    %v3545 = vand.u32 %v3544, 4294901760
    %3546 = vmatpush.msra.mxu0 %v3545
    %v3547 = vand.u32 %v2915, 4294901760
    %v3548 = vsub.f32 %v2915, %v3547
    %v3549 = vand.u32 %v3548, 4294901760
    %3550 = vmatpush.msra.mxu0 %v3549
    %v3551 = vand.u32 %v2914, 4294901760
    %v3552 = vsub.f32 %v2914, %v3551
    %v3553 = vand.u32 %v3552, 4294901760
    %3554 = vmatpush.msra.mxu0 %v3553
    %v3555 = vand.u32 %v2913, 4294901760
    %v3556 = vsub.f32 %v2913, %v3555
    %v3557 = vand.u32 %v3556, 4294901760
    %3558 = vmatpush.msra.mxu0 %v3557
    %v3559 = vand.u32 %v2912, 4294901760
    %v3560 = vsub.f32 %v2912, %v3559
    %v3561 = vand.u32 %v3560, 4294901760
    %3562 = vmatpush.msra.mxu0 %v3561
    %v3563 = vand.u32 %v2911, 4294901760
    %v3564 = vsub.f32 %v2911, %v3563
    %v3565 = vand.u32 %v3564, 4294901760
    %3566 = vmatpush.msra.mxu0 %v3565
    %v3567 = vand.u32 %v2894, 4294901760
    %3568 = vmatmul.f32.gmra.mxu0 %v3567
    %v3569 = vpop.f32.mrf.mxu0
    %v3570 = vadd.f32 %v3501, %v3569
    %3571 = vdwg.mxu0
    %v3572 = vand.u32 %v2926, 4294901760
    %3573 = vmatpush.msra.mxu0 %v3572
    %v3574 = vand.u32 %v2925, 4294901760
    %3575 = vmatpush.msra.mxu0 %v3574
    %v3576 = vand.u32 %v2924, 4294901760
    %3577 = vmatpush.msra.mxu0 %v3576
    %v3578 = vand.u32 %v2923, 4294901760
    %3579 = vmatpush.msra.mxu0 %v3578
    %v3580 = vand.u32 %v2922, 4294901760
    %3581 = vmatpush.msra.mxu0 %v3580
    %v3582 = vand.u32 %v2921, 4294901760
    %3583 = vmatpush.msra.mxu0 %v3582
    %v3584 = vand.u32 %v2920, 4294901760
    %3585 = vmatpush.msra.mxu0 %v3584
    %v3586 = vand.u32 %v2919, 4294901760
    %3587 = vmatpush.msra.mxu0 %v3586
    %v3588 = vand.u32 %v2918, 4294901760
    %3589 = vmatpush.msra.mxu0 %v3588
    %v3590 = vand.u32 %v2917, 4294901760
    %3591 = vmatpush.msra.mxu0 %v3590
    %v3592 = vand.u32 %v2916, 4294901760
    %3593 = vmatpush.msra.mxu0 %v3592
    %v3594 = vand.u32 %v2915, 4294901760
    %3595 = vmatpush.msra.mxu0 %v3594
    %v3596 = vand.u32 %v2914, 4294901760
    %3597 = vmatpush.msra.mxu0 %v3596
    %v3598 = vand.u32 %v2913, 4294901760
    %3599 = vmatpush.msra.mxu0 %v3598
    %v3600 = vand.u32 %v2912, 4294901760
    %3601 = vmatpush.msra.mxu0 %v3600
    %v3602 = vand.u32 %v2911, 4294901760
    %3603 = vmatpush.msra.mxu0 %v3602
    %v3604 = vand.u32 %v2894, 4294901760
    %3605 = vmatmul.f32.gmra.mxu0 %v3604
    %v3606 = vpop.f32.mrf.mxu0
    %v3607 = vadd.f32 %v3570, %v3606
    %3608 = vdwg.mxu0
    %vm3609 = vcmask 261120
    %3610 = vst.msk [vmem:[#allocation5] sm:$0xff] %vm3609, %v3607
    // Predicated region
    $region26: #{tpu_custom_call.1} parent=1 // pred_check
      _
    $region27: #{tpu_custom_call.1} parent=1 // pred_check_branch
      %3612 = sbr.rel (0) target = $region29
    $region28: #{tpu_custom_call.1} parent=1 // pred_region
      %3614 = vsyncadd [#allocation4], 0
      %s3616 = sshll.u32 [#allocation5], 4
      %s3617 = int_to_ptr.vmem [resolvable:$true] %s3616
      %s3618 = sshll.u32 %s5, 4
      %s3619 = int_to_ptr.hbm [resolvable:$true] %s3618
      %3621 = dma.vmem_to_hbm [thread:$0]  %s3617, 128, %s3619, [#allocation4]
    $region29: #{tpu_custom_call.1} parent=1 // pred_fallthru
      _
    // Predicated region
    $region30: #{tpu_custom_call.1} parent=1 // pred_check
      _
    $region31: #{tpu_custom_call.1} parent=1 // pred_check_branch
      %3623 = sbr.rel (0) target = $region33
    $region32: #{tpu_custom_call.1} parent=1 // pred_region
      %3625 = dma.done [#allocation4], 128
    $region33: #{tpu_custom_call.1} parent=1 // pred_fallthru
      _
    %3626 = vsyncpa [#allocation3], 1
    %3627 = vsyncpa [#allocation4], 1

</llo_original>
